<compile_context>
chip_gen: v7x
topology: tpu7x:2x2x1
jax: 0.10.0
libtpu: 0.0.40
codegen_flags: <defaults>
</compile_context>

<pallas_src>
import functools
import math

import jax
import jax.numpy as jnp
from jax.experimental import pallas as pl
from jax.experimental.pallas import tpu as pltpu

_VMEM_LIMIT = 32 * 1024 * 1024  # safe on v5e/v6e (128 MiB) and v7x (64 MiB)


def _pick_tile(dim, candidates):
    """Largest candidate tile that evenly divides `dim`, else the full dim."""
    for c in candidates:
        if dim % c == 0:
            return c
    return dim


# ----------------------------- Pallas kernels ------------------------------

def _layer_norm(y, gamma, beta, eps=1e-12):
    # matches repo LayerNorm: mean/var over last dim, unbiased=False, eps=1e-12
    mean = jnp.mean(y, axis=-1, keepdims=True)
    var = jnp.mean(jnp.square(y - mean), axis=-1, keepdims=True)
    return (y - mean) * jax.lax.rsqrt(var + eps) * gamma + beta


def _mha_kernel(qin_ref, kin_ref, vin_ref, qm_ref, km_ref,
                wq_ref, bq_ref, wk_ref, bk_ref, wv_ref, bv_ref,
                wc_ref, bc_ref, g_ref, beta_ref, o_ref, *, n_head, causal):
    """Fused MHA block for one batch element: QKV proj -> per-head masked
    softmax attention -> concat -> out proj -> residual add -> LayerNorm."""
    x_q = qin_ref[0]                    # (Sq, D)  query input == residual
    x_k = kin_ref[0]                    # (Sk, D)
    x_v = vin_ref[0]                    # (Sk, D)
    q_pad = qm_ref[0]                   # (Sq, 1)  1.0 = keep, 0.0 = pad
    k_pad = km_ref[0]                   # (1, Sk)
    Sq, D = x_q.shape
    Sk = x_k.shape[0]
    dh = D // n_head

    q = jnp.dot(x_q, wq_ref[...], preferred_element_type=jnp.float32) + bq_ref[...]
    k = jnp.dot(x_k, wk_ref[...], preferred_element_type=jnp.float32) + bk_ref[...]
    v = jnp.dot(x_v, wv_ref[...], preferred_element_type=jnp.float32) + bv_ref[...]

    # Fold 1/sqrt(d_head) into q: one pass over (Sq, D) instead of scaling
    # every (Sq, Sk) score tile per head.
    q = q * (1.0 / math.sqrt(dh))

    # Build the (Sq, Sk) validity mask in-kernel from per-batch pad vectors
    # (no (B*H, Sq, Sk) broadcast mask ever touches HBM).
    valid = (q_pad > 0.5) & (k_pad > 0.5)            # (Sq, Sk)
    if causal:
        row = jax.lax.broadcasted_iota(jnp.int32, (Sq, Sk), 0)
        col = jax.lax.broadcasted_iota(jnp.int32, (Sq, Sk), 1)
        valid = valid & (col <= row)

    heads = []
    for h in range(n_head):                          # static unroll
        qh = q[:, h * dh:(h + 1) * dh]
        kh = k[:, h * dh:(h + 1) * dh]
        vh = v[:, h * dh:(h + 1) * dh]
        s = jnp.dot(qh, kh.T, preferred_element_type=jnp.float32)
        s = jnp.where(valid, s, -10000.0)            # masked_fill(mask==0, -1e4)
        s = s - jnp.max(s, axis=-1, keepdims=True)   # safe softmax
        e = jnp.exp(s)
        p = e * pl.reciprocal(jnp.sum(e, axis=-1, keepdims=True), approx=True)
        heads.append(jnp.dot(p, vh, preferred_element_type=jnp.float32))
    ctx = jnp.concatenate(heads, axis=-1)            # (Sq, D)

    out = jnp.dot(ctx, wc_ref[...], preferred_element_type=jnp.float32) + bc_ref[...]
    o_ref[0] = _layer_norm(out + x_q, g_ref[...], beta_ref[...])


def _ffn_kernel(x_ref, w1_ref, b1_ref, w2_ref, b2_ref, g_ref, beta_ref, o_ref):
    """Fused position-wise FFN: x@W1+b1 -> ReLU -> @W2+b2 -> +x -> LayerNorm.
    The (tm, ffn_hidden) intermediate stays in VMEM."""
    x = x_ref[...]
    h = jnp.dot(x, w1_ref[...], preferred_element_type=jnp.float32) + b1_ref[...]
    h = jnp.maximum(h, 0.0)
    y = jnp.dot(h, w2_ref[...], preferred_element_type=jnp.float32) + b2_ref[...]
    o_ref[...] = _layer_norm(y + x, g_ref[...], beta_ref[...])


def _matmul_bias_kernel(x_ref, w_ref, b_ref, o_ref, acc_ref):
    """Tiled matmul with K-reduction accumulator and bias-add epilogue."""
    @pl.when(pl.program_id(2) == 0)
    def _():
        acc_ref[...] = jnp.zeros_like(acc_ref)

    acc_ref[...] += jnp.dot(x_ref[...], w_ref[...],
                            preferred_element_type=jnp.float32)

    @pl.when(pl.program_id(2) == pl.num_programs(2) - 1)
    def _():
        o_ref[...] = acc_ref[...] + b_ref[...]


# ----------------------------- Pallas wrappers ------------------------------

def mha_block(attn_p, norm_p, q_in, k_in, v_in, q_mask, k_mask, causal, n_head):
    B, Sq, D = q_in.shape
    Sk = k_in.shape[1]
    kern = functools.partial(_mha_kernel, n_head=n_head, causal=causal)
    wspec = pl.BlockSpec((D, D), lambda b: (0, 0))
    bspec = pl.BlockSpec((1, D), lambda b: (0, 0))
    return pl.pallas_call(
        kern,
        out_shape=jax.ShapeDtypeStruct((B, Sq, D), jnp.float32),
        grid=(B,),
        in_specs=[
            pl.BlockSpec((1, Sq, D), lambda b: (b, 0, 0)),   # q input / residual
            pl.BlockSpec((1, Sk, D), lambda b: (b, 0, 0)),   # k input
            pl.BlockSpec((1, Sk, D), lambda b: (b, 0, 0)),   # v input
            pl.BlockSpec((1, Sq, 1), lambda b: (b, 0, 0)),   # query pad mask
            pl.BlockSpec((1, 1, Sk), lambda b: (b, 0, 0)),   # key pad mask
            wspec, bspec,                                    # W_q, b_q
            wspec, bspec,                                    # W_k, b_k
            wspec, bspec,                                    # W_v, b_v
            wspec, bspec,                                    # W_concat, b_concat
            bspec, bspec,                                    # gamma, beta
        ],
        out_specs=pl.BlockSpec((1, Sq, D), lambda b: (b, 0, 0)),
        compiler_params=pltpu.CompilerParams(
            dimension_semantics=("parallel",),
            vmem_limit_bytes=_VMEM_LIMIT),
    )(q_in, k_in, v_in, q_mask, k_mask,
      attn_p["w_q"], attn_p["b_q"].reshape(1, D),
      attn_p["w_k"], attn_p["b_k"].reshape(1, D),
      attn_p["w_v"], attn_p["b_v"].reshape(1, D),
      attn_p["w_concat"], attn_p["b_concat"].reshape(1, D),
      norm_p["gamma"].reshape(1, D), norm_p["beta"].reshape(1, D))


def ffn_block(ffn_p, norm_p, x):
    B, S, D = x.shape
    F = ffn_p["w1"].shape[1]
    M = B * S
    x2 = x.reshape(M, D)
    tm = _pick_tile(M, (256, 128))
    out = pl.pallas_call(
        _ffn_kernel,
        out_shape=jax.ShapeDtypeStruct((M, D), jnp.float32),
        grid=(M // tm,),
        in_specs=[pl.BlockSpec((tm, D), lambda i: (i, 0)),
                  pl.BlockSpec((D, F), lambda i: (0, 0)),
                  pl.BlockSpec((1, F), lambda i: (0, 0)),
                  pl.BlockSpec((F, D), lambda i: (0, 0)),
                  pl.BlockSpec((1, D), lambda i: (0, 0)),
                  pl.BlockSpec((1, D), lambda i: (0, 0)),
                  pl.BlockSpec((1, D), lambda i: (0, 0))],
        out_specs=pl.BlockSpec((tm, D), lambda i: (i, 0)),
        compiler_params=pltpu.CompilerParams(
            dimension_semantics=("parallel",),
            vmem_limit_bytes=_VMEM_LIMIT),
    )(x2, ffn_p["w1"], ffn_p["b1"].reshape(1, F),
      ffn_p["w2"], ffn_p["b2"].reshape(1, D),
      norm_p["gamma"].reshape(1, D), norm_p["beta"].reshape(1, D))
    return out.reshape(B, S, D)


def matmul_bias(x2d, w, b):
    M, K = x2d.shape
    N = w.shape[1]
    tm = _pick_tile(M, (256, 128))
    tn = _pick_tile(N, (256, 128))
    tk = _pick_tile(K, (512, 256, 128))
    cost = pl.CostEstimate(flops=2 * M * N * K, transcendentals=0,
                           bytes_accessed=4 * (M * K + K * N + M * N + N))
    return pl.pallas_call(
        _matmul_bias_kernel,
        out_shape=jax.ShapeDtypeStruct((M, N), jnp.float32),
        grid=(M // tm, N // tn, K // tk),
        in_specs=[pl.BlockSpec((tm, tk), lambda i, j, k: (i, k)),
                  pl.BlockSpec((tk, tn), lambda i, j, k: (k, j)),
                  pl.BlockSpec((1, tn), lambda i, j, k: (0, j))],
        out_specs=pl.BlockSpec((tm, tn), lambda i, j, k: (i, j)),
        scratch_shapes=[pltpu.VMEM((tm, tn), jnp.float32)],
        compiler_params=pltpu.CompilerParams(
            dimension_semantics=("parallel", "parallel", "arbitrary"),
            vmem_limit_bytes=_VMEM_LIMIT),
        cost_estimate=cost,
    )(x2d, w, b.reshape(1, N))


# ------------------------------ Model (glue) --------------------------------

def sinusoid_encoding(max_len, d_model):
    pos = jnp.arange(max_len, dtype=jnp.float32)[:, None]
    _2i = jnp.arange(0, d_model, 2, dtype=jnp.float32)
    angle = pos / jnp.power(10000.0, _2i / d_model)
    enc = jnp.zeros((max_len, d_model), dtype=jnp.float32)
    enc = enc.at[:, 0::2].set(jnp.sin(angle))
    enc = enc.at[:, 1::2].set(jnp.cos(angle))
    return enc


def transformer_embedding(ids, emb_table, pos_enc):
    # TODO(synk): token gather stays in plain JAX (jnp.take); a Pallas gather
    # buys nothing at these sizes.
    B, S = ids.shape
    tok = jnp.take(emb_table, ids, axis=0)      # (B, S, D)
    pos = pos_enc[:S, :][None, :, :]            # (1, S, D)
    return tok + pos                            # dropout = identity (eval)


def encoder_layer(p, x, ones_q, src_kmask, n_head):
    # fused: self-attn + out-proj + residual + norm1, then FFN + residual + norm2
    x = mha_block(p["attn"], p["norm1"], x, x, x, ones_q, src_kmask, False, n_head)
    x = ffn_block(p["ffn"], p["norm2"], x)
    return x


def decoder_layer(p, dec, enc, ones_q, ones_k, trg_qmask, src_kmask, n_head):
    x = mha_block(p["self_attn"], p["norm1"], dec, dec, dec,
                  trg_qmask, ones_k, True, n_head)
    x = mha_block(p["cross_attn"], p["norm2"], x, enc, enc,
                  ones_q, src_kmask, False, n_head)
    x = ffn_block(p["ffn"], p["norm3"], x)
    return x


def transformer_forward(params, src, trg, cfg):
    n_head = cfg["n_head"]
    B, Ss = src.shape
    _, St = trg.shape

    # make_src_mask: key-pad mask (B,1,1,Ss) -> per-batch key vector (B,1,Ss)
    src_kmask = (src != cfg["src_pad_idx"]).astype(jnp.float32)[:, None, :]
    # make_trg_mask: query-pad (B,1,St,1) & causal(tril) -> query vector (B,St,1),
    # the causal part is built inside the kernel with iota.
    trg_qmask = (trg != cfg["trg_pad_idx"]).astype(jnp.float32)[:, :, None]

    ones_q_src = jnp.ones((B, Ss, 1), jnp.float32)
    ones_q_trg = jnp.ones((B, St, 1), jnp.float32)
    ones_k_trg = jnp.ones((B, 1, St), jnp.float32)

    pos_enc = params["pos_enc"]

    # Encoder
    x = transformer_embedding(src, params["enc_emb"], pos_enc)
    for lp in params["enc_layers"]:
        x = encoder_layer(lp, x, ones_q_src, src_kmask, n_head)
    enc_src = x

    # Decoder
    y = transformer_embedding(trg, params["dec_emb"], pos_enc)
    for lp in params["dec_layers"]:
        y = decoder_layer(lp, y, enc_src, ones_q_trg, ones_k_trg,
                          trg_qmask, src_kmask, n_head)

    B_, S_, D_ = y.shape
    logits = matmul_bias(y.reshape(B_ * S_, D_), params["out_w"], params["out_b"])
    return logits.reshape(B_, S_, params["out_w"].shape[1])


# ------------------------------ Init ----------------------------------------

def init_params(key, cfg):
    d = cfg["d_model"]
    ffn = cfg["ffn_hidden"]
    keys = iter(jax.random.split(key, 1024))

    def nrm(shape, scale=0.02):
        return scale * jax.random.normal(next(keys), shape, dtype=jnp.float32)

    def linear_params(n_in, n_out):
        return nrm((n_in, n_out)), jnp.zeros((n_out,), jnp.float32)

    def attn_params():
        p = {}
        for name in ("q", "k", "v", "concat"):
            w, b = linear_params(d, d)
            p[f"w_{name}"] = w
            p[f"b_{name}"] = b
        return p

    def norm_params():
        return {"gamma": jnp.ones((d,), jnp.float32),
                "beta": jnp.zeros((d,), jnp.float32)}

    def ffn_params():
        w1, b1 = linear_params(d, ffn)
        w2, b2 = linear_params(ffn, d)
        return {"w1": w1, "b1": b1, "w2": w2, "b2": b2}

    def emb(voc):
        e = nrm((voc, d), scale=1.0)
        return e.at[1].set(0.0)   # nn.Embedding(..., padding_idx=1)

    params = {
        "pos_enc": sinusoid_encoding(cfg["max_len"], d),
        "enc_emb": emb(cfg["enc_voc_size"]),
        "dec_emb": emb(cfg["dec_voc_size"]),
        "enc_layers": [
            {"attn": attn_params(), "norm1": norm_params(),
             "ffn": ffn_params(), "norm2": norm_params()}
            for _ in range(cfg["n_layers"])],
        "dec_layers": [
            {"self_attn": attn_params(), "norm1": norm_params(),
             "cross_attn": attn_params(), "norm2": norm_params(),
             "ffn": ffn_params(), "norm3": norm_params()}
            for _ in range(cfg["n_layers"])],
    }
    out_w, out_b = linear_params(d, cfg["dec_voc_size"])
    params["out_w"] = out_w
    params["out_b"] = out_b
    return params


# ------------------------------ Main -----------------------------------------

if __name__ == "__main__":
    cfg = dict(src_pad_idx=1, trg_pad_idx=1, trg_sos_idx=2,
               enc_voc_size=32, dec_voc_size=32, d_model=32, n_head=4,
               max_len=16, ffn_hidden=64, n_layers=2,
               drop_prob=0.1)  # drop_prob unused: inference (dropout = identity)

    key = jax.random.PRNGKey(0)
    pkey, skey, tkey = jax.random.split(key, 3)
    params = init_params(pkey, cfg)

    B, S_src, S_trg = 2, 8, 8
    src = jax.random.randint(skey, (B, S_src), 0, cfg["enc_voc_size"], dtype=jnp.int32)
    trg = jax.random.randint(tkey, (B, S_trg), 0, cfg["dec_voc_size"], dtype=jnp.int32)

    fwd = jax.jit(functools.partial(transformer_forward, cfg=cfg))
    out = fwd(params, src, trg)
    out = jax.block_until_ready(out)
    assert out.shape == (B, S_trg, cfg["dec_voc_size"]), out.shape
    assert bool(jnp.all(jnp.isfinite(out)))
    print("KERNEL_OK")
</pallas_src>

<mosaic_0001>
module attributes {stable_mosaic.version = 11 : i64} {
  func.func @_mha_kernel(%arg0: i32, %arg1: memref<1x8x32xf32, #tpu.memory_space<vmem>>, %arg2: memref<1x8x32xf32, #tpu.memory_space<vmem>>, %arg3: memref<1x8x32xf32, #tpu.memory_space<vmem>>, %arg4: memref<1x8x1xf32, #tpu.memory_space<vmem>>, %arg5: memref<1x1x8xf32, #tpu.memory_space<vmem>>, %arg6: memref<32x32xf32, #tpu.memory_space<vmem>>, %arg7: memref<1x32xf32, #tpu.memory_space<vmem>>, %arg8: memref<32x32xf32, #tpu.memory_space<vmem>>, %arg9: memref<1x32xf32, #tpu.memory_space<vmem>>, %arg10: memref<32x32xf32, #tpu.memory_space<vmem>>, %arg11: memref<1x32xf32, #tpu.memory_space<vmem>>, %arg12: memref<32x32xf32, #tpu.memory_space<vmem>>, %arg13: memref<1x32xf32, #tpu.memory_space<vmem>>, %arg14: memref<1x32xf32, #tpu.memory_space<vmem>>, %arg15: memref<1x32xf32, #tpu.memory_space<vmem>>, %arg16: memref<1x8x32xf32, #tpu.memory_space<vmem>>) attributes {dimension_semantics = [#tpu.dimension_semantics<parallel>], iteration_bounds = array<i64: 2>, scalar_prefetch = 0 : i64, scratch_operands = 0 : i64, tpu.core_type = #tpu.core_type<tc>, window_params = [{transform_indices = @transform_0, window_bounds = array<i64: 1, 8, 32>}, {transform_indices = @transform_1, window_bounds = array<i64: 1, 8, 32>}, {transform_indices = @transform_2, window_bounds = array<i64: 1, 8, 32>}, {transform_indices = @transform_3, window_bounds = array<i64: 1, 8, 1>}, {transform_indices = @transform_4, window_bounds = array<i64: 1, 1, 8>}, {pipeline_mode = #tpu.pipeline_mode<synchronous>, transform_indices = @transform_5, window_bounds = array<i64: 32, 32>}, {pipeline_mode = #tpu.pipeline_mode<synchronous>, transform_indices = @transform_6, window_bounds = array<i64: 1, 32>}, {pipeline_mode = #tpu.pipeline_mode<synchronous>, transform_indices = @transform_7, window_bounds = array<i64: 32, 32>}, {pipeline_mode = #tpu.pipeline_mode<synchronous>, transform_indices = @transform_8, window_bounds = array<i64: 1, 32>}, {pipeline_mode = #tpu.pipeline_mode<synchronous>, transform_indices = @transform_9, window_bounds = array<i64: 32, 32>}, {pipeline_mode = #tpu.pipeline_mode<synchronous>, transform_indices = @transform_10, window_bounds = array<i64: 1, 32>}, {pipeline_mode = #tpu.pipeline_mode<synchronous>, transform_indices = @transform_11, window_bounds = array<i64: 32, 32>}, {pipeline_mode = #tpu.pipeline_mode<synchronous>, transform_indices = @transform_12, window_bounds = array<i64: 1, 32>}, {pipeline_mode = #tpu.pipeline_mode<synchronous>, transform_indices = @transform_13, window_bounds = array<i64: 1, 32>}, {pipeline_mode = #tpu.pipeline_mode<synchronous>, transform_indices = @transform_14, window_bounds = array<i64: 1, 32>}, {transform_indices = @transform_15, window_bounds = array<i64: 1, 8, 32>}]} {
    %c0 = arith.constant 0 : index
    %c0_0 = arith.constant 0 : index
    %c0_1 = arith.constant 0 : index
    %0 = vector.load %arg1[%c0, %c0_0, %c0_1] : memref<1x8x32xf32, #tpu.memory_space<vmem>>, vector<1x8x32xf32>
    %1 = vector.shape_cast %0 : vector<1x8x32xf32> to vector<8x32xf32>
    %c0_2 = arith.constant 0 : index
    %c0_3 = arith.constant 0 : index
    %c0_4 = arith.constant 0 : index
    %2 = vector.load %arg2[%c0_2, %c0_3, %c0_4] : memref<1x8x32xf32, #tpu.memory_space<vmem>>, vector<1x8x32xf32>
    %3 = vector.shape_cast %2 : vector<1x8x32xf32> to vector<8x32xf32>
    %c0_5 = arith.constant 0 : index
    %c0_6 = arith.constant 0 : index
    %c0_7 = arith.constant 0 : index
    %4 = vector.load %arg3[%c0_5, %c0_6, %c0_7] : memref<1x8x32xf32, #tpu.memory_space<vmem>>, vector<1x8x32xf32>
    %5 = vector.shape_cast %4 : vector<1x8x32xf32> to vector<8x32xf32>
    %c0_8 = arith.constant 0 : index
    %c0_9 = arith.constant 0 : index
    %c0_10 = arith.constant 0 : index
    %6 = vector.load %arg4[%c0_8, %c0_9, %c0_10] : memref<1x8x1xf32, #tpu.memory_space<vmem>>, vector<1x8x1xf32>
    %7 = vector.shape_cast %6 : vector<1x8x1xf32> to vector<8x1xf32>
    %c0_11 = arith.constant 0 : index
    %c0_12 = arith.constant 0 : index
    %c0_13 = arith.constant 0 : index
    %8 = vector.load %arg5[%c0_11, %c0_12, %c0_13] : memref<1x1x8xf32, #tpu.memory_space<vmem>>, vector<1x1x8xf32>
    %9 = vector.shape_cast %8 : vector<1x1x8xf32> to vector<1x8xf32>
    %c0_14 = arith.constant 0 : index
    %c0_15 = arith.constant 0 : index
    %10 = vector.load %arg6[%c0_14, %c0_15] : memref<32x32xf32, #tpu.memory_space<vmem>>, vector<32x32xf32>
    %cst = arith.constant dense<0.000000e+00> : vector<8x32xf32>
    %11 = tpu.matmul %1, %10, %cst {dimension_numbers = #tpu.dot_dimension_numbers<[1], [0], [0], [1], [0, 0, 1, 1], [], []>} : vector<8x32xf32>, vector<32x32xf32>, vector<8x32xf32> -> vector<8x32xf32>
    %c0_16 = arith.constant 0 : index
    %c0_17 = arith.constant 0 : index
    %12 = vector.load %arg7[%c0_16, %c0_17] : memref<1x32xf32, #tpu.memory_space<vmem>>, vector<1x32xf32>
    %13 = vector.broadcast %12 : vector<1x32xf32> to vector<8x32xf32>
    %14 = arith.addf %11, %13 : vector<8x32xf32>
    %c0_18 = arith.constant 0 : index
    %c0_19 = arith.constant 0 : index
    %15 = vector.load %arg8[%c0_18, %c0_19] : memref<32x32xf32, #tpu.memory_space<vmem>>, vector<32x32xf32>
    %cst_20 = arith.constant dense<0.000000e+00> : vector<8x32xf32>
    %16 = tpu.matmul %3, %15, %cst_20 {dimension_numbers = #tpu.dot_dimension_numbers<[1], [0], [0], [1], [0, 0, 1, 1], [], []>} : vector<8x32xf32>, vector<32x32xf32>, vector<8x32xf32> -> vector<8x32xf32>
    %c0_21 = arith.constant 0 : index
    %c0_22 = arith.constant 0 : index
    %17 = vector.load %arg9[%c0_21, %c0_22] : memref<1x32xf32, #tpu.memory_space<vmem>>, vector<1x32xf32>
    %18 = vector.broadcast %17 : vector<1x32xf32> to vector<8x32xf32>
    %19 = arith.addf %16, %18 : vector<8x32xf32>
    %c0_23 = arith.constant 0 : index
    %c0_24 = arith.constant 0 : index
    %20 = vector.load %arg10[%c0_23, %c0_24] : memref<32x32xf32, #tpu.memory_space<vmem>>, vector<32x32xf32>
    %cst_25 = arith.constant dense<0.000000e+00> : vector<8x32xf32>
    %21 = tpu.matmul %5, %20, %cst_25 {dimension_numbers = #tpu.dot_dimension_numbers<[1], [0], [0], [1], [0, 0, 1, 1], [], []>} : vector<8x32xf32>, vector<32x32xf32>, vector<8x32xf32> -> vector<8x32xf32>
    %c0_26 = arith.constant 0 : index
    %c0_27 = arith.constant 0 : index
    %22 = vector.load %arg11[%c0_26, %c0_27] : memref<1x32xf32, #tpu.memory_space<vmem>>, vector<1x32xf32>
    %23 = vector.broadcast %22 : vector<1x32xf32> to vector<8x32xf32>
    %24 = arith.addf %21, %23 : vector<8x32xf32>
    %cst_28 = arith.constant 0.353553385 : f32
    %25 = vector.broadcast %cst_28 : f32 to vector<8x32xf32>
    %26 = arith.mulf %14, %25 : vector<8x32xf32>
    %cst_29 = arith.constant 5.000000e-01 : f32
    %27 = vector.broadcast %cst_29 : f32 to vector<8x1xf32>
    %28 = arith.cmpf ogt, %7, %27 : vector<8x1xf32>
    %cst_30 = arith.constant 5.000000e-01 : f32
    %29 = vector.broadcast %cst_30 : f32 to vector<1x8xf32>
    %30 = arith.cmpf ogt, %9, %29 : vector<1x8xf32>
    %31 = vector.broadcast %28 : vector<8x1xi1> to vector<8x8xi1>
    %32 = vector.broadcast %30 : vector<1x8xi1> to vector<8x8xi1>
    %33 = arith.andi %31, %32 : vector<8x8xi1>
    %34 = vector.extract_strided_slice %26 {offsets = [0, 0], sizes = [8, 8], strides = [1, 1]} : vector<8x32xf32> to vector<8x8xf32>
    %35 = vector.extract_strided_slice %19 {offsets = [0, 0], sizes = [8, 8], strides = [1, 1]} : vector<8x32xf32> to vector<8x8xf32>
    %36 = vector.extract_strided_slice %24 {offsets = [0, 0], sizes = [8, 8], strides = [1, 1]} : vector<8x32xf32> to vector<8x8xf32>
    %37 = tpu.transpose %35, [1, 0] : vector<8x8xf32> -> vector<8x8xf32>
    %cst_31 = arith.constant dense<0.000000e+00> : vector<8x8xf32>
    %38 = tpu.matmul %34, %37, %cst_31 {dimension_numbers = #tpu.dot_dimension_numbers<[1], [0], [0], [1], [0, 0, 1, 1], [], []>} : vector<8x8xf32>, vector<8x8xf32>, vector<8x8xf32> -> vector<8x8xf32>
    %cst_32 = arith.constant -1.000000e+04 : f32
    %39 = vector.broadcast %cst_32 : f32 to vector<8x8xf32>
    %40 = arith.select %33, %38, %39 : vector<8x8xi1>, vector<8x8xf32>
    %cst_33 = arith.constant dense<0xFF800000> : vector<8xf32>
    %41 = vector.multi_reduction <maximumf>, %40, %cst_33 [1] : vector<8x8xf32> to vector<8xf32>
    %42 = vector.shape_cast %41 : vector<8xf32> to vector<8x1xf32>
    %43 = vector.broadcast %42 : vector<8x1xf32> to vector<8x8xf32>
    %44 = arith.subf %40, %43 : vector<8x8xf32>
    %45 = math.exp %44 : vector<8x8xf32>
    %cst_34 = arith.constant dense<0.000000e+00> : vector<8xf32>
    %46 = vector.multi_reduction <add>, %45, %cst_34 [1] : vector<8x8xf32> to vector<8xf32>
    %47 = vector.shape_cast %46 : vector<8xf32> to vector<8x1xf32>
    %48 = tpu.reciprocal %47 {approx = true} : vector<8x1xf32> -> vector<8x1xf32>
    %49 = vector.broadcast %48 : vector<8x1xf32> to vector<8x8xf32>
    %50 = arith.mulf %45, %49 : vector<8x8xf32>
    %cst_35 = arith.constant dense<0.000000e+00> : vector<8x8xf32>
    %51 = tpu.matmul %50, %36, %cst_35 {dimension_numbers = #tpu.dot_dimension_numbers<[1], [0], [0], [1], [0, 0, 1, 1], [], []>} : vector<8x8xf32>, vector<8x8xf32>, vector<8x8xf32> -> vector<8x8xf32>
    %52 = vector.extract_strided_slice %26 {offsets = [0, 8], sizes = [8, 8], strides = [1, 1]} : vector<8x32xf32> to vector<8x8xf32>
    %53 = vector.extract_strided_slice %19 {offsets = [0, 8], sizes = [8, 8], strides = [1, 1]} : vector<8x32xf32> to vector<8x8xf32>
    %54 = vector.extract_strided_slice %24 {offsets = [0, 8], sizes = [8, 8], strides = [1, 1]} : vector<8x32xf32> to vector<8x8xf32>
    %55 = tpu.transpose %53, [1, 0] : vector<8x8xf32> -> vector<8x8xf32>
    %cst_36 = arith.constant dense<0.000000e+00> : vector<8x8xf32>
    %56 = tpu.matmul %52, %55, %cst_36 {dimension_numbers = #tpu.dot_dimension_numbers<[1], [0], [0], [1], [0, 0, 1, 1], [], []>} : vector<8x8xf32>, vector<8x8xf32>, vector<8x8xf32> -> vector<8x8xf32>
    %cst_37 = arith.constant -1.000000e+04 : f32
    %57 = vector.broadcast %cst_37 : f32 to vector<8x8xf32>
    %58 = arith.select %33, %56, %57 : vector<8x8xi1>, vector<8x8xf32>
    %cst_38 = arith.constant dense<0xFF800000> : vector<8xf32>
    %59 = vector.multi_reduction <maximumf>, %58, %cst_38 [1] : vector<8x8xf32> to vector<8xf32>
    %60 = vector.shape_cast %59 : vector<8xf32> to vector<8x1xf32>
    %61 = vector.broadcast %60 : vector<8x1xf32> to vector<8x8xf32>
    %62 = arith.subf %58, %61 : vector<8x8xf32>
    %63 = math.exp %62 : vector<8x8xf32>
    %cst_39 = arith.constant dense<0.000000e+00> : vector<8xf32>
    %64 = vector.multi_reduction <add>, %63, %cst_39 [1] : vector<8x8xf32> to vector<8xf32>
    %65 = vector.shape_cast %64 : vector<8xf32> to vector<8x1xf32>
    %66 = tpu.reciprocal %65 {approx = true} : vector<8x1xf32> -> vector<8x1xf32>
    %67 = vector.broadcast %66 : vector<8x1xf32> to vector<8x8xf32>
    %68 = arith.mulf %63, %67 : vector<8x8xf32>
    %cst_40 = arith.constant dense<0.000000e+00> : vector<8x8xf32>
    %69 = tpu.matmul %68, %54, %cst_40 {dimension_numbers = #tpu.dot_dimension_numbers<[1], [0], [0], [1], [0, 0, 1, 1], [], []>} : vector<8x8xf32>, vector<8x8xf32>, vector<8x8xf32> -> vector<8x8xf32>
    %70 = vector.extract_strided_slice %26 {offsets = [0, 16], sizes = [8, 8], strides = [1, 1]} : vector<8x32xf32> to vector<8x8xf32>
    %71 = vector.extract_strided_slice %19 {offsets = [0, 16], sizes = [8, 8], strides = [1, 1]} : vector<8x32xf32> to vector<8x8xf32>
    %72 = vector.extract_strided_slice %24 {offsets = [0, 16], sizes = [8, 8], strides = [1, 1]} : vector<8x32xf32> to vector<8x8xf32>
    %73 = tpu.transpose %71, [1, 0] : vector<8x8xf32> -> vector<8x8xf32>
    %cst_41 = arith.constant dense<0.000000e+00> : vector<8x8xf32>
    %74 = tpu.matmul %70, %73, %cst_41 {dimension_numbers = #tpu.dot_dimension_numbers<[1], [0], [0], [1], [0, 0, 1, 1], [], []>} : vector<8x8xf32>, vector<8x8xf32>, vector<8x8xf32> -> vector<8x8xf32>
    %cst_42 = arith.constant -1.000000e+04 : f32
    %75 = vector.broadcast %cst_42 : f32 to vector<8x8xf32>
    %76 = arith.select %33, %74, %75 : vector<8x8xi1>, vector<8x8xf32>
    %cst_43 = arith.constant dense<0xFF800000> : vector<8xf32>
    %77 = vector.multi_reduction <maximumf>, %76, %cst_43 [1] : vector<8x8xf32> to vector<8xf32>
    %78 = vector.shape_cast %77 : vector<8xf32> to vector<8x1xf32>
    %79 = vector.broadcast %78 : vector<8x1xf32> to vector<8x8xf32>
    %80 = arith.subf %76, %79 : vector<8x8xf32>
    %81 = math.exp %80 : vector<8x8xf32>
    %cst_44 = arith.constant dense<0.000000e+00> : vector<8xf32>
    %82 = vector.multi_reduction <add>, %81, %cst_44 [1] : vector<8x8xf32> to vector<8xf32>
    %83 = vector.shape_cast %82 : vector<8xf32> to vector<8x1xf32>
    %84 = tpu.reciprocal %83 {approx = true} : vector<8x1xf32> -> vector<8x1xf32>
    %85 = vector.broadcast %84 : vector<8x1xf32> to vector<8x8xf32>
    %86 = arith.mulf %81, %85 : vector<8x8xf32>
    %cst_45 = arith.constant dense<0.000000e+00> : vector<8x8xf32>
    %87 = tpu.matmul %86, %72, %cst_45 {dimension_numbers = #tpu.dot_dimension_numbers<[1], [0], [0], [1], [0, 0, 1, 1], [], []>} : vector<8x8xf32>, vector<8x8xf32>, vector<8x8xf32> -> vector<8x8xf32>
    %88 = vector.extract_strided_slice %26 {offsets = [0, 24], sizes = [8, 8], strides = [1, 1]} : vector<8x32xf32> to vector<8x8xf32>
    %89 = vector.extract_strided_slice %19 {offsets = [0, 24], sizes = [8, 8], strides = [1, 1]} : vector<8x32xf32> to vector<8x8xf32>
    %90 = vector.extract_strided_slice %24 {offsets = [0, 24], sizes = [8, 8], strides = [1, 1]} : vector<8x32xf32> to vector<8x8xf32>
    %91 = tpu.transpose %89, [1, 0] : vector<8x8xf32> -> vector<8x8xf32>
    %cst_46 = arith.constant dense<0.000000e+00> : vector<8x8xf32>
    %92 = tpu.matmul %88, %91, %cst_46 {dimension_numbers = #tpu.dot_dimension_numbers<[1], [0], [0], [1], [0, 0, 1, 1], [], []>} : vector<8x8xf32>, vector<8x8xf32>, vector<8x8xf32> -> vector<8x8xf32>
    %cst_47 = arith.constant -1.000000e+04 : f32
    %93 = vector.broadcast %cst_47 : f32 to vector<8x8xf32>
    %94 = arith.select %33, %92, %93 : vector<8x8xi1>, vector<8x8xf32>
    %cst_48 = arith.constant dense<0xFF800000> : vector<8xf32>
    %95 = vector.multi_reduction <maximumf>, %94, %cst_48 [1] : vector<8x8xf32> to vector<8xf32>
    %96 = vector.shape_cast %95 : vector<8xf32> to vector<8x1xf32>
    %97 = vector.broadcast %96 : vector<8x1xf32> to vector<8x8xf32>
    %98 = arith.subf %94, %97 : vector<8x8xf32>
    %99 = math.exp %98 : vector<8x8xf32>
    %cst_49 = arith.constant dense<0.000000e+00> : vector<8xf32>
    %100 = vector.multi_reduction <add>, %99, %cst_49 [1] : vector<8x8xf32> to vector<8xf32>
    %101 = vector.shape_cast %100 : vector<8xf32> to vector<8x1xf32>
    %102 = tpu.reciprocal %101 {approx = true} : vector<8x1xf32> -> vector<8x1xf32>
    %103 = vector.broadcast %102 : vector<8x1xf32> to vector<8x8xf32>
    %104 = arith.mulf %99, %103 : vector<8x8xf32>
    %cst_50 = arith.constant dense<0.000000e+00> : vector<8x8xf32>
    %105 = tpu.matmul %104, %90, %cst_50 {dimension_numbers = #tpu.dot_dimension_numbers<[1], [0], [0], [1], [0, 0, 1, 1], [], []>} : vector<8x8xf32>, vector<8x8xf32>, vector<8x8xf32> -> vector<8x8xf32>
    %106 = tpu.concatenate %51, %69, %87, %105 in 1 : vector<8x8xf32>, vector<8x8xf32>, vector<8x8xf32>, vector<8x8xf32> -> vector<8x32xf32>
    %c0_51 = arith.constant 0 : index
    %c0_52 = arith.constant 0 : index
    %107 = vector.load %arg12[%c0_51, %c0_52] : memref<32x32xf32, #tpu.memory_space<vmem>>, vector<32x32xf32>
    %cst_53 = arith.constant dense<0.000000e+00> : vector<8x32xf32>
    %108 = tpu.matmul %106, %107, %cst_53 {dimension_numbers = #tpu.dot_dimension_numbers<[1], [0], [0], [1], [0, 0, 1, 1], [], []>} : vector<8x32xf32>, vector<32x32xf32>, vector<8x32xf32> -> vector<8x32xf32>
    %c0_54 = arith.constant 0 : index
    %c0_55 = arith.constant 0 : index
    %109 = vector.load %arg13[%c0_54, %c0_55] : memref<1x32xf32, #tpu.memory_space<vmem>>, vector<1x32xf32>
    %110 = vector.broadcast %109 : vector<1x32xf32> to vector<8x32xf32>
    %111 = arith.addf %108, %110 : vector<8x32xf32>
    %112 = arith.addf %111, %1 : vector<8x32xf32>
    %c0_56 = arith.constant 0 : index
    %c0_57 = arith.constant 0 : index
    %113 = vector.load %arg14[%c0_56, %c0_57] : memref<1x32xf32, #tpu.memory_space<vmem>>, vector<1x32xf32>
    %c0_58 = arith.constant 0 : index
    %c0_59 = arith.constant 0 : index
    %114 = vector.load %arg15[%c0_58, %c0_59] : memref<1x32xf32, #tpu.memory_space<vmem>>, vector<1x32xf32>
    %cst_60 = arith.constant dense<0.000000e+00> : vector<8xf32>
    %115 = vector.multi_reduction <add>, %112, %cst_60 [1] : vector<8x32xf32> to vector<8xf32>
    %116 = vector.shape_cast %115 : vector<8xf32> to vector<8x1xf32>
    %cst_61 = arith.constant 3.200000e+01 : f32
    %117 = vector.broadcast %cst_61 : f32 to vector<8x1xf32>
    %118 = arith.divf %116, %117 : vector<8x1xf32>
    %119 = vector.broadcast %118 : vector<8x1xf32> to vector<8x32xf32>
    %120 = arith.subf %112, %119 : vector<8x32xf32>
    %121 = arith.mulf %120, %120 : vector<8x32xf32>
    %cst_62 = arith.constant dense<0.000000e+00> : vector<8xf32>
    %122 = vector.multi_reduction <add>, %121, %cst_62 [1] : vector<8x32xf32> to vector<8xf32>
    %123 = vector.shape_cast %122 : vector<8xf32> to vector<8x1xf32>
    %cst_63 = arith.constant 3.200000e+01 : f32
    %124 = vector.broadcast %cst_63 : f32 to vector<8x1xf32>
    %125 = arith.divf %123, %124 : vector<8x1xf32>
    %126 = vector.broadcast %118 : vector<8x1xf32> to vector<8x32xf32>
    %127 = arith.subf %112, %126 : vector<8x32xf32>
    %cst_64 = arith.constant 9.99999996E-13 : f32
    %128 = vector.broadcast %cst_64 : f32 to vector<8x1xf32>
    %129 = arith.addf %125, %128 : vector<8x1xf32>
    %130 = math.rsqrt %129 : vector<8x1xf32>
    %131 = vector.broadcast %130 : vector<8x1xf32> to vector<8x32xf32>
    %132 = arith.mulf %127, %131 : vector<8x32xf32>
    %133 = vector.broadcast %113 : vector<1x32xf32> to vector<8x32xf32>
    %134 = arith.mulf %132, %133 : vector<8x32xf32>
    %135 = vector.broadcast %114 : vector<1x32xf32> to vector<8x32xf32>
    %136 = arith.addf %134, %135 : vector<8x32xf32>
    %c0_65 = arith.constant 0 : index
    %c0_66 = arith.constant 0 : index
    %c0_67 = arith.constant 0 : index
    %137 = vector.load %arg16[%c0_65, %c0_66, %c0_67] : memref<1x8x32xf32, #tpu.memory_space<vmem>>, vector<1x8x32xf32>
    %138 = vector.shape_cast %137 : vector<1x8x32xf32> to vector<8x32xf32>
    %139 = vector.shape_cast %136 : vector<8x32xf32> to vector<1x8x32xf32>
    tpu.vector_store %arg16[%c0_65, %c0_66, %c0_67], %139 {strides = array<i32>} : memref<1x8x32xf32, #tpu.memory_space<vmem>>, vector<1x8x32xf32>,
    return
  }
  func.func @transform_0(%arg0: i32) -> (i32, i32, i32) {
    %c0_i32 = arith.constant 0 : i32
    %c0_i32_0 = arith.constant 0 : i32
    %c0_i32_1 = arith.constant 0 : i32
    return %arg0, %c0_i32, %c0_i32_0 : i32, i32, i32
  }
  func.func @transform_1(%arg0: i32) -> (i32, i32, i32) {
    %c0_i32 = arith.constant 0 : i32
    %c0_i32_0 = arith.constant 0 : i32
    %c0_i32_1 = arith.constant 0 : i32
    return %arg0, %c0_i32, %c0_i32_0 : i32, i32, i32
  }
  func.func @transform_2(%arg0: i32) -> (i32, i32, i32) {
    %c0_i32 = arith.constant 0 : i32
    %c0_i32_0 = arith.constant 0 : i32
    %c0_i32_1 = arith.constant 0 : i32
    return %arg0, %c0_i32, %c0_i32_0 : i32, i32, i32
  }
  func.func @transform_3(%arg0: i32) -> (i32, i32, i32) {
    %c0_i32 = arith.constant 0 : i32
    %c0_i32_0 = arith.constant 0 : i32
    %c0_i32_1 = arith.constant 0 : i32
    return %arg0, %c0_i32, %c0_i32_0 : i32, i32, i32
  }
  func.func @transform_4(%arg0: i32) -> (i32, i32, i32) {
    %c0_i32 = arith.constant 0 : i32
    %c0_i32_0 = arith.constant 0 : i32
    %c0_i32_1 = arith.constant 0 : i32
    return %arg0, %c0_i32, %c0_i32_0 : i32, i32, i32
  }
  func.func @transform_5(%arg0: i32) -> (i32, i32) {
    %c0_i32 = arith.constant 0 : i32
    %c0_i32_0 = arith.constant 0 : i32
    %c0_i32_1 = arith.constant 0 : i32
    return %c0_i32, %c0_i32_0 : i32, i32
  }
  func.func @transform_6(%arg0: i32) -> (i32, i32) {
    %c0_i32 = arith.constant 0 : i32
    %c0_i32_0 = arith.constant 0 : i32
    %c0_i32_1 = arith.constant 0 : i32
    return %c0_i32, %c0_i32_0 : i32, i32
  }
  func.func @transform_7(%arg0: i32) -> (i32, i32) {
    %c0_i32 = arith.constant 0 : i32
    %c0_i32_0 = arith.constant 0 : i32
    %c0_i32_1 = arith.constant 0 : i32
    return %c0_i32, %c0_i32_0 : i32, i32
  }
  func.func @transform_8(%arg0: i32) -> (i32, i32) {
    %c0_i32 = arith.constant 0 : i32
    %c0_i32_0 = arith.constant 0 : i32
    %c0_i32_1 = arith.constant 0 : i32
    return %c0_i32, %c0_i32_0 : i32, i32
  }
  func.func @transform_9(%arg0: i32) -> (i32, i32) {
    %c0_i32 = arith.constant 0 : i32
    %c0_i32_0 = arith.constant 0 : i32
    %c0_i32_1 = arith.constant 0 : i32
    return %c0_i32, %c0_i32_0 : i32, i32
  }
  func.func @transform_10(%arg0: i32) -> (i32, i32) {
    %c0_i32 = arith.constant 0 : i32
    %c0_i32_0 = arith.constant 0 : i32
    %c0_i32_1 = arith.constant 0 : i32
    return %c0_i32, %c0_i32_0 : i32, i32
  }
  func.func @transform_11(%arg0: i32) -> (i32, i32) {
    %c0_i32 = arith.constant 0 : i32
    %c0_i32_0 = arith.constant 0 : i32
    %c0_i32_1 = arith.constant 0 : i32
    return %c0_i32, %c0_i32_0 : i32, i32
  }
  func.func @transform_12(%arg0: i32) -> (i32, i32) {
    %c0_i32 = arith.constant 0 : i32
    %c0_i32_0 = arith.constant 0 : i32
    %c0_i32_1 = arith.constant 0 : i32
    return %c0_i32, %c0_i32_0 : i32, i32
  }
  func.func @transform_13(%arg0: i32) -> (i32, i32) {
    %c0_i32 = arith.constant 0 : i32
    %c0_i32_0 = arith.constant 0 : i32
    %c0_i32_1 = arith.constant 0 : i32
    return %c0_i32, %c0_i32_0 : i32, i32
  }
  func.func @transform_14(%arg0: i32) -> (i32, i32) {
    %c0_i32 = arith.constant 0 : i32
    %c0_i32_0 = arith.constant 0 : i32
    %c0_i32_1 = arith.constant 0 : i32
    return %c0_i32, %c0_i32_0 : i32, i32
  }
  func.func @transform_15(%arg0: i32) -> (i32, i32, i32) {
    %c0_i32 = arith.constant 0 : i32
    %c0_i32_0 = arith.constant 0 : i32
    %c0_i32_1 = arith.constant 0 : i32
    return %arg0, %c0_i32, %c0_i32_0 : i32, i32, i32
  }
}

module attributes {stable_mosaic.version = 11 : i64} {
  func.func @_ffn_kernel(%arg0: i32, %arg1: memref<16x32xf32, #tpu.memory_space<vmem>>, %arg2: memref<32x64xf32, #tpu.memory_space<vmem>>, %arg3: memref<1x64xf32, #tpu.memory_space<vmem>>, %arg4: memref<64x32xf32, #tpu.memory_space<vmem>>, %arg5: memref<1x32xf32, #tpu.memory_space<vmem>>, %arg6: memref<1x32xf32, #tpu.memory_space<vmem>>, %arg7: memref<1x32xf32, #tpu.memory_space<vmem>>, %arg8: memref<16x32xf32, #tpu.memory_space<vmem>>) attributes {dimension_semantics = [#tpu.dimension_semantics<parallel>], iteration_bounds = array<i64: 1>, scalar_prefetch = 0 : i64, scratch_operands = 0 : i64, tpu.core_type = #tpu.core_type<tc>, window_params = [{transform_indices = @transform_0, window_bounds = array<i64: 16, 32>}, {pipeline_mode = #tpu.pipeline_mode<synchronous>, transform_indices = @transform_1, window_bounds = array<i64: 32, 64>}, {pipeline_mode = #tpu.pipeline_mode<synchronous>, transform_indices = @transform_2, window_bounds = array<i64: 1, 64>}, {pipeline_mode = #tpu.pipeline_mode<synchronous>, transform_indices = @transform_3, window_bounds = array<i64: 64, 32>}, {pipeline_mode = #tpu.pipeline_mode<synchronous>, transform_indices = @transform_4, window_bounds = array<i64: 1, 32>}, {pipeline_mode = #tpu.pipeline_mode<synchronous>, transform_indices = @transform_5, window_bounds = array<i64: 1, 32>}, {pipeline_mode = #tpu.pipeline_mode<synchronous>, transform_indices = @transform_6, window_bounds = array<i64: 1, 32>}, {transform_indices = @transform_7, window_bounds = array<i64: 16, 32>}]} {
    %c0 = arith.constant 0 : index
    %c0_0 = arith.constant 0 : index
    %0 = vector.load %arg1[%c0, %c0_0] : memref<16x32xf32, #tpu.memory_space<vmem>>, vector<16x32xf32>
    %c0_1 = arith.constant 0 : index
    %c0_2 = arith.constant 0 : index
    %1 = vector.load %arg2[%c0_1, %c0_2] : memref<32x64xf32, #tpu.memory_space<vmem>>, vector<32x64xf32>
    %cst = arith.constant dense<0.000000e+00> : vector<16x64xf32>
    %2 = tpu.matmul %0, %1, %cst {dimension_numbers = #tpu.dot_dimension_numbers<[1], [0], [0], [1], [0, 0, 1, 1], [], []>} : vector<16x32xf32>, vector<32x64xf32>, vector<16x64xf32> -> vector<16x64xf32>
    %c0_3 = arith.constant 0 : index
    %c0_4 = arith.constant 0 : index
    %3 = vector.load %arg3[%c0_3, %c0_4] : memref<1x64xf32, #tpu.memory_space<vmem>>, vector<1x64xf32>
    %4 = vector.broadcast %3 : vector<1x64xf32> to vector<16x64xf32>
    %5 = arith.addf %2, %4 : vector<16x64xf32>
    %cst_5 = arith.constant 0.000000e+00 : f32
    %6 = vector.broadcast %cst_5 : f32 to vector<16x64xf32>
    %7 = arith.maximumf %5, %6 : vector<16x64xf32>
    %c0_6 = arith.constant 0 : index
    %c0_7 = arith.constant 0 : index
    %8 = vector.load %arg4[%c0_6, %c0_7] : memref<64x32xf32, #tpu.memory_space<vmem>>, vector<64x32xf32>
    %cst_8 = arith.constant dense<0.000000e+00> : vector<16x32xf32>
    %9 = tpu.matmul %7, %8, %cst_8 {dimension_numbers = #tpu.dot_dimension_numbers<[1], [0], [0], [1], [0, 0, 1, 1], [], []>} : vector<16x64xf32>, vector<64x32xf32>, vector<16x32xf32> -> vector<16x32xf32>
    %c0_9 = arith.constant 0 : index
    %c0_10 = arith.constant 0 : index
    %10 = vector.load %arg5[%c0_9, %c0_10] : memref<1x32xf32, #tpu.memory_space<vmem>>, vector<1x32xf32>
    %11 = vector.broadcast %10 : vector<1x32xf32> to vector<16x32xf32>
    %12 = arith.addf %9, %11 : vector<16x32xf32>
    %13 = arith.addf %12, %0 : vector<16x32xf32>
    %c0_11 = arith.constant 0 : index
    %c0_12 = arith.constant 0 : index
    %14 = vector.load %arg6[%c0_11, %c0_12] : memref<1x32xf32, #tpu.memory_space<vmem>>, vector<1x32xf32>
    %c0_13 = arith.constant 0 : index
    %c0_14 = arith.constant 0 : index
    %15 = vector.load %arg7[%c0_13, %c0_14] : memref<1x32xf32, #tpu.memory_space<vmem>>, vector<1x32xf32>
    %cst_15 = arith.constant dense<0.000000e+00> : vector<16xf32>
    %16 = vector.multi_reduction <add>, %13, %cst_15 [1] : vector<16x32xf32> to vector<16xf32>
    %17 = vector.shape_cast %16 : vector<16xf32> to vector<16x1xf32>
    %cst_16 = arith.constant 3.200000e+01 : f32
    %18 = vector.broadcast %cst_16 : f32 to vector<16x1xf32>
    %19 = arith.divf %17, %18 : vector<16x1xf32>
    %20 = vector.broadcast %19 : vector<16x1xf32> to vector<16x32xf32>
    %21 = arith.subf %13, %20 : vector<16x32xf32>
    %22 = arith.mulf %21, %21 : vector<16x32xf32>
    %cst_17 = arith.constant dense<0.000000e+00> : vector<16xf32>
    %23 = vector.multi_reduction <add>, %22, %cst_17 [1] : vector<16x32xf32> to vector<16xf32>
    %24 = vector.shape_cast %23 : vector<16xf32> to vector<16x1xf32>
    %cst_18 = arith.constant 3.200000e+01 : f32
    %25 = vector.broadcast %cst_18 : f32 to vector<16x1xf32>
    %26 = arith.divf %24, %25 : vector<16x1xf32>
    %27 = vector.broadcast %19 : vector<16x1xf32> to vector<16x32xf32>
    %28 = arith.subf %13, %27 : vector<16x32xf32>
    %cst_19 = arith.constant 9.99999996E-13 : f32
    %29 = vector.broadcast %cst_19 : f32 to vector<16x1xf32>
    %30 = arith.addf %26, %29 : vector<16x1xf32>
    %31 = math.rsqrt %30 : vector<16x1xf32>
    %32 = vector.broadcast %31 : vector<16x1xf32> to vector<16x32xf32>
    %33 = arith.mulf %28, %32 : vector<16x32xf32>
    %34 = vector.broadcast %14 : vector<1x32xf32> to vector<16x32xf32>
    %35 = arith.mulf %33, %34 : vector<16x32xf32>
    %36 = vector.broadcast %15 : vector<1x32xf32> to vector<16x32xf32>
    %37 = arith.addf %35, %36 : vector<16x32xf32>
    %c0_20 = arith.constant 0 : index
    %c0_21 = arith.constant 0 : index
    %38 = vector.load %arg8[%c0_20, %c0_21] : memref<16x32xf32, #tpu.memory_space<vmem>>, vector<16x32xf32>
    tpu.vector_store %arg8[%c0_20, %c0_21], %37 {strides = array<i32>} : memref<16x32xf32, #tpu.memory_space<vmem>>, vector<16x32xf32>,
    return
  }
  func.func @transform_0(%arg0: i32) -> (i32, i32) {
    %c0_i32 = arith.constant 0 : i32
    %c0_i32_0 = arith.constant 0 : i32
    return %arg0, %c0_i32 : i32, i32
  }
  func.func @transform_1(%arg0: i32) -> (i32, i32) {
    %c0_i32 = arith.constant 0 : i32
    %c0_i32_0 = arith.constant 0 : i32
    %c0_i32_1 = arith.constant 0 : i32
    return %c0_i32, %c0_i32_0 : i32, i32
  }
  func.func @transform_2(%arg0: i32) -> (i32, i32) {
    %c0_i32 = arith.constant 0 : i32
    %c0_i32_0 = arith.constant 0 : i32
    %c0_i32_1 = arith.constant 0 : i32
    return %c0_i32, %c0_i32_0 : i32, i32
  }
  func.func @transform_3(%arg0: i32) -> (i32, i32) {
    %c0_i32 = arith.constant 0 : i32
    %c0_i32_0 = arith.constant 0 : i32
    %c0_i32_1 = arith.constant 0 : i32
    return %c0_i32, %c0_i32_0 : i32, i32
  }
  func.func @transform_4(%arg0: i32) -> (i32, i32) {
    %c0_i32 = arith.constant 0 : i32
    %c0_i32_0 = arith.constant 0 : i32
    %c0_i32_1 = arith.constant 0 : i32
    return %c0_i32, %c0_i32_0 : i32, i32
  }
  func.func @transform_5(%arg0: i32) -> (i32, i32) {
    %c0_i32 = arith.constant 0 : i32
    %c0_i32_0 = arith.constant 0 : i32
    %c0_i32_1 = arith.constant 0 : i32
    return %c0_i32, %c0_i32_0 : i32, i32
  }
  func.func @transform_6(%arg0: i32) -> (i32, i32) {
    %c0_i32 = arith.constant 0 : i32
    %c0_i32_0 = arith.constant 0 : i32
    %c0_i32_1 = arith.constant 0 : i32
    return %c0_i32, %c0_i32_0 : i32, i32
  }
  func.func @transform_7(%arg0: i32) -> (i32, i32) {
    %c0_i32 = arith.constant 0 : i32
    %c0_i32_0 = arith.constant 0 : i32
    return %arg0, %c0_i32 : i32, i32
  }
}

module attributes {stable_mosaic.version = 11 : i64} {
  func.func @_matmul_bias_kernel(%arg0: i32, %arg1: i32, %arg2: i32, %arg3: memref<16x32xf32, #tpu.memory_space<vmem>>, %arg4: memref<32x32xf32, #tpu.memory_space<vmem>>, %arg5: memref<1x32xf32, #tpu.memory_space<vmem>>, %arg6: memref<16x32xf32, #tpu.memory_space<vmem>>, %arg7: memref<16x32xf32, #tpu.memory_space<vmem>>) attributes {dimension_semantics = [#tpu.dimension_semantics<parallel>, #tpu.dimension_semantics<parallel>, #tpu.dimension_semantics<arbitrary>], iteration_bounds = array<i64: 1, 1, 1>, scalar_prefetch = 0 : i64, scratch_operands = 1 : i64, tpu.core_type = #tpu.core_type<tc>, window_params = [{transform_indices = @transform_0, window_bounds = array<i64: 16, 32>}, {transform_indices = @transform_1, window_bounds = array<i64: 32, 32>}, {transform_indices = @transform_2, window_bounds = array<i64: 1, 32>}, {transform_indices = @transform_3, window_bounds = array<i64: 16, 32>}]} {
    %c0_i32 = arith.constant 0 : i32
    %0 = arith.cmpi eq, %arg2, %c0_i32 : i32
    %1 = arith.extui %0 : i1 to i32
    %c0_i32_0 = arith.constant 0 : i32
    %2 = arith.cmpi ne, %1, %c0_i32_0 : i32
    scf.if %2 {
      %cst_10 = arith.constant 0.000000e+00 : f32
      %12 = vector.broadcast %cst_10 : f32 to vector<16x32xf32>
      %c0_11 = arith.constant 0 : index
      %c0_12 = arith.constant 0 : index
      %13 = vector.load %arg7[%c0_11, %c0_12] : memref<16x32xf32, #tpu.memory_space<vmem>>, vector<16x32xf32>
      tpu.vector_store %arg7[%c0_11, %c0_12], %12 {strides = array<i32>} : memref<16x32xf32, #tpu.memory_space<vmem>>, vector<16x32xf32>,
    } else {
    }
    %c0 = arith.constant 0 : index
    %c0_1 = arith.constant 0 : index
    %3 = vector.load %arg7[%c0, %c0_1] : memref<16x32xf32, #tpu.memory_space<vmem>>, vector<16x32xf32>
    %c0_2 = arith.constant 0 : index
    %c0_3 = arith.constant 0 : index
    %4 = vector.load %arg3[%c0_2, %c0_3] : memref<16x32xf32, #tpu.memory_space<vmem>>, vector<16x32xf32>
    %c0_4 = arith.constant 0 : index
    %c0_5 = arith.constant 0 : index
    %5 = vector.load %arg4[%c0_4, %c0_5] : memref<32x32xf32, #tpu.memory_space<vmem>>, vector<32x32xf32>
    %cst = arith.constant dense<0.000000e+00> : vector<16x32xf32>
    %6 = tpu.matmul %4, %5, %cst {dimension_numbers = #tpu.dot_dimension_numbers<[1], [0], [0], [1], [0, 0, 1, 1], [], []>} : vector<16x32xf32>, vector<32x32xf32>, vector<16x32xf32> -> vector<16x32xf32>
    %7 = arith.addf %3, %6 : vector<16x32xf32>
    %c0_6 = arith.constant 0 : index
    %c0_7 = arith.constant 0 : index
    %8 = vector.load %arg7[%c0_6, %c0_7] : memref<16x32xf32, #tpu.memory_space<vmem>>, vector<16x32xf32>
    tpu.vector_store %arg7[%c0_6, %c0_7], %7 {strides = array<i32>} : memref<16x32xf32, #tpu.memory_space<vmem>>, vector<16x32xf32>,
    %c0_i32_8 = arith.constant 0 : i32
    %9 = arith.cmpi eq, %arg2, %c0_i32_8 : i32
    %10 = arith.extui %9 : i1 to i32
    %c0_i32_9 = arith.constant 0 : i32
    %11 = arith.cmpi ne, %10, %c0_i32_9 : i32
    scf.if %11 {
      %c0_10 = arith.constant 0 : index
      %c0_11 = arith.constant 0 : index
      %12 = vector.load %arg7[%c0_10, %c0_11] : memref<16x32xf32, #tpu.memory_space<vmem>>, vector<16x32xf32>
      %c0_12 = arith.constant 0 : index
      %c0_13 = arith.constant 0 : index
      %13 = vector.load %arg5[%c0_12, %c0_13] : memref<1x32xf32, #tpu.memory_space<vmem>>, vector<1x32xf32>
      %14 = vector.broadcast %13 : vector<1x32xf32> to vector<16x32xf32>
      %15 = arith.addf %12, %14 : vector<16x32xf32>
      %c0_14 = arith.constant 0 : index
      %c0_15 = arith.constant 0 : index
      %16 = vector.load %arg6[%c0_14, %c0_15] : memref<16x32xf32, #tpu.memory_space<vmem>>, vector<16x32xf32>
      tpu.vector_store %arg6[%c0_14, %c0_15], %15 {strides = array<i32>} : memref<16x32xf32, #tpu.memory_space<vmem>>, vector<16x32xf32>,
    } else {
    }
    return
  }
  func.func @transform_0(%arg0: i32, %arg1: i32, %arg2: i32) -> (i32, i32) {
    %c0_i32 = arith.constant 0 : i32
    return %arg0, %arg2 : i32, i32
  }
  func.func @transform_1(%arg0: i32, %arg1: i32, %arg2: i32) -> (i32, i32) {
    %c0_i32 = arith.constant 0 : i32
    return %arg2, %arg1 : i32, i32
  }
  func.func @transform_2(%arg0: i32, %arg1: i32, %arg2: i32) -> (i32, i32) {
    %c0_i32 = arith.constant 0 : i32
    %c0_i32_0 = arith.constant 0 : i32
    return %c0_i32, %arg1 : i32, i32
  }
  func.func @transform_3(%arg0: i32, %arg1: i32, %arg2: i32) -> (i32, i32) {
    %c0_i32 = arith.constant 0 : i32
    return %arg0, %arg1 : i32, i32
  }
}

module attributes {stable_mosaic.version = 11 : i64} {
  func.func @_mha_kernel(%arg0: i32, %arg1: memref<1x8x32xf32, #tpu.memory_space<vmem>>, %arg2: memref<1x8x32xf32, #tpu.memory_space<vmem>>, %arg3: memref<1x8x32xf32, #tpu.memory_space<vmem>>, %arg4: memref<1x8x1xf32, #tpu.memory_space<vmem>>, %arg5: memref<1x1x8xf32, #tpu.memory_space<vmem>>, %arg6: memref<32x32xf32, #tpu.memory_space<vmem>>, %arg7: memref<1x32xf32, #tpu.memory_space<vmem>>, %arg8: memref<32x32xf32, #tpu.memory_space<vmem>>, %arg9: memref<1x32xf32, #tpu.memory_space<vmem>>, %arg10: memref<32x32xf32, #tpu.memory_space<vmem>>, %arg11: memref<1x32xf32, #tpu.memory_space<vmem>>, %arg12: memref<32x32xf32, #tpu.memory_space<vmem>>, %arg13: memref<1x32xf32, #tpu.memory_space<vmem>>, %arg14: memref<1x32xf32, #tpu.memory_space<vmem>>, %arg15: memref<1x32xf32, #tpu.memory_space<vmem>>, %arg16: memref<1x8x32xf32, #tpu.memory_space<vmem>>) attributes {dimension_semantics = [#tpu.dimension_semantics<parallel>], iteration_bounds = array<i64: 2>, scalar_prefetch = 0 : i64, scratch_operands = 0 : i64, tpu.core_type = #tpu.core_type<tc>, window_params = [{transform_indices = @transform_0, window_bounds = array<i64: 1, 8, 32>}, {transform_indices = @transform_1, window_bounds = array<i64: 1, 8, 32>}, {transform_indices = @transform_2, window_bounds = array<i64: 1, 8, 32>}, {transform_indices = @transform_3, window_bounds = array<i64: 1, 8, 1>}, {transform_indices = @transform_4, window_bounds = array<i64: 1, 1, 8>}, {pipeline_mode = #tpu.pipeline_mode<synchronous>, transform_indices = @transform_5, window_bounds = array<i64: 32, 32>}, {pipeline_mode = #tpu.pipeline_mode<synchronous>, transform_indices = @transform_6, window_bounds = array<i64: 1, 32>}, {pipeline_mode = #tpu.pipeline_mode<synchronous>, transform_indices = @transform_7, window_bounds = array<i64: 32, 32>}, {pipeline_mode = #tpu.pipeline_mode<synchronous>, transform_indices = @transform_8, window_bounds = array<i64: 1, 32>}, {pipeline_mode = #tpu.pipeline_mode<synchronous>, transform_indices = @transform_9, window_bounds = array<i64: 32, 32>}, {pipeline_mode = #tpu.pipeline_mode<synchronous>, transform_indices = @transform_10, window_bounds = array<i64: 1, 32>}, {pipeline_mode = #tpu.pipeline_mode<synchronous>, transform_indices = @transform_11, window_bounds = array<i64: 32, 32>}, {pipeline_mode = #tpu.pipeline_mode<synchronous>, transform_indices = @transform_12, window_bounds = array<i64: 1, 32>}, {pipeline_mode = #tpu.pipeline_mode<synchronous>, transform_indices = @transform_13, window_bounds = array<i64: 1, 32>}, {pipeline_mode = #tpu.pipeline_mode<synchronous>, transform_indices = @transform_14, window_bounds = array<i64: 1, 32>}, {transform_indices = @transform_15, window_bounds = array<i64: 1, 8, 32>}]} {
    %c0 = arith.constant 0 : index
    %c0_0 = arith.constant 0 : index
    %c0_1 = arith.constant 0 : index
    %0 = vector.load %arg1[%c0, %c0_0, %c0_1] : memref<1x8x32xf32, #tpu.memory_space<vmem>>, vector<1x8x32xf32>
    %1 = vector.shape_cast %0 : vector<1x8x32xf32> to vector<8x32xf32>
    %c0_2 = arith.constant 0 : index
    %c0_3 = arith.constant 0 : index
    %c0_4 = arith.constant 0 : index
    %2 = vector.load %arg2[%c0_2, %c0_3, %c0_4] : memref<1x8x32xf32, #tpu.memory_space<vmem>>, vector<1x8x32xf32>
    %3 = vector.shape_cast %2 : vector<1x8x32xf32> to vector<8x32xf32>
    %c0_5 = arith.constant 0 : index
    %c0_6 = arith.constant 0 : index
    %c0_7 = arith.constant 0 : index
    %4 = vector.load %arg3[%c0_5, %c0_6, %c0_7] : memref<1x8x32xf32, #tpu.memory_space<vmem>>, vector<1x8x32xf32>
    %5 = vector.shape_cast %4 : vector<1x8x32xf32> to vector<8x32xf32>
    %c0_8 = arith.constant 0 : index
    %c0_9 = arith.constant 0 : index
    %c0_10 = arith.constant 0 : index
    %6 = vector.load %arg4[%c0_8, %c0_9, %c0_10] : memref<1x8x1xf32, #tpu.memory_space<vmem>>, vector<1x8x1xf32>
    %7 = vector.shape_cast %6 : vector<1x8x1xf32> to vector<8x1xf32>
    %c0_11 = arith.constant 0 : index
    %c0_12 = arith.constant 0 : index
    %c0_13 = arith.constant 0 : index
    %8 = vector.load %arg5[%c0_11, %c0_12, %c0_13] : memref<1x1x8xf32, #tpu.memory_space<vmem>>, vector<1x1x8xf32>
    %9 = vector.shape_cast %8 : vector<1x1x8xf32> to vector<1x8xf32>
    %c0_14 = arith.constant 0 : index
    %c0_15 = arith.constant 0 : index
    %10 = vector.load %arg6[%c0_14, %c0_15] : memref<32x32xf32, #tpu.memory_space<vmem>>, vector<32x32xf32>
    %cst = arith.constant dense<0.000000e+00> : vector<8x32xf32>
    %11 = tpu.matmul %1, %10, %cst {dimension_numbers = #tpu.dot_dimension_numbers<[1], [0], [0], [1], [0, 0, 1, 1], [], []>} : vector<8x32xf32>, vector<32x32xf32>, vector<8x32xf32> -> vector<8x32xf32>
    %c0_16 = arith.constant 0 : index
    %c0_17 = arith.constant 0 : index
    %12 = vector.load %arg7[%c0_16, %c0_17] : memref<1x32xf32, #tpu.memory_space<vmem>>, vector<1x32xf32>
    %13 = vector.broadcast %12 : vector<1x32xf32> to vector<8x32xf32>
    %14 = arith.addf %11, %13 : vector<8x32xf32>
    %c0_18 = arith.constant 0 : index
    %c0_19 = arith.constant 0 : index
    %15 = vector.load %arg8[%c0_18, %c0_19] : memref<32x32xf32, #tpu.memory_space<vmem>>, vector<32x32xf32>
    %cst_20 = arith.constant dense<0.000000e+00> : vector<8x32xf32>
    %16 = tpu.matmul %3, %15, %cst_20 {dimension_numbers = #tpu.dot_dimension_numbers<[1], [0], [0], [1], [0, 0, 1, 1], [], []>} : vector<8x32xf32>, vector<32x32xf32>, vector<8x32xf32> -> vector<8x32xf32>
    %c0_21 = arith.constant 0 : index
    %c0_22 = arith.constant 0 : index
    %17 = vector.load %arg9[%c0_21, %c0_22] : memref<1x32xf32, #tpu.memory_space<vmem>>, vector<1x32xf32>
    %18 = vector.broadcast %17 : vector<1x32xf32> to vector<8x32xf32>
    %19 = arith.addf %16, %18 : vector<8x32xf32>
    %c0_23 = arith.constant 0 : index
    %c0_24 = arith.constant 0 : index
    %20 = vector.load %arg10[%c0_23, %c0_24] : memref<32x32xf32, #tpu.memory_space<vmem>>, vector<32x32xf32>
    %cst_25 = arith.constant dense<0.000000e+00> : vector<8x32xf32>
    %21 = tpu.matmul %5, %20, %cst_25 {dimension_numbers = #tpu.dot_dimension_numbers<[1], [0], [0], [1], [0, 0, 1, 1], [], []>} : vector<8x32xf32>, vector<32x32xf32>, vector<8x32xf32> -> vector<8x32xf32>
    %c0_26 = arith.constant 0 : index
    %c0_27 = arith.constant 0 : index
    %22 = vector.load %arg11[%c0_26, %c0_27] : memref<1x32xf32, #tpu.memory_space<vmem>>, vector<1x32xf32>
    %23 = vector.broadcast %22 : vector<1x32xf32> to vector<8x32xf32>
    %24 = arith.addf %21, %23 : vector<8x32xf32>
    %cst_28 = arith.constant 0.353553385 : f32
    %25 = vector.broadcast %cst_28 : f32 to vector<8x32xf32>
    %26 = arith.mulf %14, %25 : vector<8x32xf32>
    %cst_29 = arith.constant 5.000000e-01 : f32
    %27 = vector.broadcast %cst_29 : f32 to vector<8x1xf32>
    %28 = arith.cmpf ogt, %7, %27 : vector<8x1xf32>
    %cst_30 = arith.constant 5.000000e-01 : f32
    %29 = vector.broadcast %cst_30 : f32 to vector<1x8xf32>
    %30 = arith.cmpf ogt, %9, %29 : vector<1x8xf32>
    %31 = vector.broadcast %28 : vector<8x1xi1> to vector<8x8xi1>
    %32 = vector.broadcast %30 : vector<1x8xi1> to vector<8x8xi1>
    %33 = arith.andi %31, %32 : vector<8x8xi1>
    %34 = tpu.iota {dimensions = array<i32: 0>} : vector<8x8xi32>
    %35 = tpu.iota {dimensions = array<i32: 1>} : vector<8x8xi32>
    %36 = arith.cmpi sle, %35, %34 : vector<8x8xi32>
    %37 = arith.andi %33, %36 : vector<8x8xi1>
    %38 = vector.extract_strided_slice %26 {offsets = [0, 0], sizes = [8, 8], strides = [1, 1]} : vector<8x32xf32> to vector<8x8xf32>
    %39 = vector.extract_strided_slice %19 {offsets = [0, 0], sizes = [8, 8], strides = [1, 1]} : vector<8x32xf32> to vector<8x8xf32>
    %40 = vector.extract_strided_slice %24 {offsets = [0, 0], sizes = [8, 8], strides = [1, 1]} : vector<8x32xf32> to vector<8x8xf32>
    %41 = tpu.transpose %39, [1, 0] : vector<8x8xf32> -> vector<8x8xf32>
    %cst_31 = arith.constant dense<0.000000e+00> : vector<8x8xf32>
    %42 = tpu.matmul %38, %41, %cst_31 {dimension_numbers = #tpu.dot_dimension_numbers<[1], [0], [0], [1], [0, 0, 1, 1], [], []>} : vector<8x8xf32>, vector<8x8xf32>, vector<8x8xf32> -> vector<8x8xf32>
    %cst_32 = arith.constant -1.000000e+04 : f32
    %43 = vector.broadcast %cst_32 : f32 to vector<8x8xf32>
    %44 = arith.select %37, %42, %43 : vector<8x8xi1>, vector<8x8xf32>
    %cst_33 = arith.constant dense<0xFF800000> : vector<8xf32>
    %45 = vector.multi_reduction <maximumf>, %44, %cst_33 [1] : vector<8x8xf32> to vector<8xf32>
    %46 = vector.shape_cast %45 : vector<8xf32> to vector<8x1xf32>
    %47 = vector.broadcast %46 : vector<8x1xf32> to vector<8x8xf32>
    %48 = arith.subf %44, %47 : vector<8x8xf32>
    %49 = math.exp %48 : vector<8x8xf32>
    %cst_34 = arith.constant dense<0.000000e+00> : vector<8xf32>
    %50 = vector.multi_reduction <add>, %49, %cst_34 [1] : vector<8x8xf32> to vector<8xf32>
    %51 = vector.shape_cast %50 : vector<8xf32> to vector<8x1xf32>
    %52 = tpu.reciprocal %51 {approx = true} : vector<8x1xf32> -> vector<8x1xf32>
    %53 = vector.broadcast %52 : vector<8x1xf32> to vector<8x8xf32>
    %54 = arith.mulf %49, %53 : vector<8x8xf32>
    %cst_35 = arith.constant dense<0.000000e+00> : vector<8x8xf32>
    %55 = tpu.matmul %54, %40, %cst_35 {dimension_numbers = #tpu.dot_dimension_numbers<[1], [0], [0], [1], [0, 0, 1, 1], [], []>} : vector<8x8xf32>, vector<8x8xf32>, vector<8x8xf32> -> vector<8x8xf32>
    %56 = vector.extract_strided_slice %26 {offsets = [0, 8], sizes = [8, 8], strides = [1, 1]} : vector<8x32xf32> to vector<8x8xf32>
    %57 = vector.extract_strided_slice %19 {offsets = [0, 8], sizes = [8, 8], strides = [1, 1]} : vector<8x32xf32> to vector<8x8xf32>
    %58 = vector.extract_strided_slice %24 {offsets = [0, 8], sizes = [8, 8], strides = [1, 1]} : vector<8x32xf32> to vector<8x8xf32>
    %59 = tpu.transpose %57, [1, 0] : vector<8x8xf32> -> vector<8x8xf32>
    %cst_36 = arith.constant dense<0.000000e+00> : vector<8x8xf32>
    %60 = tpu.matmul %56, %59, %cst_36 {dimension_numbers = #tpu.dot_dimension_numbers<[1], [0], [0], [1], [0, 0, 1, 1], [], []>} : vector<8x8xf32>, vector<8x8xf32>, vector<8x8xf32> -> vector<8x8xf32>
    %cst_37 = arith.constant -1.000000e+04 : f32
    %61 = vector.broadcast %cst_37 : f32 to vector<8x8xf32>
    %62 = arith.select %37, %60, %61 : vector<8x8xi1>, vector<8x8xf32>
    %cst_38 = arith.constant dense<0xFF800000> : vector<8xf32>
    %63 = vector.multi_reduction <maximumf>, %62, %cst_38 [1] : vector<8x8xf32> to vector<8xf32>
    %64 = vector.shape_cast %63 : vector<8xf32> to vector<8x1xf32>
    %65 = vector.broadcast %64 : vector<8x1xf32> to vector<8x8xf32>
    %66 = arith.subf %62, %65 : vector<8x8xf32>
    %67 = math.exp %66 : vector<8x8xf32>
    %cst_39 = arith.constant dense<0.000000e+00> : vector<8xf32>
    %68 = vector.multi_reduction <add>, %67, %cst_39 [1] : vector<8x8xf32> to vector<8xf32>
    %69 = vector.shape_cast %68 : vector<8xf32> to vector<8x1xf32>
    %70 = tpu.reciprocal %69 {approx = true} : vector<8x1xf32> -> vector<8x1xf32>
    %71 = vector.broadcast %70 : vector<8x1xf32> to vector<8x8xf32>
    %72 = arith.mulf %67, %71 : vector<8x8xf32>
    %cst_40 = arith.constant dense<0.000000e+00> : vector<8x8xf32>
    %73 = tpu.matmul %72, %58, %cst_40 {dimension_numbers = #tpu.dot_dimension_numbers<[1], [0], [0], [1], [0, 0, 1, 1], [], []>} : vector<8x8xf32>, vector<8x8xf32>, vector<8x8xf32> -> vector<8x8xf32>
    %74 = vector.extract_strided_slice %26 {offsets = [0, 16], sizes = [8, 8], strides = [1, 1]} : vector<8x32xf32> to vector<8x8xf32>
    %75 = vector.extract_strided_slice %19 {offsets = [0, 16], sizes = [8, 8], strides = [1, 1]} : vector<8x32xf32> to vector<8x8xf32>
    %76 = vector.extract_strided_slice %24 {offsets = [0, 16], sizes = [8, 8], strides = [1, 1]} : vector<8x32xf32> to vector<8x8xf32>
    %77 = tpu.transpose %75, [1, 0] : vector<8x8xf32> -> vector<8x8xf32>
    %cst_41 = arith.constant dense<0.000000e+00> : vector<8x8xf32>
    %78 = tpu.matmul %74, %77, %cst_41 {dimension_numbers = #tpu.dot_dimension_numbers<[1], [0], [0], [1], [0, 0, 1, 1], [], []>} : vector<8x8xf32>, vector<8x8xf32>, vector<8x8xf32> -> vector<8x8xf32>
    %cst_42 = arith.constant -1.000000e+04 : f32
    %79 = vector.broadcast %cst_42 : f32 to vector<8x8xf32>
    %80 = arith.select %37, %78, %79 : vector<8x8xi1>, vector<8x8xf32>
    %cst_43 = arith.constant dense<0xFF800000> : vector<8xf32>
    %81 = vector.multi_reduction <maximumf>, %80, %cst_43 [1] : vector<8x8xf32> to vector<8xf32>
    %82 = vector.shape_cast %81 : vector<8xf32> to vector<8x1xf32>
    %83 = vector.broadcast %82 : vector<8x1xf32> to vector<8x8xf32>
    %84 = arith.subf %80, %83 : vector<8x8xf32>
    %85 = math.exp %84 : vector<8x8xf32>
    %cst_44 = arith.constant dense<0.000000e+00> : vector<8xf32>
    %86 = vector.multi_reduction <add>, %85, %cst_44 [1] : vector<8x8xf32> to vector<8xf32>
    %87 = vector.shape_cast %86 : vector<8xf32> to vector<8x1xf32>
    %88 = tpu.reciprocal %87 {approx = true} : vector<8x1xf32> -> vector<8x1xf32>
    %89 = vector.broadcast %88 : vector<8x1xf32> to vector<8x8xf32>
    %90 = arith.mulf %85, %89 : vector<8x8xf32>
    %cst_45 = arith.constant dense<0.000000e+00> : vector<8x8xf32>
    %91 = tpu.matmul %90, %76, %cst_45 {dimension_numbers = #tpu.dot_dimension_numbers<[1], [0], [0], [1], [0, 0, 1, 1], [], []>} : vector<8x8xf32>, vector<8x8xf32>, vector<8x8xf32> -> vector<8x8xf32>
    %92 = vector.extract_strided_slice %26 {offsets = [0, 24], sizes = [8, 8], strides = [1, 1]} : vector<8x32xf32> to vector<8x8xf32>
    %93 = vector.extract_strided_slice %19 {offsets = [0, 24], sizes = [8, 8], strides = [1, 1]} : vector<8x32xf32> to vector<8x8xf32>
    %94 = vector.extract_strided_slice %24 {offsets = [0, 24], sizes = [8, 8], strides = [1, 1]} : vector<8x32xf32> to vector<8x8xf32>
    %95 = tpu.transpose %93, [1, 0] : vector<8x8xf32> -> vector<8x8xf32>
    %cst_46 = arith.constant dense<0.000000e+00> : vector<8x8xf32>
    %96 = tpu.matmul %92, %95, %cst_46 {dimension_numbers = #tpu.dot_dimension_numbers<[1], [0], [0], [1], [0, 0, 1, 1], [], []>} : vector<8x8xf32>, vector<8x8xf32>, vector<8x8xf32> -> vector<8x8xf32>
    %cst_47 = arith.constant -1.000000e+04 : f32
    %97 = vector.broadcast %cst_47 : f32 to vector<8x8xf32>
    %98 = arith.select %37, %96, %97 : vector<8x8xi1>, vector<8x8xf32>
    %cst_48 = arith.constant dense<0xFF800000> : vector<8xf32>
    %99 = vector.multi_reduction <maximumf>, %98, %cst_48 [1] : vector<8x8xf32> to vector<8xf32>
    %100 = vector.shape_cast %99 : vector<8xf32> to vector<8x1xf32>
    %101 = vector.broadcast %100 : vector<8x1xf32> to vector<8x8xf32>
    %102 = arith.subf %98, %101 : vector<8x8xf32>
    %103 = math.exp %102 : vector<8x8xf32>
    %cst_49 = arith.constant dense<0.000000e+00> : vector<8xf32>
    %104 = vector.multi_reduction <add>, %103, %cst_49 [1] : vector<8x8xf32> to vector<8xf32>
    %105 = vector.shape_cast %104 : vector<8xf32> to vector<8x1xf32>
    %106 = tpu.reciprocal %105 {approx = true} : vector<8x1xf32> -> vector<8x1xf32>
    %107 = vector.broadcast %106 : vector<8x1xf32> to vector<8x8xf32>
    %108 = arith.mulf %103, %107 : vector<8x8xf32>
    %cst_50 = arith.constant dense<0.000000e+00> : vector<8x8xf32>
    %109 = tpu.matmul %108, %94, %cst_50 {dimension_numbers = #tpu.dot_dimension_numbers<[1], [0], [0], [1], [0, 0, 1, 1], [], []>} : vector<8x8xf32>, vector<8x8xf32>, vector<8x8xf32> -> vector<8x8xf32>
    %110 = tpu.concatenate %55, %73, %91, %109 in 1 : vector<8x8xf32>, vector<8x8xf32>, vector<8x8xf32>, vector<8x8xf32> -> vector<8x32xf32>
    %c0_51 = arith.constant 0 : index
    %c0_52 = arith.constant 0 : index
    %111 = vector.load %arg12[%c0_51, %c0_52] : memref<32x32xf32, #tpu.memory_space<vmem>>, vector<32x32xf32>
    %cst_53 = arith.constant dense<0.000000e+00> : vector<8x32xf32>
    %112 = tpu.matmul %110, %111, %cst_53 {dimension_numbers = #tpu.dot_dimension_numbers<[1], [0], [0], [1], [0, 0, 1, 1], [], []>} : vector<8x32xf32>, vector<32x32xf32>, vector<8x32xf32> -> vector<8x32xf32>
    %c0_54 = arith.constant 0 : index
    %c0_55 = arith.constant 0 : index
    %113 = vector.load %arg13[%c0_54, %c0_55] : memref<1x32xf32, #tpu.memory_space<vmem>>, vector<1x32xf32>
    %114 = vector.broadcast %113 : vector<1x32xf32> to vector<8x32xf32>
    %115 = arith.addf %112, %114 : vector<8x32xf32>
    %116 = arith.addf %115, %1 : vector<8x32xf32>
    %c0_56 = arith.constant 0 : index
    %c0_57 = arith.constant 0 : index
    %117 = vector.load %arg14[%c0_56, %c0_57] : memref<1x32xf32, #tpu.memory_space<vmem>>, vector<1x32xf32>
    %c0_58 = arith.constant 0 : index
    %c0_59 = arith.constant 0 : index
    %118 = vector.load %arg15[%c0_58, %c0_59] : memref<1x32xf32, #tpu.memory_space<vmem>>, vector<1x32xf32>
    %cst_60 = arith.constant dense<0.000000e+00> : vector<8xf32>
    %119 = vector.multi_reduction <add>, %116, %cst_60 [1] : vector<8x32xf32> to vector<8xf32>
    %120 = vector.shape_cast %119 : vector<8xf32> to vector<8x1xf32>
    %cst_61 = arith.constant 3.200000e+01 : f32
    %121 = vector.broadcast %cst_61 : f32 to vector<8x1xf32>
    %122 = arith.divf %120, %121 : vector<8x1xf32>
    %123 = vector.broadcast %122 : vector<8x1xf32> to vector<8x32xf32>
    %124 = arith.subf %116, %123 : vector<8x32xf32>
    %125 = arith.mulf %124, %124 : vector<8x32xf32>
    %cst_62 = arith.constant dense<0.000000e+00> : vector<8xf32>
    %126 = vector.multi_reduction <add>, %125, %cst_62 [1] : vector<8x32xf32> to vector<8xf32>
    %127 = vector.shape_cast %126 : vector<8xf32> to vector<8x1xf32>
    %cst_63 = arith.constant 3.200000e+01 : f32
    %128 = vector.broadcast %cst_63 : f32 to vector<8x1xf32>
    %129 = arith.divf %127, %128 : vector<8x1xf32>
    %130 = vector.broadcast %122 : vector<8x1xf32> to vector<8x32xf32>
    %131 = arith.subf %116, %130 : vector<8x32xf32>
    %cst_64 = arith.constant 9.99999996E-13 : f32
    %132 = vector.broadcast %cst_64 : f32 to vector<8x1xf32>
    %133 = arith.addf %129, %132 : vector<8x1xf32>
    %134 = math.rsqrt %133 : vector<8x1xf32>
    %135 = vector.broadcast %134 : vector<8x1xf32> to vector<8x32xf32>
    %136 = arith.mulf %131, %135 : vector<8x32xf32>
    %137 = vector.broadcast %117 : vector<1x32xf32> to vector<8x32xf32>
    %138 = arith.mulf %136, %137 : vector<8x32xf32>
    %139 = vector.broadcast %118 : vector<1x32xf32> to vector<8x32xf32>
    %140 = arith.addf %138, %139 : vector<8x32xf32>
    %c0_65 = arith.constant 0 : index
    %c0_66 = arith.constant 0 : index
    %c0_67 = arith.constant 0 : index
    %141 = vector.load %arg16[%c0_65, %c0_66, %c0_67] : memref<1x8x32xf32, #tpu.memory_space<vmem>>, vector<1x8x32xf32>
    %142 = vector.shape_cast %141 : vector<1x8x32xf32> to vector<8x32xf32>
    %143 = vector.shape_cast %140 : vector<8x32xf32> to vector<1x8x32xf32>
    tpu.vector_store %arg16[%c0_65, %c0_66, %c0_67], %143 {strides = array<i32>} : memref<1x8x32xf32, #tpu.memory_space<vmem>>, vector<1x8x32xf32>,
    return
  }
  func.func @transform_0(%arg0: i32) -> (i32, i32, i32) {
    %c0_i32 = arith.constant 0 : i32
    %c0_i32_0 = arith.constant 0 : i32
    %c0_i32_1 = arith.constant 0 : i32
    return %arg0, %c0_i32, %c0_i32_0 : i32, i32, i32
  }
  func.func @transform_1(%arg0: i32) -> (i32, i32, i32) {
    %c0_i32 = arith.constant 0 : i32
    %c0_i32_0 = arith.constant 0 : i32
    %c0_i32_1 = arith.constant 0 : i32
    return %arg0, %c0_i32, %c0_i32_0 : i32, i32, i32
  }
  func.func @transform_2(%arg0: i32) -> (i32, i32, i32) {
    %c0_i32 = arith.constant 0 : i32
    %c0_i32_0 = arith.constant 0 : i32
    %c0_i32_1 = arith.constant 0 : i32
    return %arg0, %c0_i32, %c0_i32_0 : i32, i32, i32
  }
  func.func @transform_3(%arg0: i32) -> (i32, i32, i32) {
    %c0_i32 = arith.constant 0 : i32
    %c0_i32_0 = arith.constant 0 : i32
    %c0_i32_1 = arith.constant 0 : i32
    return %arg0, %c0_i32, %c0_i32_0 : i32, i32, i32
  }
  func.func @transform_4(%arg0: i32) -> (i32, i32, i32) {
    %c0_i32 = arith.constant 0 : i32
    %c0_i32_0 = arith.constant 0 : i32
    %c0_i32_1 = arith.constant 0 : i32
    return %arg0, %c0_i32, %c0_i32_0 : i32, i32, i32
  }
  func.func @transform_5(%arg0: i32) -> (i32, i32) {
    %c0_i32 = arith.constant 0 : i32
    %c0_i32_0 = arith.constant 0 : i32
    %c0_i32_1 = arith.constant 0 : i32
    return %c0_i32, %c0_i32_0 : i32, i32
  }
  func.func @transform_6(%arg0: i32) -> (i32, i32) {
    %c0_i32 = arith.constant 0 : i32
    %c0_i32_0 = arith.constant 0 : i32
    %c0_i32_1 = arith.constant 0 : i32
    return %c0_i32, %c0_i32_0 : i32, i32
  }
  func.func @transform_7(%arg0: i32) -> (i32, i32) {
    %c0_i32 = arith.constant 0 : i32
    %c0_i32_0 = arith.constant 0 : i32
    %c0_i32_1 = arith.constant 0 : i32
    return %c0_i32, %c0_i32_0 : i32, i32
  }
  func.func @transform_8(%arg0: i32) -> (i32, i32) {
    %c0_i32 = arith.constant 0 : i32
    %c0_i32_0 = arith.constant 0 : i32
    %c0_i32_1 = arith.constant 0 : i32
    return %c0_i32, %c0_i32_0 : i32, i32
  }
  func.func @transform_9(%arg0: i32) -> (i32, i32) {
    %c0_i32 = arith.constant 0 : i32
    %c0_i32_0 = arith.constant 0 : i32
    %c0_i32_1 = arith.constant 0 : i32
    return %c0_i32, %c0_i32_0 : i32, i32
  }
  func.func @transform_10(%arg0: i32) -> (i32, i32) {
    %c0_i32 = arith.constant 0 : i32
    %c0_i32_0 = arith.constant 0 : i32
    %c0_i32_1 = arith.constant 0 : i32
    return %c0_i32, %c0_i32_0 : i32, i32
  }
  func.func @transform_11(%arg0: i32) -> (i32, i32) {
    %c0_i32 = arith.constant 0 : i32
    %c0_i32_0 = arith.constant 0 : i32
    %c0_i32_1 = arith.constant 0 : i32
    return %c0_i32, %c0_i32_0 : i32, i32
  }
  func.func @transform_12(%arg0: i32) -> (i32, i32) {
    %c0_i32 = arith.constant 0 : i32
    %c0_i32_0 = arith.constant 0 : i32
    %c0_i32_1 = arith.constant 0 : i32
    return %c0_i32, %c0_i32_0 : i32, i32
  }
  func.func @transform_13(%arg0: i32) -> (i32, i32) {
    %c0_i32 = arith.constant 0 : i32
    %c0_i32_0 = arith.constant 0 : i32
    %c0_i32_1 = arith.constant 0 : i32
    return %c0_i32, %c0_i32_0 : i32, i32
  }
  func.func @transform_14(%arg0: i32) -> (i32, i32) {
    %c0_i32 = arith.constant 0 : i32
    %c0_i32_0 = arith.constant 0 : i32
    %c0_i32_1 = arith.constant 0 : i32
    return %c0_i32, %c0_i32_0 : i32, i32
  }
  func.func @transform_15(%arg0: i32) -> (i32, i32, i32) {
    %c0_i32 = arith.constant 0 : i32
    %c0_i32_0 = arith.constant 0 : i32
    %c0_i32_1 = arith.constant 0 : i32
    return %arg0, %c0_i32, %c0_i32_0 : i32, i32, i32
  }
}

</mosaic_0001>

<llo_original>
// kernel: transformer_forward.12
$region0: #{transformer_forward.12}
  #allocation0 [shape = 'u32[]', space=smem, size = 0x4, offset = 0x4, fixed_abs, tag = 'smem constant byte address 0x4 - core index']
  #allocation1 [shape = 'u32[144,128]{1,0:T(1,128)}', space=vmem, size = 0x12000, scoped, tag = 'internal scratch']
  %s0 = inlined_call_operand.vmem [shape: f32[16,32], index: 0, kind: input, shape index: {}]
  %s1 = inlined_call_operand.vmem [shape: f32[32,64], index: 1, kind: input, shape index: {}]
  %s2 = inlined_call_operand.vmem [shape: f32[1,64], index: 2, kind: input, shape index: {}]
  %s3 = inlined_call_operand.vmem [shape: f32[64,32], index: 3, kind: input, shape index: {}]
  %s4 = inlined_call_operand.vmem [shape: f32[1,32], index: 4, kind: input, shape index: {}]
  %s5 = inlined_call_operand.vmem [shape: f32[1,32], index: 5, kind: input, shape index: {}]
  %s6 = inlined_call_operand.vmem [shape: f32[1,32], index: 6, kind: input, shape index: {}]
  %s7 = inlined_call_operand.vmem [shape: f32[16,32], index: 7, kind: output, shape index: {}]
  %s8 = sld [smem:[#allocation0]]
  $region38: #{transformer_forward.12} parent=0
    _
  %s10 = ssub.s32 1, %s8
  %s11 = scalar_select 0, %s10, %s8
  // Predicated region
  $region2: #{transformer_forward.12} parent=0 // pred_check
    _
  $region3: #{transformer_forward.12} parent=0 // pred_check_branch
    %13 = sbr.rel (0) target = $region5
  $region4: #{transformer_forward.12} parent=0 // pred_region
    _
  $region5: #{transformer_forward.12} parent=0 // pred_fallthru
    _
  // Predicated region
  $region6: #{transformer_forward.12} parent=0 // pred_check
    _
  $region7: #{transformer_forward.12} parent=0 // pred_check_branch
    %15 = sbr.rel (0) target = $region9
  $region8: #{transformer_forward.12} parent=0 // pred_region
    _
  $region9: #{transformer_forward.12} parent=0 // pred_fallthru
    _
  // Predicated region
  $region10: #{transformer_forward.12} parent=0 // pred_check
    _
  $region11: #{transformer_forward.12} parent=0 // pred_check_branch
    %17 = sbr.rel (0) target = $region13
  $region12: #{transformer_forward.12} parent=0 // pred_region
    _
  $region13: #{transformer_forward.12} parent=0 // pred_fallthru
    _
  // Predicated region
  $region14: #{transformer_forward.12} parent=0 // pred_check
    _
  $region15: #{transformer_forward.12} parent=0 // pred_check_branch
    %19 = sbr.rel (0) target = $region17
  $region16: #{transformer_forward.12} parent=0 // pred_region
    _
  $region17: #{transformer_forward.12} parent=0 // pred_fallthru
    _
  // Predicated region
  $region18: #{transformer_forward.12} parent=0 // pred_check
    _
  $region19: #{transformer_forward.12} parent=0 // pred_check_branch
    %21 = sbr.rel (0) target = $region21
  $region20: #{transformer_forward.12} parent=0 // pred_region
    _
  $region21: #{transformer_forward.12} parent=0 // pred_fallthru
    _
  // Predicated region
  $region22: #{transformer_forward.12} parent=0 // pred_check
    _
  $region23: #{transformer_forward.12} parent=0 // pred_check_branch
    %23 = sbr.rel (0) target = $region25
  $region24: #{transformer_forward.12} parent=0 // pred_region
    _
  $region25: #{transformer_forward.12} parent=0 // pred_fallthru
    _
  // Predicated region
  $region26: #{transformer_forward.12} parent=0 // pred_check
    _
  $region27: #{transformer_forward.12} parent=0 // pred_check_branch
    %25 = sbr.rel (0) target = $region29
  $region28: #{transformer_forward.12} parent=0 // pred_region
    _
  $region29: #{transformer_forward.12} parent=0 // pred_fallthru
    _
  %v26 = vld [vmem:[%s0] sm:$0xff]
  %v27 = vld [vmem:[%s0 + $0x8] sm:$0xff]
  %v28 = vld [vmem:[%s1] sm:$0xff]
  %v29 = vld [vmem:[%s1 + $0x8] sm:$0xff]
  %v30 = vld [vmem:[%s1 + $0x10] sm:$0xff]
  %v31 = vld [vmem:[%s1 + $0x18] sm:$0xff]
  %v32 = vld [vmem:[%s2] sm:$0x1]
  %v34 = vlaneseq
  %v35 = vshrl.u32 %v34, 7
  %v36 = vsub.s32 0, %v35
  %v37 = vrot.slane %v32, %v36
  %vm39 = vcmask 261120
  %v41 = vsel %vm39, %v26, 0
  %v44 = vsel %vm39, %v27, 0
  %46 = vmatprep.subr.mxu0 0.0
  %47 = vmatpush1.msra.mxu0 %v28
  %48 = vmatprep.subr.mxu0 0.0
  %49 = vmatpush1.msra.mxu0 %v29
  %50 = vmatprep.subr.mxu0 0.0
  %51 = vmatpush1.msra.mxu0 %v30
  %52 = vmatprep.subr.mxu0 0.0
  %53 = vmatpush1.msra.mxu0 %v31
  %54 = vmatprep.subr.mxu0 0.0
  %55 = vmatpush1.msra.mxu0 0.0
  %56 = vmatprep.subr.mxu0 0.0
  %57 = vmatpush1.msra.mxu0 0.0
  %58 = vmatprep.subr.mxu0 0.0
  %59 = vmatpush1.msra.mxu0 0.0
  %60 = vmatprep.subr.mxu0 0.0
  %61 = vmatpush1.msra.mxu0 0.0
  %62 = vmatprep.subr.mxu0 0.0
  %63 = vmatpush1.msra.mxu0 0.0
  %64 = vmatprep.subr.mxu0 0.0
  %65 = vmatpush1.msra.mxu0 0.0
  %66 = vmatprep.subr.mxu0 0.0
  %67 = vmatpush1.msra.mxu0 0.0
  %68 = vmatprep.subr.mxu0 0.0
  %69 = vmatpush1.msra.mxu0 0.0
  %70 = vmatprep.subr.mxu0 0.0
  %71 = vmatpush1.msra.mxu0 0.0
  %72 = vmatprep.subr.mxu0 0.0
  %73 = vmatpush1.msra.mxu0 0.0
  %74 = vmatprep.subr.mxu0 0.0
  %75 = vmatpush1.msra.mxu0 0.0
  %76 = vmatprep.subr.mxu0 0.0
  %77 = vmatpush1.msra.mxu0 0.0
  %78 = vmatprep.subr.mxu0 0.0
  %79 = vmatpush1.msra.mxu0 0.0
  %80 = vmatprep.subr.mxu0 0.0
  %81 = vmatpush1.msra.mxu0 0.0
  %82 = vmatprep.subr.mxu0 0.0
  %83 = vmatpush1.msra.mxu0 0.0
  %84 = vmatprep.subr.mxu0 0.0
  %85 = vmatpush1.msra.mxu0 0.0
  %86 = vmatprep.subr.mxu0 0.0
  %87 = vmatpush1.msra.mxu0 0.0
  %88 = vmatprep.subr.mxu0 0.0
  %89 = vmatpush1.msra.mxu0 0.0
  %90 = vmatprep.subr.mxu0 0.0
  %91 = vmatpush1.msra.mxu0 0.0
  %92 = vmatprep.subr.mxu0 0.0
  %93 = vmatpush1.msra.mxu0 0.0
  %94 = vmatprep.subr.mxu0 0.0
  %95 = vmatpush1.msra.mxu0 0.0
  %96 = vmatprep.subr.mxu0 0.0
  %97 = vmatpush1.msra.mxu0 0.0
  %98 = vmatprep.subr.mxu0 0.0
  %99 = vmatpush1.msra.mxu0 0.0
  %100 = vmatprep.subr.mxu0 0.0
  %101 = vmatpush1.msra.mxu0 0.0
  %102 = vmatprep.subr.mxu0 0.0
  %103 = vmatpush1.msra.mxu0 0.0
  %104 = vmatprep.subr.mxu0 0.0
  %105 = vmatpush1.msra.mxu0 0.0
  %106 = vmatprep.subr.mxu0 0.0
  %107 = vmatpush1.msra.mxu0 0.0
  %108 = vmatprep.subr.mxu0 0.0
  %109 = vmatpush1.msra.mxu0 0.0
  %110 = vmatprep.mubr.f32.mxu0 0.0
  %111 = vmatmul.mubr.f32.gmra.mrb[0].mxu0 %v41
  %v112 = vpop.f32.mrb[0].mxu0
  %v113 = vadd.f32 %v37, %v112
  %v114 = vpop.f32.mrb[0].mxu0
  %115 = vmatprep.mubr.f32.mxu0 0.0
  %116 = vmatmul.mubr.f32.gmra.mrb[0].mxu0 %v44
  %v117 = vpop.f32.mrb[0].mxu0
  %v118 = vadd.f32 %v37, %v117
  %v119 = vpop.f32.mrb[0].mxu0
  %120 = vdwg.mxu0
  %v121 = vmax.f32 %v113, 0.0
  %v122 = vmax.f32 %v118, 0.0
  %v123 = vld [vmem:[%s3] sm:$0xff]
  %v124 = vld [vmem:[%s3 + $0x8] sm:$0xff]
  %v125 = vld [vmem:[%s3 + $0x10] sm:$0xff]
  %v126 = vld [vmem:[%s3 + $0x18] sm:$0xff]
  %v127 = vld [vmem:[%s3 + $0x20] sm:$0xff]
  %v128 = vld [vmem:[%s3 + $0x28] sm:$0xff]
  %v129 = vld [vmem:[%s3 + $0x30] sm:$0xff]
  %v130 = vld [vmem:[%s3 + $0x38] sm:$0xff]
  %v131 = vld [vmem:[%s4] sm:$0x1]
  %v133 = vlaneseq
  %v134 = vshrl.u32 %v133, 7
  %v135 = vsub.s32 0, %v134
  %v136 = vrot.slane %v131, %v135
  %vm138 = vcmask 523264
  %v140 = vsel %vm138, %v121, 0
  %v143 = vsel %vm138, %v122, 0
  %145 = vmatprep.subr.mxu0 0.0
  %146 = vmatpush1.msra.mxu0 %v123
  %147 = vmatprep.subr.mxu0 0.0
  %148 = vmatpush1.msra.mxu0 %v124
  %149 = vmatprep.subr.mxu0 0.0
  %150 = vmatpush1.msra.mxu0 %v125
  %151 = vmatprep.subr.mxu0 0.0
  %152 = vmatpush1.msra.mxu0 %v126
  %153 = vmatprep.subr.mxu0 0.0
  %154 = vmatpush1.msra.mxu0 %v127
  %155 = vmatprep.subr.mxu0 0.0
  %156 = vmatpush1.msra.mxu0 %v128
  %157 = vmatprep.subr.mxu0 0.0
  %158 = vmatpush1.msra.mxu0 %v129
  %159 = vmatprep.subr.mxu0 0.0
  %160 = vmatpush1.msra.mxu0 %v130
  %161 = vmatprep.subr.mxu0 0.0
  %162 = vmatpush1.msra.mxu0 0.0
  %163 = vmatprep.subr.mxu0 0.0
  %164 = vmatpush1.msra.mxu0 0.0
  %165 = vmatprep.subr.mxu0 0.0
  %166 = vmatpush1.msra.mxu0 0.0
  %167 = vmatprep.subr.mxu0 0.0
  %168 = vmatpush1.msra.mxu0 0.0
  %169 = vmatprep.subr.mxu0 0.0
  %170 = vmatpush1.msra.mxu0 0.0
  %171 = vmatprep.subr.mxu0 0.0
  %172 = vmatpush1.msra.mxu0 0.0
  %173 = vmatprep.subr.mxu0 0.0
  %174 = vmatpush1.msra.mxu0 0.0
  %175 = vmatprep.subr.mxu0 0.0
  %176 = vmatpush1.msra.mxu0 0.0
  %177 = vmatprep.subr.mxu0 0.0
  %178 = vmatpush1.msra.mxu0 0.0
  %179 = vmatprep.subr.mxu0 0.0
  %180 = vmatpush1.msra.mxu0 0.0
  %181 = vmatprep.subr.mxu0 0.0
  %182 = vmatpush1.msra.mxu0 0.0
  %183 = vmatprep.subr.mxu0 0.0
  %184 = vmatpush1.msra.mxu0 0.0
  %185 = vmatprep.subr.mxu0 0.0
  %186 = vmatpush1.msra.mxu0 0.0
  %187 = vmatprep.subr.mxu0 0.0
  %188 = vmatpush1.msra.mxu0 0.0
  %189 = vmatprep.subr.mxu0 0.0
  %190 = vmatpush1.msra.mxu0 0.0
  %191 = vmatprep.subr.mxu0 0.0
  %192 = vmatpush1.msra.mxu0 0.0
  %193 = vmatprep.subr.mxu0 0.0
  %194 = vmatpush1.msra.mxu0 0.0
  %195 = vmatprep.subr.mxu0 0.0
  %196 = vmatpush1.msra.mxu0 0.0
  %197 = vmatprep.subr.mxu0 0.0
  %198 = vmatpush1.msra.mxu0 0.0
  %199 = vmatprep.subr.mxu0 0.0
  %200 = vmatpush1.msra.mxu0 0.0
  %201 = vmatprep.subr.mxu0 0.0
  %202 = vmatpush1.msra.mxu0 0.0
  %203 = vmatprep.subr.mxu0 0.0
  %204 = vmatpush1.msra.mxu0 0.0
  %205 = vmatprep.subr.mxu0 0.0
  %206 = vmatpush1.msra.mxu0 0.0
  %207 = vmatprep.subr.mxu0 0.0
  %208 = vmatpush1.msra.mxu0 0.0
  %209 = vmatprep.mubr.f32.mxu0 0.0
  %210 = vmatmul.mubr.f32.gmra.mrb[0].mxu0 %v140
  %v211 = vpop.f32.mrb[0].mxu0
  %v212 = vadd.f32 %v136, %v211
  %v213 = vpop.f32.mrb[0].mxu0
  %214 = vmatprep.mubr.f32.mxu0 0.0
  %215 = vmatmul.mubr.f32.gmra.mrb[0].mxu0 %v143
  %v216 = vpop.f32.mrb[0].mxu0
  %v217 = vadd.f32 %v136, %v216
  %v218 = vpop.f32.mrb[0].mxu0
  %219 = vdwg.mxu0
  %v220 = vadd.f32 %v212, %v26
  %v221 = vadd.f32 %v217, %v27
  %v222 = vld [vmem:[%s5] sm:$0x1]
  %v223 = vld [vmem:[%s6] sm:$0x1]
  %v224 = vsel %vm39, %v220, 0.0
  %225 = vadd.xlane.f32.xlu0 %v224
  %v226 = vpop.xlane.xlu0 %225
  %v227 = vsel %vm39, %v221, 0.0
  %228 = vadd.xlane.f32.xlu0 %v227
  %v229 = vpop.xlane.xlu0 %228
  %v230 = vrcp.pop 32.0
  %v231 = vmul.f32 %v226, %v230
  %v232 = vmul.f32 %v229, %v230
  %v233 = vsub.f32 %v220, %v231
  %v234 = vsub.f32 %v221, %v232
  %v235 = vmul.f32 %v233, %v233
  %v236 = vmul.f32 %v234, %v234
  %v237 = vsel %vm39, %v235, 0.0
  %238 = vadd.xlane.f32.xlu0 %v237
  %v239 = vpop.xlane.xlu0 %238
  %v240 = vsel %vm39, %v236, 0.0
  %241 = vadd.xlane.f32.xlu0 %v240
  %v242 = vpop.xlane.xlu0 %241
  %v243 = vmul.f32 %v239, %v230
  %v244 = vmul.f32 %v242, %v230
  %v245 = vadd.f32 %v243, 1e-12
  %v246 = vadd.f32 %v244, 1e-12
  %v247 = vrsqrt.pop %v245
  %v248 = vrsqrt.pop %v246
  %v249 = vmul.f32 %v233, %v247
  %v250 = vmul.f32 %v234, %v248
  %v252 = vlaneseq
  %v253 = vshrl.u32 %v252, 7
  %v254 = vsub.s32 0, %v253
  %v255 = vrot.slane %v222, %v254
  %v257 = vmul.f32 %v249, %v255
  %v258 = vmul.f32 %v250, %v255
  %v260 = vlaneseq
  %v261 = vshrl.u32 %v260, 7
  %v262 = vsub.s32 0, %v261
  %v263 = vrot.slane %v223, %v262
  %v265 = vadd.f32 %v257, %v263
  %v266 = vadd.f32 %v258, %v263
  %267 = vst.msk [vmem:[%s7] sm:$0xff] %vm39, %v265
  %268 = vst.msk [vmem:[%s7 + $0x8] sm:$0xff] %vm39, %v266
  // Predicated region
  $region30: #{transformer_forward.12} parent=0 // pred_check
    _
  $region31: #{transformer_forward.12} parent=0 // pred_check_branch
    %270 = sbr.rel (0) target = $region33
  $region32: #{transformer_forward.12} parent=0 // pred_region
    _
  $region33: #{transformer_forward.12} parent=0 // pred_fallthru
    _
  // Predicated region
  $region34: #{transformer_forward.12} parent=0 // pred_check
    _
  $region35: #{transformer_forward.12} parent=0 // pred_check_branch
    %272 = sbr.rel (0) target = $region37
  $region36: #{transformer_forward.12} parent=0 // pred_region
    _
  $region37: #{transformer_forward.12} parent=0 // pred_fallthru
    _

// kernel: transformer_forward.21
$region0: #{transformer_forward.21}
  #allocation0 [shape = 'u32[]', space=smem, size = 0x4, offset = 0x4, fixed_abs, tag = 'smem constant byte address 0x4 - core index']
  #allocation1 [shape = 'u32[144,128]{1,0:T(1,128)}', space=vmem, size = 0x12000, scoped, tag = 'internal scratch']
  #allocation2 [shape = 'f32[16,32]{1,0:T(8,128)}', space=vmem, size = 0x2000, scoped, tag = 'scratch operand']
  %s0 = inlined_call_operand.vmem [shape: f32[16,32], index: 0, kind: input, shape index: {}]
  %s1 = inlined_call_operand.vmem [shape: f32[32,32], index: 1, kind: input, shape index: {}]
  %s2 = inlined_call_operand.vmem [shape: f32[1,32], index: 2, kind: input, shape index: {}]
  %s3 = inlined_call_operand.hbm [shape: f32[16,32], index: 3, kind: output, shape index: {}]
  %s4 = sld [smem:[#allocation0]]
  $region30: #{transformer_forward.21} parent=0
    _
  %s6 = ssub.s32 1, %s4
  %s7 = scalar_select 0, %s6, %s4
  $region1: #{transformer_forward.21} parent=0
    #allocation3 [shape = 'u8[8192]{0}', space=vmem, size = 0x2000, scoped, tag = 'output window, operand 0, single buffered']
    #allocation4 [shape = 's32[1]{0}', space=sflag, size = 0x4, scoped, tag = 'scoped memory for transformer_forward.21']
    %8 = vsyncpa [#allocation4], 0
    // Predicated region
    $region2: #{transformer_forward.21} parent=1 // pred_check
      _
    $region3: #{transformer_forward.21} parent=1 // pred_check_branch
      %10 = sbr.rel (0) target = $region5
    $region4: #{transformer_forward.21} parent=1 // pred_region
      _
    $region5: #{transformer_forward.21} parent=1 // pred_fallthru
      _
    // Predicated region
    $region6: #{transformer_forward.21} parent=1 // pred_check
      _
    $region7: #{transformer_forward.21} parent=1 // pred_check_branch
      %12 = sbr.rel (0) target = $region9
    $region8: #{transformer_forward.21} parent=1 // pred_region
      _
    $region9: #{transformer_forward.21} parent=1 // pred_fallthru
      _
    // Predicated region
    $region10: #{transformer_forward.21} parent=1 // pred_check
      _
    $region11: #{transformer_forward.21} parent=1 // pred_check_branch
      %14 = sbr.rel (0) target = $region13
    $region12: #{transformer_forward.21} parent=1 // pred_region
      _
    $region13: #{transformer_forward.21} parent=1 // pred_fallthru
      _
    %p15 = scmp.eq.s32.totalorder 0, 0
    // Predicated region
    $region14: #{transformer_forward.21} parent=1 // pred_check
      %p16 = pneg %p15
    $region15: #{transformer_forward.21} parent=1 // pred_check_branch
      %18 = sbr.rel (%p16) target = $region17
    $region16: #{transformer_forward.21} parent=1 // pred_region
      %vm19 = vcmask 261120
      %20 = vst.msk [vmem:[#allocation2] sm:$0xff] %vm19, 0.0
      %21 = vst.msk [vmem:[#allocation2 + $0x8] sm:$0xff] %vm19, 0.0
    $region17: #{transformer_forward.21} parent=1 // pred_fallthru
      _
    %v22 = vld [vmem:[#allocation2] sm:$0xff]
    %v23 = vld [vmem:[#allocation2 + $0x8] sm:$0xff]
    %v24 = vld [vmem:[%s0] sm:$0xff]
    %v25 = vld [vmem:[%s0 + $0x8] sm:$0xff]
    %v26 = vld [vmem:[%s1] sm:$0xff]
    %v27 = vld [vmem:[%s1 + $0x8] sm:$0xff]
    %v28 = vld [vmem:[%s1 + $0x10] sm:$0xff]
    %v29 = vld [vmem:[%s1 + $0x18] sm:$0xff]
    %vm30 = vcmask 261120
    %v32 = vsel %vm30, %v24, 0
    %v35 = vsel %vm30, %v25, 0
    %37 = vmatprep.subr.mxu0 0.0
    %38 = vmatpush1.msra.mxu0 %v26
    %39 = vmatprep.subr.mxu0 0.0
    %40 = vmatpush1.msra.mxu0 %v27
    %41 = vmatprep.subr.mxu0 0.0
    %42 = vmatpush1.msra.mxu0 %v28
    %43 = vmatprep.subr.mxu0 0.0
    %44 = vmatpush1.msra.mxu0 %v29
    %45 = vmatprep.subr.mxu0 0.0
    %46 = vmatpush1.msra.mxu0 0.0
    %47 = vmatprep.subr.mxu0 0.0
    %48 = vmatpush1.msra.mxu0 0.0
    %49 = vmatprep.subr.mxu0 0.0
    %50 = vmatpush1.msra.mxu0 0.0
    %51 = vmatprep.subr.mxu0 0.0
    %52 = vmatpush1.msra.mxu0 0.0
    %53 = vmatprep.subr.mxu0 0.0
    %54 = vmatpush1.msra.mxu0 0.0
    %55 = vmatprep.subr.mxu0 0.0
    %56 = vmatpush1.msra.mxu0 0.0
    %57 = vmatprep.subr.mxu0 0.0
    %58 = vmatpush1.msra.mxu0 0.0
    %59 = vmatprep.subr.mxu0 0.0
    %60 = vmatpush1.msra.mxu0 0.0
    %61 = vmatprep.subr.mxu0 0.0
    %62 = vmatpush1.msra.mxu0 0.0
    %63 = vmatprep.subr.mxu0 0.0
    %64 = vmatpush1.msra.mxu0 0.0
    %65 = vmatprep.subr.mxu0 0.0
    %66 = vmatpush1.msra.mxu0 0.0
    %67 = vmatprep.subr.mxu0 0.0
    %68 = vmatpush1.msra.mxu0 0.0
    %69 = vmatprep.subr.mxu0 0.0
    %70 = vmatpush1.msra.mxu0 0.0
    %71 = vmatprep.subr.mxu0 0.0
    %72 = vmatpush1.msra.mxu0 0.0
    %73 = vmatprep.subr.mxu0 0.0
    %74 = vmatpush1.msra.mxu0 0.0
    %75 = vmatprep.subr.mxu0 0.0
    %76 = vmatpush1.msra.mxu0 0.0
    %77 = vmatprep.subr.mxu0 0.0
    %78 = vmatpush1.msra.mxu0 0.0
    %79 = vmatprep.subr.mxu0 0.0
    %80 = vmatpush1.msra.mxu0 0.0
    %81 = vmatprep.subr.mxu0 0.0
    %82 = vmatpush1.msra.mxu0 0.0
    %83 = vmatprep.subr.mxu0 0.0
    %84 = vmatpush1.msra.mxu0 0.0
    %85 = vmatprep.subr.mxu0 0.0
    %86 = vmatpush1.msra.mxu0 0.0
    %87 = vmatprep.subr.mxu0 0.0
    %88 = vmatpush1.msra.mxu0 0.0
    %89 = vmatprep.subr.mxu0 0.0
    %90 = vmatpush1.msra.mxu0 0.0
    %91 = vmatprep.subr.mxu0 0.0
    %92 = vmatpush1.msra.mxu0 0.0
    %93 = vmatprep.subr.mxu0 0.0
    %94 = vmatpush1.msra.mxu0 0.0
    %95 = vmatprep.subr.mxu0 0.0
    %96 = vmatpush1.msra.mxu0 0.0
    %97 = vmatprep.subr.mxu0 0.0
    %98 = vmatpush1.msra.mxu0 0.0
    %99 = vmatprep.subr.mxu0 0.0
    %100 = vmatpush1.msra.mxu0 0.0
    %101 = vmatprep.mubr.f32.mxu0 0.0
    %102 = vmatmul.mubr.f32.gmra.mrb[0].mxu0 %v32
    %v103 = vpop.f32.mrb[0].mxu0
    %v104 = vadd.f32 0.0, %v103
    %v105 = vpop.f32.mrb[0].mxu0
    %106 = vmatprep.mubr.f32.mxu0 0.0
    %107 = vmatmul.mubr.f32.gmra.mrb[0].mxu0 %v35
    %v108 = vpop.f32.mrb[0].mxu0
    %v109 = vadd.f32 0.0, %v108
    %v110 = vpop.f32.mrb[0].mxu0
    %111 = vdwg.mxu0
    %v112 = vadd.f32 %v22, %v104
    %v113 = vadd.f32 %v23, %v109
    %114 = vst.msk [vmem:[#allocation2] sm:$0xff] %vm30, %v112
    %115 = vst.msk [vmem:[#allocation2 + $0x8] sm:$0xff] %vm30, %v113
    // Predicated region
    $region18: #{transformer_forward.21} parent=1 // pred_check
      %p116 = pneg %p15
    $region19: #{transformer_forward.21} parent=1 // pred_check_branch
      %118 = sbr.rel (%p116) target = $region21
    $region20: #{transformer_forward.21} parent=1 // pred_region
      %v119 = vld [vmem:[#allocation2] sm:$0xff]
      %v120 = vld [vmem:[#allocation2 + $0x8] sm:$0xff]
      %v121 = vld [vmem:[%s2] sm:$0x1]
      %v123 = vlaneseq
      %v124 = vshrl.u32 %v123, 7
      %v125 = vsub.s32 0, %v124
      %v126 = vrot.slane %v121, %v125
      %v128 = vadd.f32 %v119, %v126
      %v129 = vadd.f32 %v120, %v126
      %130 = vst.msk [vmem:[#allocation3] sm:$0xff] %vm30, %v128
      %131 = vst.msk [vmem:[#allocation3 + $0x8] sm:$0xff] %vm30, %v129
    $region21: #{transformer_forward.21} parent=1 // pred_fallthru
      _
    // Predicated region
    $region22: #{transformer_forward.21} parent=1 // pred_check
      _
    $region23: #{transformer_forward.21} parent=1 // pred_check_branch
      %133 = sbr.rel (0) target = $region25
    $region24: #{transformer_forward.21} parent=1 // pred_region
      %s135 = ssub.s32 256, 256
      %136 = vsyncadd [#allocation4], %s135
      %s137 = sshll.u32 [#allocation3], 4
      %s138 = int_to_ptr.vmem [resolvable:$true] %s137
      %143 = dma.vmem_to_hbm [thread:$0]  %s138, 256, %s3, [#allocation4], 128, 128, 8
    $region25: #{transformer_forward.21} parent=1 // pred_fallthru
      _
    // Predicated region
    $region26: #{transformer_forward.21} parent=1 // pred_check
      _
    $region27: #{transformer_forward.21} parent=1 // pred_check_branch
      %145 = sbr.rel (0) target = $region29
    $region28: #{transformer_forward.21} parent=1 // pred_region
      %146 = dma.done [#allocation4], 256
    $region29: #{transformer_forward.21} parent=1 // pred_fallthru
      _
    %147 = vsyncpa [#allocation4], 1

// kernel: transformer_forward.11
$region0: #{transformer_forward.11}
  #allocation0 [shape = 'u32[]', space=smem, size = 0x4, offset = 0x4, fixed_abs, tag = 'smem constant byte address 0x4 - core index']
  #allocation1 [shape = 'u32[144,128]{1,0:T(1,128)}', space=vmem, size = 0x12000, scoped, tag = 'internal scratch']
  %s0 = inlined_call_operand.vmem [shape: f32[2,8,32], index: 0, kind: input, shape index: {}, may-alias: {0,1,2}]
  %s1 = inlined_call_operand.vmem [shape: f32[2,8,32], index: 1, kind: input, shape index: {}, may-alias: {0,1,2}]
  %s2 = inlined_call_operand.vmem [shape: f32[2,8,32], index: 2, kind: input, shape index: {}, may-alias: {0,1,2}]
  %s3 = inlined_call_operand.vmem [shape: f32[2,8,1], index: 3, kind: input, shape index: {}]
  %s4 = inlined_call_operand.vmem [shape: f32[2,1,8], index: 4, kind: input, shape index: {}]
  %s5 = inlined_call_operand.vmem [shape: f32[32,32], index: 5, kind: input, shape index: {}]
  %s6 = inlined_call_operand.vmem [shape: f32[1,32], index: 6, kind: input, shape index: {}]
  %s7 = inlined_call_operand.vmem [shape: f32[32,32], index: 7, kind: input, shape index: {}]
  %s8 = inlined_call_operand.vmem [shape: f32[1,32], index: 8, kind: input, shape index: {}]
  %s9 = inlined_call_operand.vmem [shape: f32[32,32], index: 9, kind: input, shape index: {}]
  %s10 = inlined_call_operand.vmem [shape: f32[1,32], index: 10, kind: input, shape index: {}]
  %s11 = inlined_call_operand.vmem [shape: f32[32,32], index: 11, kind: input, shape index: {}]
  %s12 = inlined_call_operand.vmem [shape: f32[1,32], index: 12, kind: input, shape index: {}]
  %s13 = inlined_call_operand.vmem [shape: f32[1,32], index: 13, kind: input, shape index: {}]
  %s14 = inlined_call_operand.vmem [shape: f32[1,32], index: 14, kind: input, shape index: {}]
  %s15 = inlined_call_operand.vmem [shape: f32[2,8,32], index: 15, kind: output, shape index: {}]
  %s16 = sld [smem:[#allocation0]]
  $region93: #{transformer_forward.11} parent=0
    _
  %s18 = ssub.s32 1, %s16
  %s19 = scalar_select 0, %s18, %s16
  loop: start=0, step=1, limit=4
  $region2: #{transformer_forward.11} parent=0 // loop_pre_header
    _
  $region3: #{transformer_forward.11} parent=0 // loop_header
    %s21 = sphi 0, %s25
    %p22 = scmp.ge.s32.totalorder %s21, 4
    %s31 = sphi 0, %s33
    %s34 = sphi 0, %s31
    %s35 = sphi 0, %s34
    %s51 = sphi 0, %s35
    %s57 = sphi 0, %s59
    %s60 = sphi 0, %s57
    %s61 = sphi 0, %s60
    %s77 = sphi 0, %s61
    %s83 = sphi 0, %s85
    %s86 = sphi 0, %s83
    %s87 = sphi 0, %s86
    %s103 = sphi 0, %s87
    %s109 = sphi 0, %s111
    %s112 = sphi 0, %s109
    %s113 = sphi 0, %s112
    %s129 = sphi 0, %s113
    %s135 = sphi 0, %s137
    %s138 = sphi 0, %s135
    %s139 = sphi 0, %s138
    %s155 = sphi 0, %s139
    %s159 = sphi 0, %s159
    %s161 = sphi 0, %s159
    %s162 = sphi 0, %s161
    %s176 = sphi 0, %s162
    %s180 = sphi 0, %s180
    %s182 = sphi 0, %s180
    %s183 = sphi 0, %s182
    %s197 = sphi 0, %s183
    %s201 = sphi 0, %s201
    %s203 = sphi 0, %s201
    %s204 = sphi 0, %s203
    %s218 = sphi 0, %s204
    %s222 = sphi 0, %s222
    %s224 = sphi 0, %s222
    %s225 = sphi 0, %s224
    %s239 = sphi 0, %s225
    %s243 = sphi 0, %s243
    %s245 = sphi 0, %s243
    %s246 = sphi 0, %s245
    %s260 = sphi 0, %s246
    %s264 = sphi 0, %s264
    %s266 = sphi 0, %s264
    %s267 = sphi 0, %s266
    %s281 = sphi 0, %s267
    %s285 = sphi 0, %s285
    %s287 = sphi 0, %s285
    %s288 = sphi 0, %s287
    %s302 = sphi 0, %s288
    %s306 = sphi 0, %s306
    %s308 = sphi 0, %s306
    %s309 = sphi 0, %s308
    %s323 = sphi 0, %s309
    %s327 = sphi 0, %s327
    %s329 = sphi 0, %s327
    %s330 = sphi 0, %s329
    %s344 = sphi 0, %s330
    %s348 = sphi 0, %s348
    %s350 = sphi 0, %s348
    %s351 = sphi 0, %s350
    %s365 = sphi 0, %s351
    %s371 = sphi 0, %s373
    %s374 = sphi 0, %s371
    %s375 = sphi 0, %s374
    %s391 = sphi 0, %s375
  $region4: #{transformer_forward.11} parent=0 // loop_header_branch
    %24 = sbr.rel (%p22) target = $region8
  $region5: #{transformer_forward.11} parent=0 // loop_body
    %s26 = ssub.s32 %s21, 1
    %s27 = ssub.s32 %s21, 2
    %s28 = sadd.s32 %s21, 1
    %s29 = ssub.s32 %s21, %s28
    %p30 = scmp.eq.s32.totalorder %s29, 0
    %s32 = sadd.s32 %s31, 1
    %s33 = scalar_select %p30, %s31, %s32
    %p36 = pneg %p30
    %p37 = scmp.eq.s32.totalorder %s21, 1
    %p38 = por %p36, %p37
    %p39 = scmp.ne.s32.totalorder %s31, %s34
    %p40 = scmp.eq.s32.totalorder %s21, 0
    %p41 = por %p39, %p40
    %p42 = scmp.ne.s32.totalorder %s31, %s34
    %p43 = scmp.eq.s32.totalorder %s26, 1
    %p44 = por %p42, %p43
    %p45 = scmp.ne.s32.totalorder %s34, %s35
    %p46 = scmp.eq.s32.totalorder %s26, 0
    %p47 = por %p45, %p46
    %p48 = scmp.ne.s32.totalorder %s34, %s35
    %p49 = scmp.eq.s32.totalorder %s27, 1
    %p50 = por %p48, %p49
    %p52 = scmp.ne.s32.totalorder %s35, %s51
    %p53 = scmp.eq.s32.totalorder %s27, 0
    %p54 = por %p52, %p53
    %s55 = ssub.s32 %s21, %s28
    %p56 = scmp.eq.s32.totalorder %s55, 0
    %s58 = sadd.s32 %s57, 1
    %s59 = scalar_select %p56, %s57, %s58
    %p62 = pneg %p56
    %p63 = scmp.eq.s32.totalorder %s21, 1
    %p64 = por %p62, %p63
    %p65 = scmp.ne.s32.totalorder %s57, %s60
    %p66 = scmp.eq.s32.totalorder %s21, 0
    %p67 = por %p65, %p66
    %p68 = scmp.ne.s32.totalorder %s57, %s60
    %p69 = scmp.eq.s32.totalorder %s26, 1
    %p70 = por %p68, %p69
    %p71 = scmp.ne.s32.totalorder %s60, %s61
    %p72 = scmp.eq.s32.totalorder %s26, 0
    %p73 = por %p71, %p72
    %p74 = scmp.ne.s32.totalorder %s60, %s61
    %p75 = scmp.eq.s32.totalorder %s27, 1
    %p76 = por %p74, %p75
    %p78 = scmp.ne.s32.totalorder %s61, %s77
    %p79 = scmp.eq.s32.totalorder %s27, 0
    %p80 = por %p78, %p79
    %s81 = ssub.s32 %s21, %s28
    %p82 = scmp.eq.s32.totalorder %s81, 0
    %s84 = sadd.s32 %s83, 1
    %s85 = scalar_select %p82, %s83, %s84
    %p88 = pneg %p82
    %p89 = scmp.eq.s32.totalorder %s21, 1
    %p90 = por %p88, %p89
    %p91 = scmp.ne.s32.totalorder %s83, %s86
    %p92 = scmp.eq.s32.totalorder %s21, 0
    %p93 = por %p91, %p92
    %p94 = scmp.ne.s32.totalorder %s83, %s86
    %p95 = scmp.eq.s32.totalorder %s26, 1
    %p96 = por %p94, %p95
    %p97 = scmp.ne.s32.totalorder %s86, %s87
    %p98 = scmp.eq.s32.totalorder %s26, 0
    %p99 = por %p97, %p98
    %p100 = scmp.ne.s32.totalorder %s86, %s87
    %p101 = scmp.eq.s32.totalorder %s27, 1
    %p102 = por %p100, %p101
    %p104 = scmp.ne.s32.totalorder %s87, %s103
    %p105 = scmp.eq.s32.totalorder %s27, 0
    %p106 = por %p104, %p105
    %s107 = ssub.s32 %s21, %s28
    %p108 = scmp.eq.s32.totalorder %s107, 0
    %s110 = sadd.s32 %s109, 1
    %s111 = scalar_select %p108, %s109, %s110
    %p114 = pneg %p108
    %p115 = scmp.eq.s32.totalorder %s21, 1
    %p116 = por %p114, %p115
    %p117 = scmp.ne.s32.totalorder %s109, %s112
    %p118 = scmp.eq.s32.totalorder %s21, 0
    %p119 = por %p117, %p118
    %p120 = scmp.ne.s32.totalorder %s109, %s112
    %p121 = scmp.eq.s32.totalorder %s26, 1
    %p122 = por %p120, %p121
    %p123 = scmp.ne.s32.totalorder %s112, %s113
    %p124 = scmp.eq.s32.totalorder %s26, 0
    %p125 = por %p123, %p124
    %p126 = scmp.ne.s32.totalorder %s112, %s113
    %p127 = scmp.eq.s32.totalorder %s27, 1
    %p128 = por %p126, %p127
    %p130 = scmp.ne.s32.totalorder %s113, %s129
    %p131 = scmp.eq.s32.totalorder %s27, 0
    %p132 = por %p130, %p131
    %s133 = ssub.s32 %s21, %s28
    %p134 = scmp.eq.s32.totalorder %s133, 0
    %s136 = sadd.s32 %s135, 1
    %s137 = scalar_select %p134, %s135, %s136
    %p140 = pneg %p134
    %p141 = scmp.eq.s32.totalorder %s21, 1
    %p142 = por %p140, %p141
    %p143 = scmp.ne.s32.totalorder %s135, %s138
    %p144 = scmp.eq.s32.totalorder %s21, 0
    %p145 = por %p143, %p144
    %p146 = scmp.ne.s32.totalorder %s135, %s138
    %p147 = scmp.eq.s32.totalorder %s26, 1
    %p148 = por %p146, %p147
    %p149 = scmp.ne.s32.totalorder %s138, %s139
    %p150 = scmp.eq.s32.totalorder %s26, 0
    %p151 = por %p149, %p150
    %p152 = scmp.ne.s32.totalorder %s138, %s139
    %p153 = scmp.eq.s32.totalorder %s27, 1
    %p154 = por %p152, %p153
    %p156 = scmp.ne.s32.totalorder %s139, %s155
    %p157 = scmp.eq.s32.totalorder %s27, 0
    %p158 = por %p156, %p157
    %s160 = sadd.s32 %s159, 1
    %p163 = scmp.eq.s32.totalorder %s21, 1
    %p164 = scmp.ne.s32.totalorder %s159, %s161
    %p165 = scmp.eq.s32.totalorder %s21, 0
    %p166 = por %p164, %p165
    %p167 = scmp.ne.s32.totalorder %s159, %s161
    %p168 = scmp.eq.s32.totalorder %s26, 1
    %p169 = por %p167, %p168
    %p170 = scmp.ne.s32.totalorder %s161, %s162
    %p171 = scmp.eq.s32.totalorder %s26, 0
    %p172 = por %p170, %p171
    %p173 = scmp.ne.s32.totalorder %s161, %s162
    %p174 = scmp.eq.s32.totalorder %s27, 1
    %p175 = por %p173, %p174
    %p177 = scmp.ne.s32.totalorder %s162, %s176
    %p178 = scmp.eq.s32.totalorder %s27, 0
    %p179 = por %p177, %p178
    %s181 = sadd.s32 %s180, 1
    %p184 = scmp.eq.s32.totalorder %s21, 1
    %p185 = scmp.ne.s32.totalorder %s180, %s182
    %p186 = scmp.eq.s32.totalorder %s21, 0
    %p187 = por %p185, %p186
    %p188 = scmp.ne.s32.totalorder %s180, %s182
    %p189 = scmp.eq.s32.totalorder %s26, 1
    %p190 = por %p188, %p189
    %p191 = scmp.ne.s32.totalorder %s182, %s183
    %p192 = scmp.eq.s32.totalorder %s26, 0
    %p193 = por %p191, %p192
    %p194 = scmp.ne.s32.totalorder %s182, %s183
    %p195 = scmp.eq.s32.totalorder %s27, 1
    %p196 = por %p194, %p195
    %p198 = scmp.ne.s32.totalorder %s183, %s197
    %p199 = scmp.eq.s32.totalorder %s27, 0
    %p200 = por %p198, %p199
    %s202 = sadd.s32 %s201, 1
    %p205 = scmp.eq.s32.totalorder %s21, 1
    %p206 = scmp.ne.s32.totalorder %s201, %s203
    %p207 = scmp.eq.s32.totalorder %s21, 0
    %p208 = por %p206, %p207
    %p209 = scmp.ne.s32.totalorder %s201, %s203
    %p210 = scmp.eq.s32.totalorder %s26, 1
    %p211 = por %p209, %p210
    %p212 = scmp.ne.s32.totalorder %s203, %s204
    %p213 = scmp.eq.s32.totalorder %s26, 0
    %p214 = por %p212, %p213
    %p215 = scmp.ne.s32.totalorder %s203, %s204
    %p216 = scmp.eq.s32.totalorder %s27, 1
    %p217 = por %p215, %p216
    %p219 = scmp.ne.s32.totalorder %s204, %s218
    %p220 = scmp.eq.s32.totalorder %s27, 0
    %p221 = por %p219, %p220
    %s223 = sadd.s32 %s222, 1
    %p226 = scmp.eq.s32.totalorder %s21, 1
    %p227 = scmp.ne.s32.totalorder %s222, %s224
    %p228 = scmp.eq.s32.totalorder %s21, 0
    %p229 = por %p227, %p228
    %p230 = scmp.ne.s32.totalorder %s222, %s224
    %p231 = scmp.eq.s32.totalorder %s26, 1
    %p232 = por %p230, %p231
    %p233 = scmp.ne.s32.totalorder %s224, %s225
    %p234 = scmp.eq.s32.totalorder %s26, 0
    %p235 = por %p233, %p234
    %p236 = scmp.ne.s32.totalorder %s224, %s225
    %p237 = scmp.eq.s32.totalorder %s27, 1
    %p238 = por %p236, %p237
    %p240 = scmp.ne.s32.totalorder %s225, %s239
    %p241 = scmp.eq.s32.totalorder %s27, 0
    %p242 = por %p240, %p241
    %s244 = sadd.s32 %s243, 1
    %p247 = scmp.eq.s32.totalorder %s21, 1
    %p248 = scmp.ne.s32.totalorder %s243, %s245
    %p249 = scmp.eq.s32.totalorder %s21, 0
    %p250 = por %p248, %p249
    %p251 = scmp.ne.s32.totalorder %s243, %s245
    %p252 = scmp.eq.s32.totalorder %s26, 1
    %p253 = por %p251, %p252
    %p254 = scmp.ne.s32.totalorder %s245, %s246
    %p255 = scmp.eq.s32.totalorder %s26, 0
    %p256 = por %p254, %p255
    %p257 = scmp.ne.s32.totalorder %s245, %s246
    %p258 = scmp.eq.s32.totalorder %s27, 1
    %p259 = por %p257, %p258
    %p261 = scmp.ne.s32.totalorder %s246, %s260
    %p262 = scmp.eq.s32.totalorder %s27, 0
    %p263 = por %p261, %p262
    %s265 = sadd.s32 %s264, 1
    %p268 = scmp.eq.s32.totalorder %s21, 1
    %p269 = scmp.ne.s32.totalorder %s264, %s266
    %p270 = scmp.eq.s32.totalorder %s21, 0
    %p271 = por %p269, %p270
    %p272 = scmp.ne.s32.totalorder %s264, %s266
    %p273 = scmp.eq.s32.totalorder %s26, 1
    %p274 = por %p272, %p273
    %p275 = scmp.ne.s32.totalorder %s266, %s267
    %p276 = scmp.eq.s32.totalorder %s26, 0
    %p277 = por %p275, %p276
    %p278 = scmp.ne.s32.totalorder %s266, %s267
    %p279 = scmp.eq.s32.totalorder %s27, 1
    %p280 = por %p278, %p279
    %p282 = scmp.ne.s32.totalorder %s267, %s281
    %p283 = scmp.eq.s32.totalorder %s27, 0
    %p284 = por %p282, %p283
    %s286 = sadd.s32 %s285, 1
    %p289 = scmp.eq.s32.totalorder %s21, 1
    %p290 = scmp.ne.s32.totalorder %s285, %s287
    %p291 = scmp.eq.s32.totalorder %s21, 0
    %p292 = por %p290, %p291
    %p293 = scmp.ne.s32.totalorder %s285, %s287
    %p294 = scmp.eq.s32.totalorder %s26, 1
    %p295 = por %p293, %p294
    %p296 = scmp.ne.s32.totalorder %s287, %s288
    %p297 = scmp.eq.s32.totalorder %s26, 0
    %p298 = por %p296, %p297
    %p299 = scmp.ne.s32.totalorder %s287, %s288
    %p300 = scmp.eq.s32.totalorder %s27, 1
    %p301 = por %p299, %p300
    %p303 = scmp.ne.s32.totalorder %s288, %s302
    %p304 = scmp.eq.s32.totalorder %s27, 0
    %p305 = por %p303, %p304
    %s307 = sadd.s32 %s306, 1
    %p310 = scmp.eq.s32.totalorder %s21, 1
    %p311 = scmp.ne.s32.totalorder %s306, %s308
    %p312 = scmp.eq.s32.totalorder %s21, 0
    %p313 = por %p311, %p312
    %p314 = scmp.ne.s32.totalorder %s306, %s308
    %p315 = scmp.eq.s32.totalorder %s26, 1
    %p316 = por %p314, %p315
    %p317 = scmp.ne.s32.totalorder %s308, %s309
    %p318 = scmp.eq.s32.totalorder %s26, 0
    %p319 = por %p317, %p318
    %p320 = scmp.ne.s32.totalorder %s308, %s309
    %p321 = scmp.eq.s32.totalorder %s27, 1
    %p322 = por %p320, %p321
    %p324 = scmp.ne.s32.totalorder %s309, %s323
    %p325 = scmp.eq.s32.totalorder %s27, 0
    %p326 = por %p324, %p325
    %s328 = sadd.s32 %s327, 1
    %p331 = scmp.eq.s32.totalorder %s21, 1
    %p332 = scmp.ne.s32.totalorder %s327, %s329
    %p333 = scmp.eq.s32.totalorder %s21, 0
    %p334 = por %p332, %p333
    %p335 = scmp.ne.s32.totalorder %s327, %s329
    %p336 = scmp.eq.s32.totalorder %s26, 1
    %p337 = por %p335, %p336
    %p338 = scmp.ne.s32.totalorder %s329, %s330
    %p339 = scmp.eq.s32.totalorder %s26, 0
    %p340 = por %p338, %p339
    %p341 = scmp.ne.s32.totalorder %s329, %s330
    %p342 = scmp.eq.s32.totalorder %s27, 1
    %p343 = por %p341, %p342
    %p345 = scmp.ne.s32.totalorder %s330, %s344
    %p346 = scmp.eq.s32.totalorder %s27, 0
    %p347 = por %p345, %p346
    %s349 = sadd.s32 %s348, 1
    %p352 = scmp.eq.s32.totalorder %s21, 1
    %p353 = scmp.ne.s32.totalorder %s348, %s350
    %p354 = scmp.eq.s32.totalorder %s21, 0
    %p355 = por %p353, %p354
    %p356 = scmp.ne.s32.totalorder %s348, %s350
    %p357 = scmp.eq.s32.totalorder %s26, 1
    %p358 = por %p356, %p357
    %p359 = scmp.ne.s32.totalorder %s350, %s351
    %p360 = scmp.eq.s32.totalorder %s26, 0
    %p361 = por %p359, %p360
    %p362 = scmp.ne.s32.totalorder %s350, %s351
    %p363 = scmp.eq.s32.totalorder %s27, 1
    %p364 = por %p362, %p363
    %p366 = scmp.ne.s32.totalorder %s351, %s365
    %p367 = scmp.eq.s32.totalorder %s27, 0
    %p368 = por %p366, %p367
    %s369 = ssub.s32 %s21, %s28
    %p370 = scmp.eq.s32.totalorder %s369, 0
    %s372 = sadd.s32 %s371, 1
    %s373 = scalar_select %p370, %s371, %s372
    %p376 = pneg %p370
    %p377 = scmp.eq.s32.totalorder %s21, 1
    %p378 = por %p376, %p377
    %p379 = scmp.ne.s32.totalorder %s371, %s374
    %p380 = scmp.eq.s32.totalorder %s21, 0
    %p381 = por %p379, %p380
    %p382 = scmp.ne.s32.totalorder %s371, %s374
    %p383 = scmp.eq.s32.totalorder %s26, 1
    %p384 = por %p382, %p383
    %p385 = scmp.ne.s32.totalorder %s374, %s375
    %p386 = scmp.eq.s32.totalorder %s26, 0
    %p387 = por %p385, %p386
    %p388 = scmp.ne.s32.totalorder %s374, %s375
    %p389 = scmp.eq.s32.totalorder %s27, 1
    %p390 = por %p388, %p389
    %p392 = scmp.ne.s32.totalorder %s375, %s391
    %p393 = scmp.eq.s32.totalorder %s27, 0
    %p394 = por %p392, %p393
    %p395 = scmp.le.s32.totalorder 1, %s21
    %p396 = scmp.lt.s32.totalorder %s21, 3
    %p397 = pnand %p395, %p396
    %p398 = pneg %p397
    // Predicated region
    $region9: #{transformer_forward.11} parent=5 // pred_check
      _
    $region10: #{transformer_forward.11} parent=5 // pred_check_branch
      %400 = sbr.rel (%p397) target = $region12
    $region11: #{transformer_forward.11} parent=5 // pred_region
      %s401 = ssub.s32 %s21, 1
      // Predicated region
      $region13: #{transformer_forward.11} parent=11 // pred_check
        %p402 = pneg %p172
      $region14: #{transformer_forward.11} parent=11 // pred_check_branch
        %404 = sbr.rel (%p402) target = $region16
      $region15: #{transformer_forward.11} parent=11 // pred_region
        _
      $region16: #{transformer_forward.11} parent=11 // pred_fallthru
        _
      // Predicated region
      $region17: #{transformer_forward.11} parent=11 // pred_check
        %p405 = pneg %p193
      $region18: #{transformer_forward.11} parent=11 // pred_check_branch
        %407 = sbr.rel (%p405) target = $region20
      $region19: #{transformer_forward.11} parent=11 // pred_region
        _
      $region20: #{transformer_forward.11} parent=11 // pred_fallthru
        _
      // Predicated region
      $region21: #{transformer_forward.11} parent=11 // pred_check
        %p408 = pneg %p214
      $region22: #{transformer_forward.11} parent=11 // pred_check_branch
        %410 = sbr.rel (%p408) target = $region24
      $region23: #{transformer_forward.11} parent=11 // pred_region
        _
      $region24: #{transformer_forward.11} parent=11 // pred_fallthru
        _
      // Predicated region
      $region25: #{transformer_forward.11} parent=11 // pred_check
        %p411 = pneg %p235
      $region26: #{transformer_forward.11} parent=11 // pred_check_branch
        %413 = sbr.rel (%p411) target = $region28
      $region27: #{transformer_forward.11} parent=11 // pred_region
        _
      $region28: #{transformer_forward.11} parent=11 // pred_fallthru
        _
      // Predicated region
      $region29: #{transformer_forward.11} parent=11 // pred_check
        %p414 = pneg %p256
      $region30: #{transformer_forward.11} parent=11 // pred_check_branch
        %416 = sbr.rel (%p414) target = $region32
      $region31: #{transformer_forward.11} parent=11 // pred_region
        _
      $region32: #{transformer_forward.11} parent=11 // pred_fallthru
        _
      // Predicated region
      $region33: #{transformer_forward.11} parent=11 // pred_check
        %p417 = pneg %p277
      $region34: #{transformer_forward.11} parent=11 // pred_check_branch
        %419 = sbr.rel (%p417) target = $region36
      $region35: #{transformer_forward.11} parent=11 // pred_region
        _
      $region36: #{transformer_forward.11} parent=11 // pred_fallthru
        _
      // Predicated region
      $region37: #{transformer_forward.11} parent=11 // pred_check
        %p420 = pneg %p298
      $region38: #{transformer_forward.11} parent=11 // pred_check_branch
        %422 = sbr.rel (%p420) target = $region40
      $region39: #{transformer_forward.11} parent=11 // pred_region
        _
      $region40: #{transformer_forward.11} parent=11 // pred_fallthru
        _
      // Predicated region
      $region41: #{transformer_forward.11} parent=11 // pred_check
        %p423 = pneg %p319
      $region42: #{transformer_forward.11} parent=11 // pred_check_branch
        %425 = sbr.rel (%p423) target = $region44
      $region43: #{transformer_forward.11} parent=11 // pred_region
        _
      $region44: #{transformer_forward.11} parent=11 // pred_fallthru
        _
      // Predicated region
      $region45: #{transformer_forward.11} parent=11 // pred_check
        %p426 = pneg %p340
      $region46: #{transformer_forward.11} parent=11 // pred_check_branch
        %428 = sbr.rel (%p426) target = $region48
      $region47: #{transformer_forward.11} parent=11 // pred_region
        _
      $region48: #{transformer_forward.11} parent=11 // pred_fallthru
        _
      // Predicated region
      $region49: #{transformer_forward.11} parent=11 // pred_check
        %p429 = pneg %p361
      $region50: #{transformer_forward.11} parent=11 // pred_check_branch
        %431 = sbr.rel (%p429) target = $region52
      $region51: #{transformer_forward.11} parent=11 // pred_region
        _
      $region52: #{transformer_forward.11} parent=11 // pred_fallthru
        _
    $region12: #{transformer_forward.11} parent=5 // pred_fallthru
      _
    %p432 = scmp.lt.s32.totalorder %s21, 2
    // Predicated region
    $region53: #{transformer_forward.11} parent=5 // pred_check
      %p433 = pneg %p432
    $region54: #{transformer_forward.11} parent=5 // pred_check_branch
      %435 = sbr.rel (%p433) target = $region56
    $region55: #{transformer_forward.11} parent=5 // pred_region
      // Predicated region
      $region57: #{transformer_forward.11} parent=55 // pred_check
        %p436 = pneg %p41
      $region58: #{transformer_forward.11} parent=55 // pred_check_branch
        %438 = sbr.rel (%p436) target = $region60
      $region59: #{transformer_forward.11} parent=55 // pred_region
        %p439 = scmp.lt.s32.totalorder %s21, 1
        %s440 = scalar_select %p439, %s21, 1
        %s441 = smul.addr %s440, 8
        %s442 = scalar_lea.vmem %s0, %s441
      $region60: #{transformer_forward.11} parent=55 // pred_fallthru
        _
      // Predicated region
      $region61: #{transformer_forward.11} parent=55 // pred_check
        %p443 = pneg %p67
      $region62: #{transformer_forward.11} parent=55 // pred_check_branch
        %445 = sbr.rel (%p443) target = $region64
      $region63: #{transformer_forward.11} parent=55 // pred_region
        %p446 = scmp.lt.s32.totalorder %s21, 1
        %s447 = scalar_select %p446, %s21, 1
        %s448 = smul.addr %s447, 8
        %s449 = scalar_lea.vmem %s1, %s448
      $region64: #{transformer_forward.11} parent=55 // pred_fallthru
        _
      // Predicated region
      $region65: #{transformer_forward.11} parent=55 // pred_check
        %p450 = pneg %p93
      $region66: #{transformer_forward.11} parent=55 // pred_check_branch
        %452 = sbr.rel (%p450) target = $region68
      $region67: #{transformer_forward.11} parent=55 // pred_region
        %p453 = scmp.lt.s32.totalorder %s21, 1
        %s454 = scalar_select %p453, %s21, 1
        %s455 = smul.addr %s454, 8
        %s456 = scalar_lea.vmem %s2, %s455
      $region68: #{transformer_forward.11} parent=55 // pred_fallthru
        _
      // Predicated region
      $region69: #{transformer_forward.11} parent=55 // pred_check
        %p457 = pneg %p119
      $region70: #{transformer_forward.11} parent=55 // pred_check_branch
        %459 = sbr.rel (%p457) target = $region72
      $region71: #{transformer_forward.11} parent=55 // pred_region
        %p460 = scmp.lt.s32.totalorder %s21, 1
        %s461 = scalar_select %p460, %s21, 1
        %s462 = smul.addr %s461, 8
        %s463 = scalar_lea.vmem %s3, %s462
      $region72: #{transformer_forward.11} parent=55 // pred_fallthru
        _
      // Predicated region
      $region73: #{transformer_forward.11} parent=55 // pred_check
        %p464 = pneg %p145
      $region74: #{transformer_forward.11} parent=55 // pred_check_branch
        %466 = sbr.rel (%p464) target = $region76
      $region75: #{transformer_forward.11} parent=55 // pred_region
        %p467 = scmp.lt.s32.totalorder %s21, 1
        %s468 = scalar_select %p467, %s21, 1
        %s469 = scalar_lea.vmem %s4, %s468
      $region76: #{transformer_forward.11} parent=55 // pred_fallthru
        _
    $region56: #{transformer_forward.11} parent=5 // pred_fallthru
      _
    %p470 = scmp.le.s32.totalorder 1, %s21
    %p471 = scmp.lt.s32.totalorder %s21, 3
    %p472 = pnand %p470, %p471
    %p473 = pneg %p472
    // Predicated region
    $region77: #{transformer_forward.11} parent=5 // pred_check
      _
    $region78: #{transformer_forward.11} parent=5 // pred_check_branch
      %475 = sbr.rel (%p472) target = $region80
    $region79: #{transformer_forward.11} parent=5 // pred_region
      %s476 = ssub.s32 %s21, 1
      %p477 = scmp.lt.s32.totalorder %s26, 1
      %s478 = scalar_select %p477, %s26, 1
      %s479 = smul.addr %s478, 8
      %s480 = scalar_lea.vmem %s0, %s479
      %p481 = pneg %p47
      %p482 = pneg %p44
      %p483 = scmp.lt.s32.totalorder %s26, 1
      %s484 = scalar_select %p483, %s26, 1
      %s485 = smul.addr %s484, 8
      %s486 = scalar_lea.vmem %s1, %s485
      %p487 = pneg %p73
      %p488 = pneg %p70
      %p489 = scmp.lt.s32.totalorder %s26, 1
      %s490 = scalar_select %p489, %s26, 1
      %s491 = smul.addr %s490, 8
      %s492 = scalar_lea.vmem %s2, %s491
      %p493 = pneg %p99
      %p494 = pneg %p96
      %p495 = scmp.lt.s32.totalorder %s26, 1
      %s496 = scalar_select %p495, %s26, 1
      %s497 = smul.addr %s496, 8
      %s498 = scalar_lea.vmem %s3, %s497
      %p499 = pneg %p125
      %p500 = pneg %p122
      %p501 = scmp.lt.s32.totalorder %s26, 1
      %s502 = scalar_select %p501, %s26, 1
      %s503 = scalar_lea.vmem %s4, %s502
      %p504 = pneg %p151
      %p505 = pneg %p148
      %p506 = pneg %p172
      %p507 = pneg %p169
      %p508 = pneg %p193
      %p509 = pneg %p190
      %p510 = pneg %p214
      %p511 = pneg %p211
      %p512 = pneg %p235
      %p513 = pneg %p232
      %p514 = pneg %p256
      %p515 = pneg %p253
      %p516 = pneg %p277
      %p517 = pneg %p274
      %p518 = pneg %p298
      %p519 = pneg %p295
      %p520 = pneg %p319
      %p521 = pneg %p316
      %p522 = pneg %p340
      %p523 = pneg %p337
      %p524 = pneg %p361
      %p525 = pneg %p358
      %p526 = pneg %p387
      %p527 = pneg %p384
      %p528 = scmp.lt.s32.totalorder %s26, 1
      %s529 = scalar_select %p528, %s26, 1
      %s530 = smul.addr %s529, 8
      %s531 = scalar_lea.vmem %s15, %s530
      %p532 = scmp.lt.s32.totalorder %s26, 1
      %s533 = scalar_select %p532, %s26, 1
      %s534 = smul.addr %s533, 8
      %s535 = scalar_lea.vmem %s0, %s534
      %p536 = scmp.lt.s32.totalorder %s26, 1
      %s537 = scalar_select %p536, %s26, 1
      %s538 = smul.addr %s537, 8
      %s539 = scalar_lea.vmem %s1, %s538
      %p540 = scmp.lt.s32.totalorder %s26, 1
      %s541 = scalar_select %p540, %s26, 1
      %s542 = smul.addr %s541, 8
      %s543 = scalar_lea.vmem %s2, %s542
      %p544 = scmp.lt.s32.totalorder %s26, 1
      %s545 = scalar_select %p544, %s26, 1
      %s546 = smul.addr %s545, 8
      %s547 = scalar_lea.vmem %s3, %s546
      %p548 = scmp.lt.s32.totalorder %s26, 1
      %s549 = scalar_select %p548, %s26, 1
      %s550 = scalar_lea.vmem %s4, %s549
      %p551 = scmp.lt.s32.totalorder %s26, 1
      %s552 = scalar_select %p551, %s26, 1
      %s553 = smul.addr %s552, 8
      %s554 = scalar_lea.vmem %s15, %s553
      %v555 = vld [vmem:[%s535] sm:$0xff]
      %v556 = vld [vmem:[%s539] sm:$0xff]
      %v557 = vld [vmem:[%s543] sm:$0xff]
      %v558 = vld [vmem:[%s547] sm:$0xff]
      %v559 = vld [vmem:[%s550] sm:$0x1]
      %v560 = vld [vmem:[%s5] sm:$0xff]
      %v561 = vld [vmem:[%s5 + $0x8] sm:$0xff]
      %v562 = vld [vmem:[%s5 + $0x10] sm:$0xff]
      %v563 = vld [vmem:[%s5 + $0x18] sm:$0xff]
      %v564 = vld [vmem:[%s6] sm:$0x1]
      %v566 = vlaneseq
      %v567 = vshrl.u32 %v566, 7
      %v568 = vsub.s32 0, %v567
      %v569 = vrot.slane %v564, %v568
      %vm571 = vcmask 261120
      %v573 = vsel %vm571, %v555, 0
      %575 = vmatprep.subr.mxu0 0.0
      %576 = vmatpush1.msra.mxu0 %v560
      %577 = vmatprep.subr.mxu0 0.0
      %578 = vmatpush1.msra.mxu0 %v561
      %579 = vmatprep.subr.mxu0 0.0
      %580 = vmatpush1.msra.mxu0 %v562
      %581 = vmatprep.subr.mxu0 0.0
      %582 = vmatpush1.msra.mxu0 %v563
      %583 = vmatprep.subr.mxu0 0.0
      %584 = vmatpush1.msra.mxu0 0.0
      %585 = vmatprep.subr.mxu0 0.0
      %586 = vmatpush1.msra.mxu0 0.0
      %587 = vmatprep.subr.mxu0 0.0
      %588 = vmatpush1.msra.mxu0 0.0
      %589 = vmatprep.subr.mxu0 0.0
      %590 = vmatpush1.msra.mxu0 0.0
      %591 = vmatprep.subr.mxu0 0.0
      %592 = vmatpush1.msra.mxu0 0.0
      %593 = vmatprep.subr.mxu0 0.0
      %594 = vmatpush1.msra.mxu0 0.0
      %595 = vmatprep.subr.mxu0 0.0
      %596 = vmatpush1.msra.mxu0 0.0
      %597 = vmatprep.subr.mxu0 0.0
      %598 = vmatpush1.msra.mxu0 0.0
      %599 = vmatprep.subr.mxu0 0.0
      %600 = vmatpush1.msra.mxu0 0.0
      %601 = vmatprep.subr.mxu0 0.0
      %602 = vmatpush1.msra.mxu0 0.0
      %603 = vmatprep.subr.mxu0 0.0
      %604 = vmatpush1.msra.mxu0 0.0
      %605 = vmatprep.subr.mxu0 0.0
      %606 = vmatpush1.msra.mxu0 0.0
      %607 = vmatprep.subr.mxu0 0.0
      %608 = vmatpush1.msra.mxu0 0.0
      %609 = vmatprep.subr.mxu0 0.0
      %610 = vmatpush1.msra.mxu0 0.0
      %611 = vmatprep.subr.mxu0 0.0
      %612 = vmatpush1.msra.mxu0 0.0
      %613 = vmatprep.subr.mxu0 0.0
      %614 = vmatpush1.msra.mxu0 0.0
      %615 = vmatprep.subr.mxu0 0.0
      %616 = vmatpush1.msra.mxu0 0.0
      %617 = vmatprep.subr.mxu0 0.0
      %618 = vmatpush1.msra.mxu0 0.0
      %619 = vmatprep.subr.mxu0 0.0
      %620 = vmatpush1.msra.mxu0 0.0
      %621 = vmatprep.subr.mxu0 0.0
      %622 = vmatpush1.msra.mxu0 0.0
      %623 = vmatprep.subr.mxu0 0.0
      %624 = vmatpush1.msra.mxu0 0.0
      %625 = vmatprep.subr.mxu0 0.0
      %626 = vmatpush1.msra.mxu0 0.0
      %627 = vmatprep.subr.mxu0 0.0
      %628 = vmatpush1.msra.mxu0 0.0
      %629 = vmatprep.subr.mxu0 0.0
      %630 = vmatpush1.msra.mxu0 0.0
      %631 = vmatprep.subr.mxu0 0.0
      %632 = vmatpush1.msra.mxu0 0.0
      %633 = vmatprep.subr.mxu0 0.0
      %634 = vmatpush1.msra.mxu0 0.0
      %635 = vmatprep.subr.mxu0 0.0
      %636 = vmatpush1.msra.mxu0 0.0
      %637 = vmatprep.subr.mxu0 0.0
      %638 = vmatpush1.msra.mxu0 0.0
      %639 = vmatprep.mubr.f32.mxu0 0.0
      %640 = vmatmul.mubr.f32.gmra.mrb[0].mxu0 %v573
      %v641 = vpop.f32.mrb[0].mxu0
      %v642 = vadd.f32 %v569, %v641
      %v643 = vpop.f32.mrb[0].mxu0
      %644 = vdwg.mxu0
      %v645 = vld [vmem:[%s7] sm:$0xff]
      %v646 = vld [vmem:[%s7 + $0x8] sm:$0xff]
      %v647 = vld [vmem:[%s7 + $0x10] sm:$0xff]
      %v648 = vld [vmem:[%s7 + $0x18] sm:$0xff]
      %v649 = vld [vmem:[%s8] sm:$0x1]
      %v651 = vlaneseq
      %v652 = vshrl.u32 %v651, 7
      %v653 = vsub.s32 0, %v652
      %v654 = vrot.slane %v649, %v653
      %v657 = vsel %vm571, %v556, 0
      %659 = vmatprep.subr.mxu0 0.0
      %660 = vmatpush1.msra.mxu0 %v645
      %661 = vmatprep.subr.mxu0 0.0
      %662 = vmatpush1.msra.mxu0 %v646
      %663 = vmatprep.subr.mxu0 0.0
      %664 = vmatpush1.msra.mxu0 %v647
      %665 = vmatprep.subr.mxu0 0.0
      %666 = vmatpush1.msra.mxu0 %v648
      %667 = vmatprep.subr.mxu0 0.0
      %668 = vmatpush1.msra.mxu0 0.0
      %669 = vmatprep.subr.mxu0 0.0
      %670 = vmatpush1.msra.mxu0 0.0
      %671 = vmatprep.subr.mxu0 0.0
      %672 = vmatpush1.msra.mxu0 0.0
      %673 = vmatprep.subr.mxu0 0.0
      %674 = vmatpush1.msra.mxu0 0.0
      %675 = vmatprep.subr.mxu0 0.0
      %676 = vmatpush1.msra.mxu0 0.0
      %677 = vmatprep.subr.mxu0 0.0
      %678 = vmatpush1.msra.mxu0 0.0
      %679 = vmatprep.subr.mxu0 0.0
      %680 = vmatpush1.msra.mxu0 0.0
      %681 = vmatprep.subr.mxu0 0.0
      %682 = vmatpush1.msra.mxu0 0.0
      %683 = vmatprep.subr.mxu0 0.0
      %684 = vmatpush1.msra.mxu0 0.0
      %685 = vmatprep.subr.mxu0 0.0
      %686 = vmatpush1.msra.mxu0 0.0
      %687 = vmatprep.subr.mxu0 0.0
      %688 = vmatpush1.msra.mxu0 0.0
      %689 = vmatprep.subr.mxu0 0.0
      %690 = vmatpush1.msra.mxu0 0.0
      %691 = vmatprep.subr.mxu0 0.0
      %692 = vmatpush1.msra.mxu0 0.0
      %693 = vmatprep.subr.mxu0 0.0
      %694 = vmatpush1.msra.mxu0 0.0
      %695 = vmatprep.subr.mxu0 0.0
      %696 = vmatpush1.msra.mxu0 0.0
      %697 = vmatprep.subr.mxu0 0.0
      %698 = vmatpush1.msra.mxu0 0.0
      %699 = vmatprep.subr.mxu0 0.0
      %700 = vmatpush1.msra.mxu0 0.0
      %701 = vmatprep.subr.mxu0 0.0
      %702 = vmatpush1.msra.mxu0 0.0
      %703 = vmatprep.subr.mxu0 0.0
      %704 = vmatpush1.msra.mxu0 0.0
      %705 = vmatprep.subr.mxu0 0.0
      %706 = vmatpush1.msra.mxu0 0.0
      %707 = vmatprep.subr.mxu0 0.0
      %708 = vmatpush1.msra.mxu0 0.0
      %709 = vmatprep.subr.mxu0 0.0
      %710 = vmatpush1.msra.mxu0 0.0
      %711 = vmatprep.subr.mxu0 0.0
      %712 = vmatpush1.msra.mxu0 0.0
      %713 = vmatprep.subr.mxu0 0.0
      %714 = vmatpush1.msra.mxu0 0.0
      %715 = vmatprep.subr.mxu0 0.0
      %716 = vmatpush1.msra.mxu0 0.0
      %717 = vmatprep.subr.mxu0 0.0
      %718 = vmatpush1.msra.mxu0 0.0
      %719 = vmatprep.subr.mxu0 0.0
      %720 = vmatpush1.msra.mxu0 0.0
      %721 = vmatprep.subr.mxu0 0.0
      %722 = vmatpush1.msra.mxu0 0.0
      %723 = vmatprep.mubr.f32.mxu0 0.0
      %724 = vmatmul.mubr.f32.gmra.mrb[0].mxu0 %v657
      %v725 = vpop.f32.mrb[0].mxu0
      %v726 = vadd.f32 %v654, %v725
      %v727 = vpop.f32.mrb[0].mxu0
      %728 = vdwg.mxu0
      %v729 = vld [vmem:[%s9] sm:$0xff]
      %v730 = vld [vmem:[%s9 + $0x8] sm:$0xff]
      %v731 = vld [vmem:[%s9 + $0x10] sm:$0xff]
      %v732 = vld [vmem:[%s9 + $0x18] sm:$0xff]
      %v733 = vld [vmem:[%s10] sm:$0x1]
      %v735 = vlaneseq
      %v736 = vshrl.u32 %v735, 7
      %v737 = vsub.s32 0, %v736
      %v738 = vrot.slane %v733, %v737
      %v741 = vsel %vm571, %v557, 0
      %743 = vmatprep.subr.mxu0 0.0
      %744 = vmatpush1.msra.mxu0 %v729
      %745 = vmatprep.subr.mxu0 0.0
      %746 = vmatpush1.msra.mxu0 %v730
      %747 = vmatprep.subr.mxu0 0.0
      %748 = vmatpush1.msra.mxu0 %v731
      %749 = vmatprep.subr.mxu0 0.0
      %750 = vmatpush1.msra.mxu0 %v732
      %751 = vmatprep.subr.mxu0 0.0
      %752 = vmatpush1.msra.mxu0 0.0
      %753 = vmatprep.subr.mxu0 0.0
      %754 = vmatpush1.msra.mxu0 0.0
      %755 = vmatprep.subr.mxu0 0.0
      %756 = vmatpush1.msra.mxu0 0.0
      %757 = vmatprep.subr.mxu0 0.0
      %758 = vmatpush1.msra.mxu0 0.0
      %759 = vmatprep.subr.mxu0 0.0
      %760 = vmatpush1.msra.mxu0 0.0
      %761 = vmatprep.subr.mxu0 0.0
      %762 = vmatpush1.msra.mxu0 0.0
      %763 = vmatprep.subr.mxu0 0.0
      %764 = vmatpush1.msra.mxu0 0.0
      %765 = vmatprep.subr.mxu0 0.0
      %766 = vmatpush1.msra.mxu0 0.0
      %767 = vmatprep.subr.mxu0 0.0
      %768 = vmatpush1.msra.mxu0 0.0
      %769 = vmatprep.subr.mxu0 0.0
      %770 = vmatpush1.msra.mxu0 0.0
      %771 = vmatprep.subr.mxu0 0.0
      %772 = vmatpush1.msra.mxu0 0.0
      %773 = vmatprep.subr.mxu0 0.0
      %774 = vmatpush1.msra.mxu0 0.0
      %775 = vmatprep.subr.mxu0 0.0
      %776 = vmatpush1.msra.mxu0 0.0
      %777 = vmatprep.subr.mxu0 0.0
      %778 = vmatpush1.msra.mxu0 0.0
      %779 = vmatprep.subr.mxu0 0.0
      %780 = vmatpush1.msra.mxu0 0.0
      %781 = vmatprep.subr.mxu0 0.0
      %782 = vmatpush1.msra.mxu0 0.0
      %783 = vmatprep.subr.mxu0 0.0
      %784 = vmatpush1.msra.mxu0 0.0
      %785 = vmatprep.subr.mxu0 0.0
      %786 = vmatpush1.msra.mxu0 0.0
      %787 = vmatprep.subr.mxu0 0.0
      %788 = vmatpush1.msra.mxu0 0.0
      %789 = vmatprep.subr.mxu0 0.0
      %790 = vmatpush1.msra.mxu0 0.0
      %791 = vmatprep.subr.mxu0 0.0
      %792 = vmatpush1.msra.mxu0 0.0
      %793 = vmatprep.subr.mxu0 0.0
      %794 = vmatpush1.msra.mxu0 0.0
      %795 = vmatprep.subr.mxu0 0.0
      %796 = vmatpush1.msra.mxu0 0.0
      %797 = vmatprep.subr.mxu0 0.0
      %798 = vmatpush1.msra.mxu0 0.0
      %799 = vmatprep.subr.mxu0 0.0
      %800 = vmatpush1.msra.mxu0 0.0
      %801 = vmatprep.subr.mxu0 0.0
      %802 = vmatpush1.msra.mxu0 0.0
      %803 = vmatprep.subr.mxu0 0.0
      %804 = vmatpush1.msra.mxu0 0.0
      %805 = vmatprep.subr.mxu0 0.0
      %806 = vmatpush1.msra.mxu0 0.0
      %807 = vmatprep.mubr.f32.mxu0 0.0
      %808 = vmatmul.mubr.f32.gmra.mrb[0].mxu0 %v741
      %v809 = vpop.f32.mrb[0].mxu0
      %v810 = vadd.f32 %v738, %v809
      %v811 = vpop.f32.mrb[0].mxu0
      %812 = vdwg.mxu0
      %v813 = vmul.f32 %v642, 0.35355338
      %vm814 = vcmp.gt.f32.partialorder %v558, 0.5
      %vm815 = vcmp.gt.f32.partialorder %v559, 0.5
      %v816 = vsel %vm814, 1, 0
      %817 = vset.pattern.permute.xlu0 0
      %818 = vperm.xlu0 %817, %v816
      %v819 = vpop.permute.xlu0 %818
      %vm820 = vcmp.eq.s32.totalorder %v819, 1
      %v821 = vsel %vm815, 1, 0
      %v822 = vlaneseq
      %v823 = vshrl.u32 %v822, 7
      %v824 = vsub.s32 0, %v823
      %v825 = vrot.slane %v821, %v824
      %vm826 = vcmp.eq.s32.totalorder %v825, 1
      %vm827 = vmand %vm820, %vm826
      %vm828 = vcmask 64512
      %v830 = vsel %vm828, %v813, 0
      %v833 = vsel %vm828, %v726, 0
      %835 = vmatprep.subr.mxu0 0.0
      %836 = vmatpush1.xpose.msra.mxu0 %v833
      %837 = vmatprep.subr.mxu0 0.0
      %838 = vmatpush1.xpose.msra.mxu0 0.0
      %839 = vmatprep.subr.mxu0 0.0
      %840 = vmatpush1.xpose.msra.mxu0 0.0
      %841 = vmatprep.subr.mxu0 0.0
      %842 = vmatpush1.xpose.msra.mxu0 0.0
      %843 = vmatprep.subr.mxu0 0.0
      %844 = vmatpush1.xpose.msra.mxu0 0.0
      %845 = vmatprep.subr.mxu0 0.0
      %846 = vmatpush1.xpose.msra.mxu0 0.0
      %847 = vmatprep.subr.mxu0 0.0
      %848 = vmatpush1.xpose.msra.mxu0 0.0
      %849 = vmatprep.subr.mxu0 0.0
      %850 = vmatpush1.xpose.msra.mxu0 0.0
      %851 = vmatprep.subr.mxu0 0.0
      %852 = vmatpush1.xpose.msra.mxu0 0.0
      %853 = vmatprep.subr.mxu0 0.0
      %854 = vmatpush1.xpose.msra.mxu0 0.0
      %855 = vmatprep.subr.mxu0 0.0
      %856 = vmatpush1.xpose.msra.mxu0 0.0
      %857 = vmatprep.subr.mxu0 0.0
      %858 = vmatpush1.xpose.msra.mxu0 0.0
      %859 = vmatprep.subr.mxu0 0.0
      %860 = vmatpush1.xpose.msra.mxu0 0.0
      %861 = vmatprep.subr.mxu0 0.0
      %862 = vmatpush1.xpose.msra.mxu0 0.0
      %863 = vmatprep.subr.mxu0 0.0
      %864 = vmatpush1.xpose.msra.mxu0 0.0
      %865 = vmatprep.subr.mxu0 0.0
      %866 = vmatpush1.xpose.msra.mxu0 0.0
      %867 = vmatprep.subr.mxu0 0.0
      %868 = vmatpush1.xpose.msra.mxu0 0.0
      %869 = vmatprep.subr.mxu0 0.0
      %870 = vmatpush1.xpose.msra.mxu0 0.0
      %871 = vmatprep.subr.mxu0 0.0
      %872 = vmatpush1.xpose.msra.mxu0 0.0
      %873 = vmatprep.subr.mxu0 0.0
      %874 = vmatpush1.xpose.msra.mxu0 0.0
      %875 = vmatprep.subr.mxu0 0.0
      %876 = vmatpush1.xpose.msra.mxu0 0.0
      %877 = vmatprep.subr.mxu0 0.0
      %878 = vmatpush1.xpose.msra.mxu0 0.0
      %879 = vmatprep.subr.mxu0 0.0
      %880 = vmatpush1.xpose.msra.mxu0 0.0
      %881 = vmatprep.subr.mxu0 0.0
      %882 = vmatpush1.xpose.msra.mxu0 0.0
      %883 = vmatprep.subr.mxu0 0.0
      %884 = vmatpush1.xpose.msra.mxu0 0.0
      %885 = vmatprep.subr.mxu0 0.0
      %886 = vmatpush1.xpose.msra.mxu0 0.0
      %887 = vmatprep.subr.mxu0 0.0
      %888 = vmatpush1.xpose.msra.mxu0 0.0
      %889 = vmatprep.subr.mxu0 0.0
      %890 = vmatpush1.xpose.msra.mxu0 0.0
      %891 = vmatprep.subr.mxu0 0.0
      %892 = vmatpush1.xpose.msra.mxu0 0.0
      %893 = vmatprep.subr.mxu0 0.0
      %894 = vmatpush1.xpose.msra.mxu0 0.0
      %895 = vmatprep.subr.mxu0 0.0
      %896 = vmatpush1.xpose.msra.mxu0 0.0
      %897 = vmatprep.subr.mxu0 0.0
      %898 = vmatpush1.xpose.msra.mxu0 0.0
      %899 = vmatprep.mubr.f32.mxu0 0.0
      %900 = vmatmul.mubr.f32.gmra.mrb[0].mxu0 %v830
      %v901 = vpop.f32.mrb[0].mxu0
      %v902 = vadd.f32 0.0, %v901
      %v903 = vpop.f32.mrb[0].mxu0
      %904 = vdwg.mxu0
      %v905 = vsel %vm827, %v902, -10000.0
      %v906 = vsel %vm828, %v905, -inf
      %907 = vmax.xlane.f32.xlu0 %v906
      %v908 = vpop.xlane.xlu0 %907
      %v909 = vsub.f32 %v905, %v908
      %v910 = vmul.f32 %v909, 1.442695
      %v911 = vpow.pop %v910
      %v912 = vsel %vm828, %v911, 0.0
      %913 = vadd.xlane.f32.xlu0 %v912
      %v914 = vpop.xlane.xlu0 %913
      %v915 = vrcp.pop %v914
      %v916 = vmul.f32 %v911, %v915
      %v918 = vsel %vm828, %v916, 0
      %920 = vmatprep.subr.mxu0 0.0
      %921 = vmatpush1.msra.mxu0 %v810
      %922 = vmatprep.subr.mxu0 0.0
      %923 = vmatpush1.msra.mxu0 0.0
      %924 = vmatprep.subr.mxu0 0.0
      %925 = vmatpush1.msra.mxu0 0.0
      %926 = vmatprep.subr.mxu0 0.0
      %927 = vmatpush1.msra.mxu0 0.0
      %928 = vmatprep.subr.mxu0 0.0
      %929 = vmatpush1.msra.mxu0 0.0
      %930 = vmatprep.subr.mxu0 0.0
      %931 = vmatpush1.msra.mxu0 0.0
      %932 = vmatprep.subr.mxu0 0.0
      %933 = vmatpush1.msra.mxu0 0.0
      %934 = vmatprep.subr.mxu0 0.0
      %935 = vmatpush1.msra.mxu0 0.0
      %936 = vmatprep.subr.mxu0 0.0
      %937 = vmatpush1.msra.mxu0 0.0
      %938 = vmatprep.subr.mxu0 0.0
      %939 = vmatpush1.msra.mxu0 0.0
      %940 = vmatprep.subr.mxu0 0.0
      %941 = vmatpush1.msra.mxu0 0.0
      %942 = vmatprep.subr.mxu0 0.0
      %943 = vmatpush1.msra.mxu0 0.0
      %944 = vmatprep.subr.mxu0 0.0
      %945 = vmatpush1.msra.mxu0 0.0
      %946 = vmatprep.subr.mxu0 0.0
      %947 = vmatpush1.msra.mxu0 0.0
      %948 = vmatprep.subr.mxu0 0.0
      %949 = vmatpush1.msra.mxu0 0.0
      %950 = vmatprep.subr.mxu0 0.0
      %951 = vmatpush1.msra.mxu0 0.0
      %952 = vmatprep.subr.mxu0 0.0
      %953 = vmatpush1.msra.mxu0 0.0
      %954 = vmatprep.subr.mxu0 0.0
      %955 = vmatpush1.msra.mxu0 0.0
      %956 = vmatprep.subr.mxu0 0.0
      %957 = vmatpush1.msra.mxu0 0.0
      %958 = vmatprep.subr.mxu0 0.0
      %959 = vmatpush1.msra.mxu0 0.0
      %960 = vmatprep.subr.mxu0 0.0
      %961 = vmatpush1.msra.mxu0 0.0
      %962 = vmatprep.subr.mxu0 0.0
      %963 = vmatpush1.msra.mxu0 0.0
      %964 = vmatprep.subr.mxu0 0.0
      %965 = vmatpush1.msra.mxu0 0.0
      %966 = vmatprep.subr.mxu0 0.0
      %967 = vmatpush1.msra.mxu0 0.0
      %968 = vmatprep.subr.mxu0 0.0
      %969 = vmatpush1.msra.mxu0 0.0
      %970 = vmatprep.subr.mxu0 0.0
      %971 = vmatpush1.msra.mxu0 0.0
      %972 = vmatprep.subr.mxu0 0.0
      %973 = vmatpush1.msra.mxu0 0.0
      %974 = vmatprep.subr.mxu0 0.0
      %975 = vmatpush1.msra.mxu0 0.0
      %976 = vmatprep.subr.mxu0 0.0
      %977 = vmatpush1.msra.mxu0 0.0
      %978 = vmatprep.subr.mxu0 0.0
      %979 = vmatpush1.msra.mxu0 0.0
      %980 = vmatprep.subr.mxu0 0.0
      %981 = vmatpush1.msra.mxu0 0.0
      %982 = vmatprep.subr.mxu0 0.0
      %983 = vmatpush1.msra.mxu0 0.0
      %984 = vmatprep.mubr.f32.mxu0 0.0
      %985 = vmatmul.mubr.f32.gmra.mrb[0].mxu0 %v918
      %v986 = vpop.f32.mrb[0].mxu0
      %v987 = vadd.f32 0.0, %v986
      %v988 = vpop.f32.mrb[0].mxu0
      %989 = vdwg.mxu0
      %990 = vrot.lane.b32.xlu0 %v813, 120
      %v991 = vpop.permute.xlu0 %990
      %992 = vrot.lane.b32.xlu0 %v726, 120
      %v993 = vpop.permute.xlu0 %992
      %v994 = vsel %vm828, %v991, 0
      %v996 = vsel %vm828, %v993, 0
      %998 = vmatprep.subr.mxu0 0.0
      %999 = vmatpush1.xpose.msra.mxu0 %v996
      %1000 = vmatprep.subr.mxu0 0.0
      %1001 = vmatpush1.xpose.msra.mxu0 0.0
      %1002 = vmatprep.subr.mxu0 0.0
      %1003 = vmatpush1.xpose.msra.mxu0 0.0
      %1004 = vmatprep.subr.mxu0 0.0
      %1005 = vmatpush1.xpose.msra.mxu0 0.0
      %1006 = vmatprep.subr.mxu0 0.0
      %1007 = vmatpush1.xpose.msra.mxu0 0.0
      %1008 = vmatprep.subr.mxu0 0.0
      %1009 = vmatpush1.xpose.msra.mxu0 0.0
      %1010 = vmatprep.subr.mxu0 0.0
      %1011 = vmatpush1.xpose.msra.mxu0 0.0
      %1012 = vmatprep.subr.mxu0 0.0
      %1013 = vmatpush1.xpose.msra.mxu0 0.0
      %1014 = vmatprep.subr.mxu0 0.0
      %1015 = vmatpush1.xpose.msra.mxu0 0.0
      %1016 = vmatprep.subr.mxu0 0.0
      %1017 = vmatpush1.xpose.msra.mxu0 0.0
      %1018 = vmatprep.subr.mxu0 0.0
      %1019 = vmatpush1.xpose.msra.mxu0 0.0
      %1020 = vmatprep.subr.mxu0 0.0
      %1021 = vmatpush1.xpose.msra.mxu0 0.0
      %1022 = vmatprep.subr.mxu0 0.0
      %1023 = vmatpush1.xpose.msra.mxu0 0.0
      %1024 = vmatprep.subr.mxu0 0.0
      %1025 = vmatpush1.xpose.msra.mxu0 0.0
      %1026 = vmatprep.subr.mxu0 0.0
      %1027 = vmatpush1.xpose.msra.mxu0 0.0
      %1028 = vmatprep.subr.mxu0 0.0
      %1029 = vmatpush1.xpose.msra.mxu0 0.0
      %1030 = vmatprep.subr.mxu0 0.0
      %1031 = vmatpush1.xpose.msra.mxu0 0.0
      %1032 = vmatprep.subr.mxu0 0.0
      %1033 = vmatpush1.xpose.msra.mxu0 0.0
      %1034 = vmatprep.subr.mxu0 0.0
      %1035 = vmatpush1.xpose.msra.mxu0 0.0
      %1036 = vmatprep.subr.mxu0 0.0
      %1037 = vmatpush1.xpose.msra.mxu0 0.0
      %1038 = vmatprep.subr.mxu0 0.0
      %1039 = vmatpush1.xpose.msra.mxu0 0.0
      %1040 = vmatprep.subr.mxu0 0.0
      %1041 = vmatpush1.xpose.msra.mxu0 0.0
      %1042 = vmatprep.subr.mxu0 0.0
      %1043 = vmatpush1.xpose.msra.mxu0 0.0
      %1044 = vmatprep.subr.mxu0 0.0
      %1045 = vmatpush1.xpose.msra.mxu0 0.0
      %1046 = vmatprep.subr.mxu0 0.0
      %1047 = vmatpush1.xpose.msra.mxu0 0.0
      %1048 = vmatprep.subr.mxu0 0.0
      %1049 = vmatpush1.xpose.msra.mxu0 0.0
      %1050 = vmatprep.subr.mxu0 0.0
      %1051 = vmatpush1.xpose.msra.mxu0 0.0
      %1052 = vmatprep.subr.mxu0 0.0
      %1053 = vmatpush1.xpose.msra.mxu0 0.0
      %1054 = vmatprep.subr.mxu0 0.0
      %1055 = vmatpush1.xpose.msra.mxu0 0.0
      %1056 = vmatprep.subr.mxu0 0.0
      %1057 = vmatpush1.xpose.msra.mxu0 0.0
      %1058 = vmatprep.subr.mxu0 0.0
      %1059 = vmatpush1.xpose.msra.mxu0 0.0
      %1060 = vmatprep.subr.mxu0 0.0
      %1061 = vmatpush1.xpose.msra.mxu0 0.0
      %1062 = vmatprep.mubr.f32.mxu0 0.0
      %1063 = vmatmul.mubr.f32.gmra.mrb[0].mxu0 %v994
      %v1064 = vpop.f32.mrb[0].mxu0
      %v1065 = vadd.f32 0.0, %v1064
      %v1066 = vpop.f32.mrb[0].mxu0
      %1067 = vdwg.mxu0
      %v1068 = vsel %vm827, %v1065, -10000.0
      %v1069 = vsel %vm828, %v1068, -inf
      %1070 = vmax.xlane.f32.xlu0 %v1069
      %v1071 = vpop.xlane.xlu0 %1070
      %v1072 = vsub.f32 %v1068, %v1071
      %v1073 = vmul.f32 %v1072, 1.442695
      %v1074 = vpow.pop %v1073
      %v1075 = vsel %vm828, %v1074, 0.0
      %1076 = vadd.xlane.f32.xlu0 %v1075
      %v1077 = vpop.xlane.xlu0 %1076
      %v1078 = vrcp.pop %v1077
      %v1079 = vmul.f32 %v1074, %v1078
      %1081 = vrot.lane.b32.xlu0 %v810, 120
      %v1082 = vpop.permute.xlu0 %1081
      %v1085 = vsel %vm828, %v1079, 0
      %1087 = vmatprep.subr.mxu0 0.0
      %1088 = vmatpush1.msra.mxu0 %v1082
      %1089 = vmatprep.subr.mxu0 0.0
      %1090 = vmatpush1.msra.mxu0 0.0
      %1091 = vmatprep.subr.mxu0 0.0
      %1092 = vmatpush1.msra.mxu0 0.0
      %1093 = vmatprep.subr.mxu0 0.0
      %1094 = vmatpush1.msra.mxu0 0.0
      %1095 = vmatprep.subr.mxu0 0.0
      %1096 = vmatpush1.msra.mxu0 0.0
      %1097 = vmatprep.subr.mxu0 0.0
      %1098 = vmatpush1.msra.mxu0 0.0
      %1099 = vmatprep.subr.mxu0 0.0
      %1100 = vmatpush1.msra.mxu0 0.0
      %1101 = vmatprep.subr.mxu0 0.0
      %1102 = vmatpush1.msra.mxu0 0.0
      %1103 = vmatprep.subr.mxu0 0.0
      %1104 = vmatpush1.msra.mxu0 0.0
      %1105 = vmatprep.subr.mxu0 0.0
      %1106 = vmatpush1.msra.mxu0 0.0
      %1107 = vmatprep.subr.mxu0 0.0
      %1108 = vmatpush1.msra.mxu0 0.0
      %1109 = vmatprep.subr.mxu0 0.0
      %1110 = vmatpush1.msra.mxu0 0.0
      %1111 = vmatprep.subr.mxu0 0.0
      %1112 = vmatpush1.msra.mxu0 0.0
      %1113 = vmatprep.subr.mxu0 0.0
      %1114 = vmatpush1.msra.mxu0 0.0
      %1115 = vmatprep.subr.mxu0 0.0
      %1116 = vmatpush1.msra.mxu0 0.0
      %1117 = vmatprep.subr.mxu0 0.0
      %1118 = vmatpush1.msra.mxu0 0.0
      %1119 = vmatprep.subr.mxu0 0.0
      %1120 = vmatpush1.msra.mxu0 0.0
      %1121 = vmatprep.subr.mxu0 0.0
      %1122 = vmatpush1.msra.mxu0 0.0
      %1123 = vmatprep.subr.mxu0 0.0
      %1124 = vmatpush1.msra.mxu0 0.0
      %1125 = vmatprep.subr.mxu0 0.0
      %1126 = vmatpush1.msra.mxu0 0.0
      %1127 = vmatprep.subr.mxu0 0.0
      %1128 = vmatpush1.msra.mxu0 0.0
      %1129 = vmatprep.subr.mxu0 0.0
      %1130 = vmatpush1.msra.mxu0 0.0
      %1131 = vmatprep.subr.mxu0 0.0
      %1132 = vmatpush1.msra.mxu0 0.0
      %1133 = vmatprep.subr.mxu0 0.0
      %1134 = vmatpush1.msra.mxu0 0.0
      %1135 = vmatprep.subr.mxu0 0.0
      %1136 = vmatpush1.msra.mxu0 0.0
      %1137 = vmatprep.subr.mxu0 0.0
      %1138 = vmatpush1.msra.mxu0 0.0
      %1139 = vmatprep.subr.mxu0 0.0
      %1140 = vmatpush1.msra.mxu0 0.0
      %1141 = vmatprep.subr.mxu0 0.0
      %1142 = vmatpush1.msra.mxu0 0.0
      %1143 = vmatprep.subr.mxu0 0.0
      %1144 = vmatpush1.msra.mxu0 0.0
      %1145 = vmatprep.subr.mxu0 0.0
      %1146 = vmatpush1.msra.mxu0 0.0
      %1147 = vmatprep.subr.mxu0 0.0
      %1148 = vmatpush1.msra.mxu0 0.0
      %1149 = vmatprep.subr.mxu0 0.0
      %1150 = vmatpush1.msra.mxu0 0.0
      %1151 = vmatprep.mubr.f32.mxu0 0.0
      %1152 = vmatmul.mubr.f32.gmra.mrb[0].mxu0 %v1085
      %v1153 = vpop.f32.mrb[0].mxu0
      %v1154 = vadd.f32 0.0, %v1153
      %v1155 = vpop.f32.mrb[0].mxu0
      %1156 = vdwg.mxu0
      %1157 = vrot.lane.b32.xlu0 %v813, 112
      %v1158 = vpop.permute.xlu0 %1157
      %1159 = vrot.lane.b32.xlu0 %v726, 112
      %v1160 = vpop.permute.xlu0 %1159
      %v1161 = vsel %vm828, %v1158, 0
      %v1163 = vsel %vm828, %v1160, 0
      %1165 = vmatprep.subr.mxu0 0.0
      %1166 = vmatpush1.xpose.msra.mxu0 %v1163
      %1167 = vmatprep.subr.mxu0 0.0
      %1168 = vmatpush1.xpose.msra.mxu0 0.0
      %1169 = vmatprep.subr.mxu0 0.0
      %1170 = vmatpush1.xpose.msra.mxu0 0.0
      %1171 = vmatprep.subr.mxu0 0.0
      %1172 = vmatpush1.xpose.msra.mxu0 0.0
      %1173 = vmatprep.subr.mxu0 0.0
      %1174 = vmatpush1.xpose.msra.mxu0 0.0
      %1175 = vmatprep.subr.mxu0 0.0
      %1176 = vmatpush1.xpose.msra.mxu0 0.0
      %1177 = vmatprep.subr.mxu0 0.0
      %1178 = vmatpush1.xpose.msra.mxu0 0.0
      %1179 = vmatprep.subr.mxu0 0.0
      %1180 = vmatpush1.xpose.msra.mxu0 0.0
      %1181 = vmatprep.subr.mxu0 0.0
      %1182 = vmatpush1.xpose.msra.mxu0 0.0
      %1183 = vmatprep.subr.mxu0 0.0
      %1184 = vmatpush1.xpose.msra.mxu0 0.0
      %1185 = vmatprep.subr.mxu0 0.0
      %1186 = vmatpush1.xpose.msra.mxu0 0.0
      %1187 = vmatprep.subr.mxu0 0.0
      %1188 = vmatpush1.xpose.msra.mxu0 0.0
      %1189 = vmatprep.subr.mxu0 0.0
      %1190 = vmatpush1.xpose.msra.mxu0 0.0
      %1191 = vmatprep.subr.mxu0 0.0
      %1192 = vmatpush1.xpose.msra.mxu0 0.0
      %1193 = vmatprep.subr.mxu0 0.0
      %1194 = vmatpush1.xpose.msra.mxu0 0.0
      %1195 = vmatprep.subr.mxu0 0.0
      %1196 = vmatpush1.xpose.msra.mxu0 0.0
      %1197 = vmatprep.subr.mxu0 0.0
      %1198 = vmatpush1.xpose.msra.mxu0 0.0
      %1199 = vmatprep.subr.mxu0 0.0
      %1200 = vmatpush1.xpose.msra.mxu0 0.0
      %1201 = vmatprep.subr.mxu0 0.0
      %1202 = vmatpush1.xpose.msra.mxu0 0.0
      %1203 = vmatprep.subr.mxu0 0.0
      %1204 = vmatpush1.xpose.msra.mxu0 0.0
      %1205 = vmatprep.subr.mxu0 0.0
      %1206 = vmatpush1.xpose.msra.mxu0 0.0
      %1207 = vmatprep.subr.mxu0 0.0
      %1208 = vmatpush1.xpose.msra.mxu0 0.0
      %1209 = vmatprep.subr.mxu0 0.0
      %1210 = vmatpush1.xpose.msra.mxu0 0.0
      %1211 = vmatprep.subr.mxu0 0.0
      %1212 = vmatpush1.xpose.msra.mxu0 0.0
      %1213 = vmatprep.subr.mxu0 0.0
      %1214 = vmatpush1.xpose.msra.mxu0 0.0
      %1215 = vmatprep.subr.mxu0 0.0
      %1216 = vmatpush1.xpose.msra.mxu0 0.0
      %1217 = vmatprep.subr.mxu0 0.0
      %1218 = vmatpush1.xpose.msra.mxu0 0.0
      %1219 = vmatprep.subr.mxu0 0.0
      %1220 = vmatpush1.xpose.msra.mxu0 0.0
      %1221 = vmatprep.subr.mxu0 0.0
      %1222 = vmatpush1.xpose.msra.mxu0 0.0
      %1223 = vmatprep.subr.mxu0 0.0
      %1224 = vmatpush1.xpose.msra.mxu0 0.0
      %1225 = vmatprep.subr.mxu0 0.0
      %1226 = vmatpush1.xpose.msra.mxu0 0.0
      %1227 = vmatprep.subr.mxu0 0.0
      %1228 = vmatpush1.xpose.msra.mxu0 0.0
      %1229 = vmatprep.mubr.f32.mxu0 0.0
      %1230 = vmatmul.mubr.f32.gmra.mrb[0].mxu0 %v1161
      %v1231 = vpop.f32.mrb[0].mxu0
      %v1232 = vadd.f32 0.0, %v1231
      %v1233 = vpop.f32.mrb[0].mxu0
      %1234 = vdwg.mxu0
      %v1235 = vsel %vm827, %v1232, -10000.0
      %v1236 = vsel %vm828, %v1235, -inf
      %1237 = vmax.xlane.f32.xlu0 %v1236
      %v1238 = vpop.xlane.xlu0 %1237
      %v1239 = vsub.f32 %v1235, %v1238
      %v1240 = vmul.f32 %v1239, 1.442695
      %v1241 = vpow.pop %v1240
      %v1242 = vsel %vm828, %v1241, 0.0
      %1243 = vadd.xlane.f32.xlu0 %v1242
      %v1244 = vpop.xlane.xlu0 %1243
      %v1245 = vrcp.pop %v1244
      %v1246 = vmul.f32 %v1241, %v1245
      %1247 = vrot.lane.b32.xlu0 %v810, 112
      %v1248 = vpop.permute.xlu0 %1247
      %v1251 = vsel %vm828, %v1246, 0
      %1253 = vmatprep.subr.mxu0 0.0
      %1254 = vmatpush1.msra.mxu0 %v1248
      %1255 = vmatprep.subr.mxu0 0.0
      %1256 = vmatpush1.msra.mxu0 0.0
      %1257 = vmatprep.subr.mxu0 0.0
      %1258 = vmatpush1.msra.mxu0 0.0
      %1259 = vmatprep.subr.mxu0 0.0
      %1260 = vmatpush1.msra.mxu0 0.0
      %1261 = vmatprep.subr.mxu0 0.0
      %1262 = vmatpush1.msra.mxu0 0.0
      %1263 = vmatprep.subr.mxu0 0.0
      %1264 = vmatpush1.msra.mxu0 0.0
      %1265 = vmatprep.subr.mxu0 0.0
      %1266 = vmatpush1.msra.mxu0 0.0
      %1267 = vmatprep.subr.mxu0 0.0
      %1268 = vmatpush1.msra.mxu0 0.0
      %1269 = vmatprep.subr.mxu0 0.0
      %1270 = vmatpush1.msra.mxu0 0.0
      %1271 = vmatprep.subr.mxu0 0.0
      %1272 = vmatpush1.msra.mxu0 0.0
      %1273 = vmatprep.subr.mxu0 0.0
      %1274 = vmatpush1.msra.mxu0 0.0
      %1275 = vmatprep.subr.mxu0 0.0
      %1276 = vmatpush1.msra.mxu0 0.0
      %1277 = vmatprep.subr.mxu0 0.0
      %1278 = vmatpush1.msra.mxu0 0.0
      %1279 = vmatprep.subr.mxu0 0.0
      %1280 = vmatpush1.msra.mxu0 0.0
      %1281 = vmatprep.subr.mxu0 0.0
      %1282 = vmatpush1.msra.mxu0 0.0
      %1283 = vmatprep.subr.mxu0 0.0
      %1284 = vmatpush1.msra.mxu0 0.0
      %1285 = vmatprep.subr.mxu0 0.0
      %1286 = vmatpush1.msra.mxu0 0.0
      %1287 = vmatprep.subr.mxu0 0.0
      %1288 = vmatpush1.msra.mxu0 0.0
      %1289 = vmatprep.subr.mxu0 0.0
      %1290 = vmatpush1.msra.mxu0 0.0
      %1291 = vmatprep.subr.mxu0 0.0
      %1292 = vmatpush1.msra.mxu0 0.0
      %1293 = vmatprep.subr.mxu0 0.0
      %1294 = vmatpush1.msra.mxu0 0.0
      %1295 = vmatprep.subr.mxu0 0.0
      %1296 = vmatpush1.msra.mxu0 0.0
      %1297 = vmatprep.subr.mxu0 0.0
      %1298 = vmatpush1.msra.mxu0 0.0
      %1299 = vmatprep.subr.mxu0 0.0
      %1300 = vmatpush1.msra.mxu0 0.0
      %1301 = vmatprep.subr.mxu0 0.0
      %1302 = vmatpush1.msra.mxu0 0.0
      %1303 = vmatprep.subr.mxu0 0.0
      %1304 = vmatpush1.msra.mxu0 0.0
      %1305 = vmatprep.subr.mxu0 0.0
      %1306 = vmatpush1.msra.mxu0 0.0
      %1307 = vmatprep.subr.mxu0 0.0
      %1308 = vmatpush1.msra.mxu0 0.0
      %1309 = vmatprep.subr.mxu0 0.0
      %1310 = vmatpush1.msra.mxu0 0.0
      %1311 = vmatprep.subr.mxu0 0.0
      %1312 = vmatpush1.msra.mxu0 0.0
      %1313 = vmatprep.subr.mxu0 0.0
      %1314 = vmatpush1.msra.mxu0 0.0
      %1315 = vmatprep.subr.mxu0 0.0
      %1316 = vmatpush1.msra.mxu0 0.0
      %1317 = vmatprep.mubr.f32.mxu0 0.0
      %1318 = vmatmul.mubr.f32.gmra.mrb[0].mxu0 %v1251
      %v1319 = vpop.f32.mrb[0].mxu0
      %v1320 = vadd.f32 0.0, %v1319
      %v1321 = vpop.f32.mrb[0].mxu0
      %1322 = vdwg.mxu0
      %1323 = vrot.lane.b32.xlu0 %v813, 104
      %v1324 = vpop.permute.xlu0 %1323
      %1325 = vrot.lane.b32.xlu0 %v726, 104
      %v1326 = vpop.permute.xlu0 %1325
      %v1327 = vsel %vm828, %v1324, 0
      %v1329 = vsel %vm828, %v1326, 0
      %1331 = vmatprep.subr.mxu0 0.0
      %1332 = vmatpush1.xpose.msra.mxu0 %v1329
      %1333 = vmatprep.subr.mxu0 0.0
      %1334 = vmatpush1.xpose.msra.mxu0 0.0
      %1335 = vmatprep.subr.mxu0 0.0
      %1336 = vmatpush1.xpose.msra.mxu0 0.0
      %1337 = vmatprep.subr.mxu0 0.0
      %1338 = vmatpush1.xpose.msra.mxu0 0.0
      %1339 = vmatprep.subr.mxu0 0.0
      %1340 = vmatpush1.xpose.msra.mxu0 0.0
      %1341 = vmatprep.subr.mxu0 0.0
      %1342 = vmatpush1.xpose.msra.mxu0 0.0
      %1343 = vmatprep.subr.mxu0 0.0
      %1344 = vmatpush1.xpose.msra.mxu0 0.0
      %1345 = vmatprep.subr.mxu0 0.0
      %1346 = vmatpush1.xpose.msra.mxu0 0.0
      %1347 = vmatprep.subr.mxu0 0.0
      %1348 = vmatpush1.xpose.msra.mxu0 0.0
      %1349 = vmatprep.subr.mxu0 0.0
      %1350 = vmatpush1.xpose.msra.mxu0 0.0
      %1351 = vmatprep.subr.mxu0 0.0
      %1352 = vmatpush1.xpose.msra.mxu0 0.0
      %1353 = vmatprep.subr.mxu0 0.0
      %1354 = vmatpush1.xpose.msra.mxu0 0.0
      %1355 = vmatprep.subr.mxu0 0.0
      %1356 = vmatpush1.xpose.msra.mxu0 0.0
      %1357 = vmatprep.subr.mxu0 0.0
      %1358 = vmatpush1.xpose.msra.mxu0 0.0
      %1359 = vmatprep.subr.mxu0 0.0
      %1360 = vmatpush1.xpose.msra.mxu0 0.0
      %1361 = vmatprep.subr.mxu0 0.0
      %1362 = vmatpush1.xpose.msra.mxu0 0.0
      %1363 = vmatprep.subr.mxu0 0.0
      %1364 = vmatpush1.xpose.msra.mxu0 0.0
      %1365 = vmatprep.subr.mxu0 0.0
      %1366 = vmatpush1.xpose.msra.mxu0 0.0
      %1367 = vmatprep.subr.mxu0 0.0
      %1368 = vmatpush1.xpose.msra.mxu0 0.0
      %1369 = vmatprep.subr.mxu0 0.0
      %1370 = vmatpush1.xpose.msra.mxu0 0.0
      %1371 = vmatprep.subr.mxu0 0.0
      %1372 = vmatpush1.xpose.msra.mxu0 0.0
      %1373 = vmatprep.subr.mxu0 0.0
      %1374 = vmatpush1.xpose.msra.mxu0 0.0
      %1375 = vmatprep.subr.mxu0 0.0
      %1376 = vmatpush1.xpose.msra.mxu0 0.0
      %1377 = vmatprep.subr.mxu0 0.0
      %1378 = vmatpush1.xpose.msra.mxu0 0.0
      %1379 = vmatprep.subr.mxu0 0.0
      %1380 = vmatpush1.xpose.msra.mxu0 0.0
      %1381 = vmatprep.subr.mxu0 0.0
      %1382 = vmatpush1.xpose.msra.mxu0 0.0
      %1383 = vmatprep.subr.mxu0 0.0
      %1384 = vmatpush1.xpose.msra.mxu0 0.0
      %1385 = vmatprep.subr.mxu0 0.0
      %1386 = vmatpush1.xpose.msra.mxu0 0.0
      %1387 = vmatprep.subr.mxu0 0.0
      %1388 = vmatpush1.xpose.msra.mxu0 0.0
      %1389 = vmatprep.subr.mxu0 0.0
      %1390 = vmatpush1.xpose.msra.mxu0 0.0
      %1391 = vmatprep.subr.mxu0 0.0
      %1392 = vmatpush1.xpose.msra.mxu0 0.0
      %1393 = vmatprep.subr.mxu0 0.0
      %1394 = vmatpush1.xpose.msra.mxu0 0.0
      %1395 = vmatprep.mubr.f32.mxu0 0.0
      %1396 = vmatmul.mubr.f32.gmra.mrb[0].mxu0 %v1327
      %v1397 = vpop.f32.mrb[0].mxu0
      %v1398 = vadd.f32 0.0, %v1397
      %v1399 = vpop.f32.mrb[0].mxu0
      %1400 = vdwg.mxu0
      %v1401 = vsel %vm827, %v1398, -10000.0
      %v1402 = vsel %vm828, %v1401, -inf
      %1403 = vmax.xlane.f32.xlu0 %v1402
      %v1404 = vpop.xlane.xlu0 %1403
      %v1405 = vsub.f32 %v1401, %v1404
      %v1406 = vmul.f32 %v1405, 1.442695
      %v1407 = vpow.pop %v1406
      %v1408 = vsel %vm828, %v1407, 0.0
      %1409 = vadd.xlane.f32.xlu0 %v1408
      %v1410 = vpop.xlane.xlu0 %1409
      %v1411 = vrcp.pop %v1410
      %v1412 = vmul.f32 %v1407, %v1411
      %1413 = vrot.lane.b32.xlu0 %v810, 104
      %v1414 = vpop.permute.xlu0 %1413
      %v1417 = vsel %vm828, %v1412, 0
      %1419 = vmatprep.subr.mxu0 0.0
      %1420 = vmatpush1.msra.mxu0 %v1414
      %1421 = vmatprep.subr.mxu0 0.0
      %1422 = vmatpush1.msra.mxu0 0.0
      %1423 = vmatprep.subr.mxu0 0.0
      %1424 = vmatpush1.msra.mxu0 0.0
      %1425 = vmatprep.subr.mxu0 0.0
      %1426 = vmatpush1.msra.mxu0 0.0
      %1427 = vmatprep.subr.mxu0 0.0
      %1428 = vmatpush1.msra.mxu0 0.0
      %1429 = vmatprep.subr.mxu0 0.0
      %1430 = vmatpush1.msra.mxu0 0.0
      %1431 = vmatprep.subr.mxu0 0.0
      %1432 = vmatpush1.msra.mxu0 0.0
      %1433 = vmatprep.subr.mxu0 0.0
      %1434 = vmatpush1.msra.mxu0 0.0
      %1435 = vmatprep.subr.mxu0 0.0
      %1436 = vmatpush1.msra.mxu0 0.0
      %1437 = vmatprep.subr.mxu0 0.0
      %1438 = vmatpush1.msra.mxu0 0.0
      %1439 = vmatprep.subr.mxu0 0.0
      %1440 = vmatpush1.msra.mxu0 0.0
      %1441 = vmatprep.subr.mxu0 0.0
      %1442 = vmatpush1.msra.mxu0 0.0
      %1443 = vmatprep.subr.mxu0 0.0
      %1444 = vmatpush1.msra.mxu0 0.0
      %1445 = vmatprep.subr.mxu0 0.0
      %1446 = vmatpush1.msra.mxu0 0.0
      %1447 = vmatprep.subr.mxu0 0.0
      %1448 = vmatpush1.msra.mxu0 0.0
      %1449 = vmatprep.subr.mxu0 0.0
      %1450 = vmatpush1.msra.mxu0 0.0
      %1451 = vmatprep.subr.mxu0 0.0
      %1452 = vmatpush1.msra.mxu0 0.0
      %1453 = vmatprep.subr.mxu0 0.0
      %1454 = vmatpush1.msra.mxu0 0.0
      %1455 = vmatprep.subr.mxu0 0.0
      %1456 = vmatpush1.msra.mxu0 0.0
      %1457 = vmatprep.subr.mxu0 0.0
      %1458 = vmatpush1.msra.mxu0 0.0
      %1459 = vmatprep.subr.mxu0 0.0
      %1460 = vmatpush1.msra.mxu0 0.0
      %1461 = vmatprep.subr.mxu0 0.0
      %1462 = vmatpush1.msra.mxu0 0.0
      %1463 = vmatprep.subr.mxu0 0.0
      %1464 = vmatpush1.msra.mxu0 0.0
      %1465 = vmatprep.subr.mxu0 0.0
      %1466 = vmatpush1.msra.mxu0 0.0
      %1467 = vmatprep.subr.mxu0 0.0
      %1468 = vmatpush1.msra.mxu0 0.0
      %1469 = vmatprep.subr.mxu0 0.0
      %1470 = vmatpush1.msra.mxu0 0.0
      %1471 = vmatprep.subr.mxu0 0.0
      %1472 = vmatpush1.msra.mxu0 0.0
      %1473 = vmatprep.subr.mxu0 0.0
      %1474 = vmatpush1.msra.mxu0 0.0
      %1475 = vmatprep.subr.mxu0 0.0
      %1476 = vmatpush1.msra.mxu0 0.0
      %1477 = vmatprep.subr.mxu0 0.0
      %1478 = vmatpush1.msra.mxu0 0.0
      %1479 = vmatprep.subr.mxu0 0.0
      %1480 = vmatpush1.msra.mxu0 0.0
      %1481 = vmatprep.subr.mxu0 0.0
      %1482 = vmatpush1.msra.mxu0 0.0
      %1483 = vmatprep.mubr.f32.mxu0 0.0
      %1484 = vmatmul.mubr.f32.gmra.mrb[0].mxu0 %v1417
      %v1485 = vpop.f32.mrb[0].mxu0
      %v1486 = vadd.f32 0.0, %v1485
      %v1487 = vpop.f32.mrb[0].mxu0
      %1488 = vdwg.mxu0
      %1490 = vrot.lane.b32.xlu0 %v1154, 8
      %v1491 = vpop.permute.xlu0 %1490
      %1494 = vrot.lane.b32.xlu0 %v1320, 16
      %v1495 = vpop.permute.xlu0 %1494
      %1498 = vrot.lane.b32.xlu0 %v1486, 24
      %v1499 = vpop.permute.xlu0 %1498
      %v1501 = vsel %vm828, %v987, %v1491
      %vm1502 = vcmask 130048
      %v1503 = vsel %vm1502, %v1501, %v1495
      %vm1504 = vcmask 195584
      %v1505 = vsel %vm1504, %v1503, %v1499
      %v1506 = vld [vmem:[%s11] sm:$0xff]
      %v1507 = vld [vmem:[%s11 + $0x8] sm:$0xff]
      %v1508 = vld [vmem:[%s11 + $0x10] sm:$0xff]
      %v1509 = vld [vmem:[%s11 + $0x18] sm:$0xff]
      %v1510 = vld [vmem:[%s12] sm:$0x1]
      %v1512 = vlaneseq
      %v1513 = vshrl.u32 %v1512, 7
      %v1514 = vsub.s32 0, %v1513
      %v1515 = vrot.slane %v1510, %v1514
      %v1518 = vsel %vm571, %v1505, 0
      %1520 = vmatprep.subr.mxu0 0.0
      %1521 = vmatpush1.msra.mxu0 %v1506
      %1522 = vmatprep.subr.mxu0 0.0
      %1523 = vmatpush1.msra.mxu0 %v1507
      %1524 = vmatprep.subr.mxu0 0.0
      %1525 = vmatpush1.msra.mxu0 %v1508
      %1526 = vmatprep.subr.mxu0 0.0
      %1527 = vmatpush1.msra.mxu0 %v1509
      %1528 = vmatprep.subr.mxu0 0.0
      %1529 = vmatpush1.msra.mxu0 0.0
      %1530 = vmatprep.subr.mxu0 0.0
      %1531 = vmatpush1.msra.mxu0 0.0
      %1532 = vmatprep.subr.mxu0 0.0
      %1533 = vmatpush1.msra.mxu0 0.0
      %1534 = vmatprep.subr.mxu0 0.0
      %1535 = vmatpush1.msra.mxu0 0.0
      %1536 = vmatprep.subr.mxu0 0.0
      %1537 = vmatpush1.msra.mxu0 0.0
      %1538 = vmatprep.subr.mxu0 0.0
      %1539 = vmatpush1.msra.mxu0 0.0
      %1540 = vmatprep.subr.mxu0 0.0
      %1541 = vmatpush1.msra.mxu0 0.0
      %1542 = vmatprep.subr.mxu0 0.0
      %1543 = vmatpush1.msra.mxu0 0.0
      %1544 = vmatprep.subr.mxu0 0.0
      %1545 = vmatpush1.msra.mxu0 0.0
      %1546 = vmatprep.subr.mxu0 0.0
      %1547 = vmatpush1.msra.mxu0 0.0
      %1548 = vmatprep.subr.mxu0 0.0
      %1549 = vmatpush1.msra.mxu0 0.0
      %1550 = vmatprep.subr.mxu0 0.0
      %1551 = vmatpush1.msra.mxu0 0.0
      %1552 = vmatprep.subr.mxu0 0.0
      %1553 = vmatpush1.msra.mxu0 0.0
      %1554 = vmatprep.subr.mxu0 0.0
      %1555 = vmatpush1.msra.mxu0 0.0
      %1556 = vmatprep.subr.mxu0 0.0
      %1557 = vmatpush1.msra.mxu0 0.0
      %1558 = vmatprep.subr.mxu0 0.0
      %1559 = vmatpush1.msra.mxu0 0.0
      %1560 = vmatprep.subr.mxu0 0.0
      %1561 = vmatpush1.msra.mxu0 0.0
      %1562 = vmatprep.subr.mxu0 0.0
      %1563 = vmatpush1.msra.mxu0 0.0
      %1564 = vmatprep.subr.mxu0 0.0
      %1565 = vmatpush1.msra.mxu0 0.0
      %1566 = vmatprep.subr.mxu0 0.0
      %1567 = vmatpush1.msra.mxu0 0.0
      %1568 = vmatprep.subr.mxu0 0.0
      %1569 = vmatpush1.msra.mxu0 0.0
      %1570 = vmatprep.subr.mxu0 0.0
      %1571 = vmatpush1.msra.mxu0 0.0
      %1572 = vmatprep.subr.mxu0 0.0
      %1573 = vmatpush1.msra.mxu0 0.0
      %1574 = vmatprep.subr.mxu0 0.0
      %1575 = vmatpush1.msra.mxu0 0.0
      %1576 = vmatprep.subr.mxu0 0.0
      %1577 = vmatpush1.msra.mxu0 0.0
      %1578 = vmatprep.subr.mxu0 0.0
      %1579 = vmatpush1.msra.mxu0 0.0
      %1580 = vmatprep.subr.mxu0 0.0
      %1581 = vmatpush1.msra.mxu0 0.0
      %1582 = vmatprep.subr.mxu0 0.0
      %1583 = vmatpush1.msra.mxu0 0.0
      %1584 = vmatprep.mubr.f32.mxu0 0.0
      %1585 = vmatmul.mubr.f32.gmra.mrb[0].mxu0 %v1518
      %v1586 = vpop.f32.mrb[0].mxu0
      %v1587 = vadd.f32 %v1515, %v1586
      %v1588 = vpop.f32.mrb[0].mxu0
      %1589 = vdwg.mxu0
      %v1590 = vadd.f32 %v1587, %v555
      %v1591 = vld [vmem:[%s13] sm:$0x1]
      %v1592 = vld [vmem:[%s14] sm:$0x1]
      %v1593 = vsel %vm571, %v1590, 0.0
      %1594 = vadd.xlane.f32.xlu0 %v1593
      %v1595 = vpop.xlane.xlu0 %1594
      %v1596 = vrcp.pop 32.0
      %v1597 = vmul.f32 %v1595, %v1596
      %v1598 = vsub.f32 %v1590, %v1597
      %v1599 = vmul.f32 %v1598, %v1598
      %v1600 = vsel %vm571, %v1599, 0.0
      %1601 = vadd.xlane.f32.xlu0 %v1600
      %v1602 = vpop.xlane.xlu0 %1601
      %v1603 = vmul.f32 %v1602, %v1596
      %v1604 = vadd.f32 %v1603, 1e-12
      %v1605 = vrsqrt.pop %v1604
      %v1606 = vmul.f32 %v1598, %v1605
      %v1608 = vlaneseq
      %v1609 = vshrl.u32 %v1608, 7
      %v1610 = vsub.s32 0, %v1609
      %v1611 = vrot.slane %v1591, %v1610
      %v1613 = vmul.f32 %v1606, %v1611
      %v1615 = vlaneseq
      %v1616 = vshrl.u32 %v1615, 7
      %v1617 = vsub.s32 0, %v1616
      %v1618 = vrot.slane %v1592, %v1617
      %v1620 = vadd.f32 %v1613, %v1618
      %1621 = vst.msk [vmem:[%s554] sm:$0xff] %vm571, %v1620
      %p1622 = scmp.lt.s32.totalorder %s26, 1
      %s1623 = scalar_select %p1622, %s26, 1
      %s1624 = smul.addr %s1623, 8
      %s1625 = scalar_lea.vmem %s15, %s1624
      // Predicated region
      $region81: #{transformer_forward.11} parent=79 // pred_check
        %p1626 = pneg %p384
      $region82: #{transformer_forward.11} parent=79 // pred_check_branch
        %1628 = sbr.rel (%p1626) target = $region84
      $region83: #{transformer_forward.11} parent=79 // pred_region
        _
      $region84: #{transformer_forward.11} parent=79 // pred_fallthru
        _
    $region80: #{transformer_forward.11} parent=5 // pred_fallthru
      _
    %p1629 = scmp.le.s32.totalorder 2, %s21
    // Predicated region
    $region85: #{transformer_forward.11} parent=5 // pred_check
      %p1630 = pneg %p1629
    $region86: #{transformer_forward.11} parent=5 // pred_check_branch
      %1632 = sbr.rel (%p1630) target = $region88
    $region87: #{transformer_forward.11} parent=5 // pred_region
      %s1633 = ssub.s32 %s21, 2
      // Predicated region
      $region89: #{transformer_forward.11} parent=87 // pred_check
        %p1634 = pneg %p390
      $region90: #{transformer_forward.11} parent=87 // pred_check_branch
        %1636 = sbr.rel (%p1634) target = $region92
      $region91: #{transformer_forward.11} parent=87 // pred_region
        %p1637 = scmp.lt.s32.totalorder %s27, 1
        %s1638 = scalar_select %p1637, %s27, 1
        %s1639 = smul.addr %s1638, 8
        %s1640 = scalar_lea.vmem %s15, %s1639
      $region92: #{transformer_forward.11} parent=87 // pred_fallthru
        _
    $region88: #{transformer_forward.11} parent=5 // pred_fallthru
      _
  $region6: #{transformer_forward.11} parent=0 // loop_footer
    %s25 = sadd.s32 1, %s21
  $region7: #{transformer_forward.11} parent=0 // loop_footer_branch
    %20 = sbr.rel target = $region3
  $region8: #{transformer_forward.11} parent=0 // loop_exit
    _

// kernel: transformer_forward.15
$region0: #{transformer_forward.15}
  #allocation0 [shape = 'u32[]', space=smem, size = 0x4, offset = 0x4, fixed_abs, tag = 'smem constant byte address 0x4 - core index']
  #allocation1 [shape = 'u32[144,128]{1,0:T(1,128)}', space=vmem, size = 0x12000, scoped, tag = 'internal scratch']
  %s0 = inlined_call_operand.vmem [shape: f32[2,8,32], index: 0, kind: input, shape index: {}, may-alias: {0,1,2}]
  %s1 = inlined_call_operand.vmem [shape: f32[2,8,32], index: 1, kind: input, shape index: {}, may-alias: {0,1,2}]
  %s2 = inlined_call_operand.vmem [shape: f32[2,8,32], index: 2, kind: input, shape index: {}, may-alias: {0,1,2}]
  %s3 = inlined_call_operand.vmem [shape: f32[2,8,1], index: 3, kind: input, shape index: {}]
  %s4 = inlined_call_operand.vmem [shape: f32[2,1,8], index: 4, kind: input, shape index: {}]
  %s5 = inlined_call_operand.vmem [shape: f32[32,32], index: 5, kind: input, shape index: {}]
  %s6 = inlined_call_operand.vmem [shape: f32[1,32], index: 6, kind: input, shape index: {}]
  %s7 = inlined_call_operand.vmem [shape: f32[32,32], index: 7, kind: input, shape index: {}]
  %s8 = inlined_call_operand.vmem [shape: f32[1,32], index: 8, kind: input, shape index: {}]
  %s9 = inlined_call_operand.vmem [shape: f32[32,32], index: 9, kind: input, shape index: {}]
  %s10 = inlined_call_operand.vmem [shape: f32[1,32], index: 10, kind: input, shape index: {}]
  %s11 = inlined_call_operand.vmem [shape: f32[32,32], index: 11, kind: input, shape index: {}]
  %s12 = inlined_call_operand.vmem [shape: f32[1,32], index: 12, kind: input, shape index: {}]
  %s13 = inlined_call_operand.vmem [shape: f32[1,32], index: 13, kind: input, shape index: {}]
  %s14 = inlined_call_operand.vmem [shape: f32[1,32], index: 14, kind: input, shape index: {}]
  %s15 = inlined_call_operand.vmem [shape: f32[2,8,32], index: 15, kind: output, shape index: {}]
  %s16 = sld [smem:[#allocation0]]
  $region93: #{transformer_forward.15} parent=0
    _
  %s18 = ssub.s32 1, %s16
  %s19 = scalar_select 0, %s18, %s16
  loop: start=0, step=1, limit=4
  $region2: #{transformer_forward.15} parent=0 // loop_pre_header
    _
  $region3: #{transformer_forward.15} parent=0 // loop_header
    %s21 = sphi 0, %s25
    %p22 = scmp.ge.s32.totalorder %s21, 4
    %s31 = sphi 0, %s33
    %s34 = sphi 0, %s31
    %s35 = sphi 0, %s34
    %s51 = sphi 0, %s35
    %s57 = sphi 0, %s59
    %s60 = sphi 0, %s57
    %s61 = sphi 0, %s60
    %s77 = sphi 0, %s61
    %s83 = sphi 0, %s85
    %s86 = sphi 0, %s83
    %s87 = sphi 0, %s86
    %s103 = sphi 0, %s87
    %s109 = sphi 0, %s111
    %s112 = sphi 0, %s109
    %s113 = sphi 0, %s112
    %s129 = sphi 0, %s113
    %s135 = sphi 0, %s137
    %s138 = sphi 0, %s135
    %s139 = sphi 0, %s138
    %s155 = sphi 0, %s139
    %s159 = sphi 0, %s159
    %s161 = sphi 0, %s159
    %s162 = sphi 0, %s161
    %s176 = sphi 0, %s162
    %s180 = sphi 0, %s180
    %s182 = sphi 0, %s180
    %s183 = sphi 0, %s182
    %s197 = sphi 0, %s183
    %s201 = sphi 0, %s201
    %s203 = sphi 0, %s201
    %s204 = sphi 0, %s203
    %s218 = sphi 0, %s204
    %s222 = sphi 0, %s222
    %s224 = sphi 0, %s222
    %s225 = sphi 0, %s224
    %s239 = sphi 0, %s225
    %s243 = sphi 0, %s243
    %s245 = sphi 0, %s243
    %s246 = sphi 0, %s245
    %s260 = sphi 0, %s246
    %s264 = sphi 0, %s264
    %s266 = sphi 0, %s264
    %s267 = sphi 0, %s266
    %s281 = sphi 0, %s267
    %s285 = sphi 0, %s285
    %s287 = sphi 0, %s285
    %s288 = sphi 0, %s287
    %s302 = sphi 0, %s288
    %s306 = sphi 0, %s306
    %s308 = sphi 0, %s306
    %s309 = sphi 0, %s308
    %s323 = sphi 0, %s309
    %s327 = sphi 0, %s327
    %s329 = sphi 0, %s327
    %s330 = sphi 0, %s329
    %s344 = sphi 0, %s330
    %s348 = sphi 0, %s348
    %s350 = sphi 0, %s348
    %s351 = sphi 0, %s350
    %s365 = sphi 0, %s351
    %s371 = sphi 0, %s373
    %s374 = sphi 0, %s371
    %s375 = sphi 0, %s374
    %s391 = sphi 0, %s375
  $region4: #{transformer_forward.15} parent=0 // loop_header_branch
    %24 = sbr.rel (%p22) target = $region8
  $region5: #{transformer_forward.15} parent=0 // loop_body
    %s26 = ssub.s32 %s21, 1
    %s27 = ssub.s32 %s21, 2
    %s28 = sadd.s32 %s21, 1
    %s29 = ssub.s32 %s21, %s28
    %p30 = scmp.eq.s32.totalorder %s29, 0
    %s32 = sadd.s32 %s31, 1
    %s33 = scalar_select %p30, %s31, %s32
    %p36 = pneg %p30
    %p37 = scmp.eq.s32.totalorder %s21, 1
    %p38 = por %p36, %p37
    %p39 = scmp.ne.s32.totalorder %s31, %s34
    %p40 = scmp.eq.s32.totalorder %s21, 0
    %p41 = por %p39, %p40
    %p42 = scmp.ne.s32.totalorder %s31, %s34
    %p43 = scmp.eq.s32.totalorder %s26, 1
    %p44 = por %p42, %p43
    %p45 = scmp.ne.s32.totalorder %s34, %s35
    %p46 = scmp.eq.s32.totalorder %s26, 0
    %p47 = por %p45, %p46
    %p48 = scmp.ne.s32.totalorder %s34, %s35
    %p49 = scmp.eq.s32.totalorder %s27, 1
    %p50 = por %p48, %p49
    %p52 = scmp.ne.s32.totalorder %s35, %s51
    %p53 = scmp.eq.s32.totalorder %s27, 0
    %p54 = por %p52, %p53
    %s55 = ssub.s32 %s21, %s28
    %p56 = scmp.eq.s32.totalorder %s55, 0
    %s58 = sadd.s32 %s57, 1
    %s59 = scalar_select %p56, %s57, %s58
    %p62 = pneg %p56
    %p63 = scmp.eq.s32.totalorder %s21, 1
    %p64 = por %p62, %p63
    %p65 = scmp.ne.s32.totalorder %s57, %s60
    %p66 = scmp.eq.s32.totalorder %s21, 0
    %p67 = por %p65, %p66
    %p68 = scmp.ne.s32.totalorder %s57, %s60
    %p69 = scmp.eq.s32.totalorder %s26, 1
    %p70 = por %p68, %p69
    %p71 = scmp.ne.s32.totalorder %s60, %s61
    %p72 = scmp.eq.s32.totalorder %s26, 0
    %p73 = por %p71, %p72
    %p74 = scmp.ne.s32.totalorder %s60, %s61
    %p75 = scmp.eq.s32.totalorder %s27, 1
    %p76 = por %p74, %p75
    %p78 = scmp.ne.s32.totalorder %s61, %s77
    %p79 = scmp.eq.s32.totalorder %s27, 0
    %p80 = por %p78, %p79
    %s81 = ssub.s32 %s21, %s28
    %p82 = scmp.eq.s32.totalorder %s81, 0
    %s84 = sadd.s32 %s83, 1
    %s85 = scalar_select %p82, %s83, %s84
    %p88 = pneg %p82
    %p89 = scmp.eq.s32.totalorder %s21, 1
    %p90 = por %p88, %p89
    %p91 = scmp.ne.s32.totalorder %s83, %s86
    %p92 = scmp.eq.s32.totalorder %s21, 0
    %p93 = por %p91, %p92
    %p94 = scmp.ne.s32.totalorder %s83, %s86
    %p95 = scmp.eq.s32.totalorder %s26, 1
    %p96 = por %p94, %p95
    %p97 = scmp.ne.s32.totalorder %s86, %s87
    %p98 = scmp.eq.s32.totalorder %s26, 0
    %p99 = por %p97, %p98
    %p100 = scmp.ne.s32.totalorder %s86, %s87
    %p101 = scmp.eq.s32.totalorder %s27, 1
    %p102 = por %p100, %p101
    %p104 = scmp.ne.s32.totalorder %s87, %s103
    %p105 = scmp.eq.s32.totalorder %s27, 0
    %p106 = por %p104, %p105
    %s107 = ssub.s32 %s21, %s28
    %p108 = scmp.eq.s32.totalorder %s107, 0
    %s110 = sadd.s32 %s109, 1
    %s111 = scalar_select %p108, %s109, %s110
    %p114 = pneg %p108
    %p115 = scmp.eq.s32.totalorder %s21, 1
    %p116 = por %p114, %p115
    %p117 = scmp.ne.s32.totalorder %s109, %s112
    %p118 = scmp.eq.s32.totalorder %s21, 0
    %p119 = por %p117, %p118
    %p120 = scmp.ne.s32.totalorder %s109, %s112
    %p121 = scmp.eq.s32.totalorder %s26, 1
    %p122 = por %p120, %p121
    %p123 = scmp.ne.s32.totalorder %s112, %s113
    %p124 = scmp.eq.s32.totalorder %s26, 0
    %p125 = por %p123, %p124
    %p126 = scmp.ne.s32.totalorder %s112, %s113
    %p127 = scmp.eq.s32.totalorder %s27, 1
    %p128 = por %p126, %p127
    %p130 = scmp.ne.s32.totalorder %s113, %s129
    %p131 = scmp.eq.s32.totalorder %s27, 0
    %p132 = por %p130, %p131
    %s133 = ssub.s32 %s21, %s28
    %p134 = scmp.eq.s32.totalorder %s133, 0
    %s136 = sadd.s32 %s135, 1
    %s137 = scalar_select %p134, %s135, %s136
    %p140 = pneg %p134
    %p141 = scmp.eq.s32.totalorder %s21, 1
    %p142 = por %p140, %p141
    %p143 = scmp.ne.s32.totalorder %s135, %s138
    %p144 = scmp.eq.s32.totalorder %s21, 0
    %p145 = por %p143, %p144
    %p146 = scmp.ne.s32.totalorder %s135, %s138
    %p147 = scmp.eq.s32.totalorder %s26, 1
    %p148 = por %p146, %p147
    %p149 = scmp.ne.s32.totalorder %s138, %s139
    %p150 = scmp.eq.s32.totalorder %s26, 0
    %p151 = por %p149, %p150
    %p152 = scmp.ne.s32.totalorder %s138, %s139
    %p153 = scmp.eq.s32.totalorder %s27, 1
    %p154 = por %p152, %p153
    %p156 = scmp.ne.s32.totalorder %s139, %s155
    %p157 = scmp.eq.s32.totalorder %s27, 0
    %p158 = por %p156, %p157
    %s160 = sadd.s32 %s159, 1
    %p163 = scmp.eq.s32.totalorder %s21, 1
    %p164 = scmp.ne.s32.totalorder %s159, %s161
    %p165 = scmp.eq.s32.totalorder %s21, 0
    %p166 = por %p164, %p165
    %p167 = scmp.ne.s32.totalorder %s159, %s161
    %p168 = scmp.eq.s32.totalorder %s26, 1
    %p169 = por %p167, %p168
    %p170 = scmp.ne.s32.totalorder %s161, %s162
    %p171 = scmp.eq.s32.totalorder %s26, 0
    %p172 = por %p170, %p171
    %p173 = scmp.ne.s32.totalorder %s161, %s162
    %p174 = scmp.eq.s32.totalorder %s27, 1
    %p175 = por %p173, %p174
    %p177 = scmp.ne.s32.totalorder %s162, %s176
    %p178 = scmp.eq.s32.totalorder %s27, 0
    %p179 = por %p177, %p178
    %s181 = sadd.s32 %s180, 1
    %p184 = scmp.eq.s32.totalorder %s21, 1
    %p185 = scmp.ne.s32.totalorder %s180, %s182
    %p186 = scmp.eq.s32.totalorder %s21, 0
    %p187 = por %p185, %p186
    %p188 = scmp.ne.s32.totalorder %s180, %s182
    %p189 = scmp.eq.s32.totalorder %s26, 1
    %p190 = por %p188, %p189
    %p191 = scmp.ne.s32.totalorder %s182, %s183
    %p192 = scmp.eq.s32.totalorder %s26, 0
    %p193 = por %p191, %p192
    %p194 = scmp.ne.s32.totalorder %s182, %s183
    %p195 = scmp.eq.s32.totalorder %s27, 1
    %p196 = por %p194, %p195
    %p198 = scmp.ne.s32.totalorder %s183, %s197
    %p199 = scmp.eq.s32.totalorder %s27, 0
    %p200 = por %p198, %p199
    %s202 = sadd.s32 %s201, 1
    %p205 = scmp.eq.s32.totalorder %s21, 1
    %p206 = scmp.ne.s32.totalorder %s201, %s203
    %p207 = scmp.eq.s32.totalorder %s21, 0
    %p208 = por %p206, %p207
    %p209 = scmp.ne.s32.totalorder %s201, %s203
    %p210 = scmp.eq.s32.totalorder %s26, 1
    %p211 = por %p209, %p210
    %p212 = scmp.ne.s32.totalorder %s203, %s204
    %p213 = scmp.eq.s32.totalorder %s26, 0
    %p214 = por %p212, %p213
    %p215 = scmp.ne.s32.totalorder %s203, %s204
    %p216 = scmp.eq.s32.totalorder %s27, 1
    %p217 = por %p215, %p216
    %p219 = scmp.ne.s32.totalorder %s204, %s218
    %p220 = scmp.eq.s32.totalorder %s27, 0
    %p221 = por %p219, %p220
    %s223 = sadd.s32 %s222, 1
    %p226 = scmp.eq.s32.totalorder %s21, 1
    %p227 = scmp.ne.s32.totalorder %s222, %s224
    %p228 = scmp.eq.s32.totalorder %s21, 0
    %p229 = por %p227, %p228
    %p230 = scmp.ne.s32.totalorder %s222, %s224
    %p231 = scmp.eq.s32.totalorder %s26, 1
    %p232 = por %p230, %p231
    %p233 = scmp.ne.s32.totalorder %s224, %s225
    %p234 = scmp.eq.s32.totalorder %s26, 0
    %p235 = por %p233, %p234
    %p236 = scmp.ne.s32.totalorder %s224, %s225
    %p237 = scmp.eq.s32.totalorder %s27, 1
    %p238 = por %p236, %p237
    %p240 = scmp.ne.s32.totalorder %s225, %s239
    %p241 = scmp.eq.s32.totalorder %s27, 0
    %p242 = por %p240, %p241
    %s244 = sadd.s32 %s243, 1
    %p247 = scmp.eq.s32.totalorder %s21, 1
    %p248 = scmp.ne.s32.totalorder %s243, %s245
    %p249 = scmp.eq.s32.totalorder %s21, 0
    %p250 = por %p248, %p249
    %p251 = scmp.ne.s32.totalorder %s243, %s245
    %p252 = scmp.eq.s32.totalorder %s26, 1
    %p253 = por %p251, %p252
    %p254 = scmp.ne.s32.totalorder %s245, %s246
    %p255 = scmp.eq.s32.totalorder %s26, 0
    %p256 = por %p254, %p255
    %p257 = scmp.ne.s32.totalorder %s245, %s246
    %p258 = scmp.eq.s32.totalorder %s27, 1
    %p259 = por %p257, %p258
    %p261 = scmp.ne.s32.totalorder %s246, %s260
    %p262 = scmp.eq.s32.totalorder %s27, 0
    %p263 = por %p261, %p262
    %s265 = sadd.s32 %s264, 1
    %p268 = scmp.eq.s32.totalorder %s21, 1
    %p269 = scmp.ne.s32.totalorder %s264, %s266
    %p270 = scmp.eq.s32.totalorder %s21, 0
    %p271 = por %p269, %p270
    %p272 = scmp.ne.s32.totalorder %s264, %s266
    %p273 = scmp.eq.s32.totalorder %s26, 1
    %p274 = por %p272, %p273
    %p275 = scmp.ne.s32.totalorder %s266, %s267
    %p276 = scmp.eq.s32.totalorder %s26, 0
    %p277 = por %p275, %p276
    %p278 = scmp.ne.s32.totalorder %s266, %s267
    %p279 = scmp.eq.s32.totalorder %s27, 1
    %p280 = por %p278, %p279
    %p282 = scmp.ne.s32.totalorder %s267, %s281
    %p283 = scmp.eq.s32.totalorder %s27, 0
    %p284 = por %p282, %p283
    %s286 = sadd.s32 %s285, 1
    %p289 = scmp.eq.s32.totalorder %s21, 1
    %p290 = scmp.ne.s32.totalorder %s285, %s287
    %p291 = scmp.eq.s32.totalorder %s21, 0
    %p292 = por %p290, %p291
    %p293 = scmp.ne.s32.totalorder %s285, %s287
    %p294 = scmp.eq.s32.totalorder %s26, 1
    %p295 = por %p293, %p294
    %p296 = scmp.ne.s32.totalorder %s287, %s288
    %p297 = scmp.eq.s32.totalorder %s26, 0
    %p298 = por %p296, %p297
    %p299 = scmp.ne.s32.totalorder %s287, %s288
    %p300 = scmp.eq.s32.totalorder %s27, 1
    %p301 = por %p299, %p300
    %p303 = scmp.ne.s32.totalorder %s288, %s302
    %p304 = scmp.eq.s32.totalorder %s27, 0
    %p305 = por %p303, %p304
    %s307 = sadd.s32 %s306, 1
    %p310 = scmp.eq.s32.totalorder %s21, 1
    %p311 = scmp.ne.s32.totalorder %s306, %s308
    %p312 = scmp.eq.s32.totalorder %s21, 0
    %p313 = por %p311, %p312
    %p314 = scmp.ne.s32.totalorder %s306, %s308
    %p315 = scmp.eq.s32.totalorder %s26, 1
    %p316 = por %p314, %p315
    %p317 = scmp.ne.s32.totalorder %s308, %s309
    %p318 = scmp.eq.s32.totalorder %s26, 0
    %p319 = por %p317, %p318
    %p320 = scmp.ne.s32.totalorder %s308, %s309
    %p321 = scmp.eq.s32.totalorder %s27, 1
    %p322 = por %p320, %p321
    %p324 = scmp.ne.s32.totalorder %s309, %s323
    %p325 = scmp.eq.s32.totalorder %s27, 0
    %p326 = por %p324, %p325
    %s328 = sadd.s32 %s327, 1
    %p331 = scmp.eq.s32.totalorder %s21, 1
    %p332 = scmp.ne.s32.totalorder %s327, %s329
    %p333 = scmp.eq.s32.totalorder %s21, 0
    %p334 = por %p332, %p333
    %p335 = scmp.ne.s32.totalorder %s327, %s329
    %p336 = scmp.eq.s32.totalorder %s26, 1
    %p337 = por %p335, %p336
    %p338 = scmp.ne.s32.totalorder %s329, %s330
    %p339 = scmp.eq.s32.totalorder %s26, 0
    %p340 = por %p338, %p339
    %p341 = scmp.ne.s32.totalorder %s329, %s330
    %p342 = scmp.eq.s32.totalorder %s27, 1
    %p343 = por %p341, %p342
    %p345 = scmp.ne.s32.totalorder %s330, %s344
    %p346 = scmp.eq.s32.totalorder %s27, 0
    %p347 = por %p345, %p346
    %s349 = sadd.s32 %s348, 1
    %p352 = scmp.eq.s32.totalorder %s21, 1
    %p353 = scmp.ne.s32.totalorder %s348, %s350
    %p354 = scmp.eq.s32.totalorder %s21, 0
    %p355 = por %p353, %p354
    %p356 = scmp.ne.s32.totalorder %s348, %s350
    %p357 = scmp.eq.s32.totalorder %s26, 1
    %p358 = por %p356, %p357
    %p359 = scmp.ne.s32.totalorder %s350, %s351
    %p360 = scmp.eq.s32.totalorder %s26, 0
    %p361 = por %p359, %p360
    %p362 = scmp.ne.s32.totalorder %s350, %s351
    %p363 = scmp.eq.s32.totalorder %s27, 1
    %p364 = por %p362, %p363
    %p366 = scmp.ne.s32.totalorder %s351, %s365
    %p367 = scmp.eq.s32.totalorder %s27, 0
    %p368 = por %p366, %p367
    %s369 = ssub.s32 %s21, %s28
    %p370 = scmp.eq.s32.totalorder %s369, 0
    %s372 = sadd.s32 %s371, 1
    %s373 = scalar_select %p370, %s371, %s372
    %p376 = pneg %p370
    %p377 = scmp.eq.s32.totalorder %s21, 1
    %p378 = por %p376, %p377
    %p379 = scmp.ne.s32.totalorder %s371, %s374
    %p380 = scmp.eq.s32.totalorder %s21, 0
    %p381 = por %p379, %p380
    %p382 = scmp.ne.s32.totalorder %s371, %s374
    %p383 = scmp.eq.s32.totalorder %s26, 1
    %p384 = por %p382, %p383
    %p385 = scmp.ne.s32.totalorder %s374, %s375
    %p386 = scmp.eq.s32.totalorder %s26, 0
    %p387 = por %p385, %p386
    %p388 = scmp.ne.s32.totalorder %s374, %s375
    %p389 = scmp.eq.s32.totalorder %s27, 1
    %p390 = por %p388, %p389
    %p392 = scmp.ne.s32.totalorder %s375, %s391
    %p393 = scmp.eq.s32.totalorder %s27, 0
    %p394 = por %p392, %p393
    %p395 = scmp.le.s32.totalorder 1, %s21
    %p396 = scmp.lt.s32.totalorder %s21, 3
    %p397 = pnand %p395, %p396
    %p398 = pneg %p397
    // Predicated region
    $region9: #{transformer_forward.15} parent=5 // pred_check
      _
    $region10: #{transformer_forward.15} parent=5 // pred_check_branch
      %400 = sbr.rel (%p397) target = $region12
    $region11: #{transformer_forward.15} parent=5 // pred_region
      %s401 = ssub.s32 %s21, 1
      // Predicated region
      $region13: #{transformer_forward.15} parent=11 // pred_check
        %p402 = pneg %p172
      $region14: #{transformer_forward.15} parent=11 // pred_check_branch
        %404 = sbr.rel (%p402) target = $region16
      $region15: #{transformer_forward.15} parent=11 // pred_region
        _
      $region16: #{transformer_forward.15} parent=11 // pred_fallthru
        _
      // Predicated region
      $region17: #{transformer_forward.15} parent=11 // pred_check
        %p405 = pneg %p193
      $region18: #{transformer_forward.15} parent=11 // pred_check_branch
        %407 = sbr.rel (%p405) target = $region20
      $region19: #{transformer_forward.15} parent=11 // pred_region
        _
      $region20: #{transformer_forward.15} parent=11 // pred_fallthru
        _
      // Predicated region
      $region21: #{transformer_forward.15} parent=11 // pred_check
        %p408 = pneg %p214
      $region22: #{transformer_forward.15} parent=11 // pred_check_branch
        %410 = sbr.rel (%p408) target = $region24
      $region23: #{transformer_forward.15} parent=11 // pred_region
        _
      $region24: #{transformer_forward.15} parent=11 // pred_fallthru
        _
      // Predicated region
      $region25: #{transformer_forward.15} parent=11 // pred_check
        %p411 = pneg %p235
      $region26: #{transformer_forward.15} parent=11 // pred_check_branch
        %413 = sbr.rel (%p411) target = $region28
      $region27: #{transformer_forward.15} parent=11 // pred_region
        _
      $region28: #{transformer_forward.15} parent=11 // pred_fallthru
        _
      // Predicated region
      $region29: #{transformer_forward.15} parent=11 // pred_check
        %p414 = pneg %p256
      $region30: #{transformer_forward.15} parent=11 // pred_check_branch
        %416 = sbr.rel (%p414) target = $region32
      $region31: #{transformer_forward.15} parent=11 // pred_region
        _
      $region32: #{transformer_forward.15} parent=11 // pred_fallthru
        _
      // Predicated region
      $region33: #{transformer_forward.15} parent=11 // pred_check
        %p417 = pneg %p277
      $region34: #{transformer_forward.15} parent=11 // pred_check_branch
        %419 = sbr.rel (%p417) target = $region36
      $region35: #{transformer_forward.15} parent=11 // pred_region
        _
      $region36: #{transformer_forward.15} parent=11 // pred_fallthru
        _
      // Predicated region
      $region37: #{transformer_forward.15} parent=11 // pred_check
        %p420 = pneg %p298
      $region38: #{transformer_forward.15} parent=11 // pred_check_branch
        %422 = sbr.rel (%p420) target = $region40
      $region39: #{transformer_forward.15} parent=11 // pred_region
        _
      $region40: #{transformer_forward.15} parent=11 // pred_fallthru
        _
      // Predicated region
      $region41: #{transformer_forward.15} parent=11 // pred_check
        %p423 = pneg %p319
      $region42: #{transformer_forward.15} parent=11 // pred_check_branch
        %425 = sbr.rel (%p423) target = $region44
      $region43: #{transformer_forward.15} parent=11 // pred_region
        _
      $region44: #{transformer_forward.15} parent=11 // pred_fallthru
        _
      // Predicated region
      $region45: #{transformer_forward.15} parent=11 // pred_check
        %p426 = pneg %p340
      $region46: #{transformer_forward.15} parent=11 // pred_check_branch
        %428 = sbr.rel (%p426) target = $region48
      $region47: #{transformer_forward.15} parent=11 // pred_region
        _
      $region48: #{transformer_forward.15} parent=11 // pred_fallthru
        _
      // Predicated region
      $region49: #{transformer_forward.15} parent=11 // pred_check
        %p429 = pneg %p361
      $region50: #{transformer_forward.15} parent=11 // pred_check_branch
        %431 = sbr.rel (%p429) target = $region52
      $region51: #{transformer_forward.15} parent=11 // pred_region
        _
      $region52: #{transformer_forward.15} parent=11 // pred_fallthru
        _
    $region12: #{transformer_forward.15} parent=5 // pred_fallthru
      _
    %p432 = scmp.lt.s32.totalorder %s21, 2
    // Predicated region
    $region53: #{transformer_forward.15} parent=5 // pred_check
      %p433 = pneg %p432
    $region54: #{transformer_forward.15} parent=5 // pred_check_branch
      %435 = sbr.rel (%p433) target = $region56
    $region55: #{transformer_forward.15} parent=5 // pred_region
      // Predicated region
      $region57: #{transformer_forward.15} parent=55 // pred_check
        %p436 = pneg %p41
      $region58: #{transformer_forward.15} parent=55 // pred_check_branch
        %438 = sbr.rel (%p436) target = $region60
      $region59: #{transformer_forward.15} parent=55 // pred_region
        %p439 = scmp.lt.s32.totalorder %s21, 1
        %s440 = scalar_select %p439, %s21, 1
        %s441 = smul.addr %s440, 8
        %s442 = scalar_lea.vmem %s0, %s441
      $region60: #{transformer_forward.15} parent=55 // pred_fallthru
        _
      // Predicated region
      $region61: #{transformer_forward.15} parent=55 // pred_check
        %p443 = pneg %p67
      $region62: #{transformer_forward.15} parent=55 // pred_check_branch
        %445 = sbr.rel (%p443) target = $region64
      $region63: #{transformer_forward.15} parent=55 // pred_region
        %p446 = scmp.lt.s32.totalorder %s21, 1
        %s447 = scalar_select %p446, %s21, 1
        %s448 = smul.addr %s447, 8
        %s449 = scalar_lea.vmem %s1, %s448
      $region64: #{transformer_forward.15} parent=55 // pred_fallthru
        _
      // Predicated region
      $region65: #{transformer_forward.15} parent=55 // pred_check
        %p450 = pneg %p93
      $region66: #{transformer_forward.15} parent=55 // pred_check_branch
        %452 = sbr.rel (%p450) target = $region68
      $region67: #{transformer_forward.15} parent=55 // pred_region
        %p453 = scmp.lt.s32.totalorder %s21, 1
        %s454 = scalar_select %p453, %s21, 1
        %s455 = smul.addr %s454, 8
        %s456 = scalar_lea.vmem %s2, %s455
      $region68: #{transformer_forward.15} parent=55 // pred_fallthru
        _
      // Predicated region
      $region69: #{transformer_forward.15} parent=55 // pred_check
        %p457 = pneg %p119
      $region70: #{transformer_forward.15} parent=55 // pred_check_branch
        %459 = sbr.rel (%p457) target = $region72
      $region71: #{transformer_forward.15} parent=55 // pred_region
        %p460 = scmp.lt.s32.totalorder %s21, 1
        %s461 = scalar_select %p460, %s21, 1
        %s462 = smul.addr %s461, 8
        %s463 = scalar_lea.vmem %s3, %s462
      $region72: #{transformer_forward.15} parent=55 // pred_fallthru
        _
      // Predicated region
      $region73: #{transformer_forward.15} parent=55 // pred_check
        %p464 = pneg %p145
      $region74: #{transformer_forward.15} parent=55 // pred_check_branch
        %466 = sbr.rel (%p464) target = $region76
      $region75: #{transformer_forward.15} parent=55 // pred_region
        %p467 = scmp.lt.s32.totalorder %s21, 1
        %s468 = scalar_select %p467, %s21, 1
        %s469 = scalar_lea.vmem %s4, %s468
      $region76: #{transformer_forward.15} parent=55 // pred_fallthru
        _
    $region56: #{transformer_forward.15} parent=5 // pred_fallthru
      _
    %p470 = scmp.le.s32.totalorder 1, %s21
    %p471 = scmp.lt.s32.totalorder %s21, 3
    %p472 = pnand %p470, %p471
    %p473 = pneg %p472
    // Predicated region
    $region77: #{transformer_forward.15} parent=5 // pred_check
      _
    $region78: #{transformer_forward.15} parent=5 // pred_check_branch
      %475 = sbr.rel (%p472) target = $region80
    $region79: #{transformer_forward.15} parent=5 // pred_region
      %s476 = ssub.s32 %s21, 1
      %p477 = scmp.lt.s32.totalorder %s26, 1
      %s478 = scalar_select %p477, %s26, 1
      %s479 = smul.addr %s478, 8
      %s480 = scalar_lea.vmem %s0, %s479
      %p481 = pneg %p47
      %p482 = pneg %p44
      %p483 = scmp.lt.s32.totalorder %s26, 1
      %s484 = scalar_select %p483, %s26, 1
      %s485 = smul.addr %s484, 8
      %s486 = scalar_lea.vmem %s1, %s485
      %p487 = pneg %p73
      %p488 = pneg %p70
      %p489 = scmp.lt.s32.totalorder %s26, 1
      %s490 = scalar_select %p489, %s26, 1
      %s491 = smul.addr %s490, 8
      %s492 = scalar_lea.vmem %s2, %s491
      %p493 = pneg %p99
      %p494 = pneg %p96
      %p495 = scmp.lt.s32.totalorder %s26, 1
      %s496 = scalar_select %p495, %s26, 1
      %s497 = smul.addr %s496, 8
      %s498 = scalar_lea.vmem %s3, %s497
      %p499 = pneg %p125
      %p500 = pneg %p122
      %p501 = scmp.lt.s32.totalorder %s26, 1
      %s502 = scalar_select %p501, %s26, 1
      %s503 = scalar_lea.vmem %s4, %s502
      %p504 = pneg %p151
      %p505 = pneg %p148
      %p506 = pneg %p172
      %p507 = pneg %p169
      %p508 = pneg %p193
      %p509 = pneg %p190
      %p510 = pneg %p214
      %p511 = pneg %p211
      %p512 = pneg %p235
      %p513 = pneg %p232
      %p514 = pneg %p256
      %p515 = pneg %p253
      %p516 = pneg %p277
      %p517 = pneg %p274
      %p518 = pneg %p298
      %p519 = pneg %p295
      %p520 = pneg %p319
      %p521 = pneg %p316
      %p522 = pneg %p340
      %p523 = pneg %p337
      %p524 = pneg %p361
      %p525 = pneg %p358
      %p526 = pneg %p387
      %p527 = pneg %p384
      %p528 = scmp.lt.s32.totalorder %s26, 1
      %s529 = scalar_select %p528, %s26, 1
      %s530 = smul.addr %s529, 8
      %s531 = scalar_lea.vmem %s15, %s530
      %p532 = scmp.lt.s32.totalorder %s26, 1
      %s533 = scalar_select %p532, %s26, 1
      %s534 = smul.addr %s533, 8
      %s535 = scalar_lea.vmem %s0, %s534
      %p536 = scmp.lt.s32.totalorder %s26, 1
      %s537 = scalar_select %p536, %s26, 1
      %s538 = smul.addr %s537, 8
      %s539 = scalar_lea.vmem %s1, %s538
      %p540 = scmp.lt.s32.totalorder %s26, 1
      %s541 = scalar_select %p540, %s26, 1
      %s542 = smul.addr %s541, 8
      %s543 = scalar_lea.vmem %s2, %s542
      %p544 = scmp.lt.s32.totalorder %s26, 1
      %s545 = scalar_select %p544, %s26, 1
      %s546 = smul.addr %s545, 8
      %s547 = scalar_lea.vmem %s3, %s546
      %p548 = scmp.lt.s32.totalorder %s26, 1
      %s549 = scalar_select %p548, %s26, 1
      %s550 = scalar_lea.vmem %s4, %s549
      %p551 = scmp.lt.s32.totalorder %s26, 1
      %s552 = scalar_select %p551, %s26, 1
      %s553 = smul.addr %s552, 8
      %s554 = scalar_lea.vmem %s15, %s553
      %v555 = vld [vmem:[%s535] sm:$0xff]
      %v556 = vld [vmem:[%s539] sm:$0xff]
      %v557 = vld [vmem:[%s543] sm:$0xff]
      %v558 = vld [vmem:[%s547] sm:$0xff]
      %v559 = vld [vmem:[%s550] sm:$0x1]
      %v560 = vld [vmem:[%s5] sm:$0xff]
      %v561 = vld [vmem:[%s5 + $0x8] sm:$0xff]
      %v562 = vld [vmem:[%s5 + $0x10] sm:$0xff]
      %v563 = vld [vmem:[%s5 + $0x18] sm:$0xff]
      %v564 = vld [vmem:[%s6] sm:$0x1]
      %v566 = vlaneseq
      %v567 = vshrl.u32 %v566, 7
      %v568 = vsub.s32 0, %v567
      %v569 = vrot.slane %v564, %v568
      %vm571 = vcmask 261120
      %v573 = vsel %vm571, %v555, 0
      %575 = vmatprep.subr.mxu0 0.0
      %576 = vmatpush1.msra.mxu0 %v560
      %577 = vmatprep.subr.mxu0 0.0
      %578 = vmatpush1.msra.mxu0 %v561
      %579 = vmatprep.subr.mxu0 0.0
      %580 = vmatpush1.msra.mxu0 %v562
      %581 = vmatprep.subr.mxu0 0.0
      %582 = vmatpush1.msra.mxu0 %v563
      %583 = vmatprep.subr.mxu0 0.0
      %584 = vmatpush1.msra.mxu0 0.0
      %585 = vmatprep.subr.mxu0 0.0
      %586 = vmatpush1.msra.mxu0 0.0
      %587 = vmatprep.subr.mxu0 0.0
      %588 = vmatpush1.msra.mxu0 0.0
      %589 = vmatprep.subr.mxu0 0.0
      %590 = vmatpush1.msra.mxu0 0.0
      %591 = vmatprep.subr.mxu0 0.0
      %592 = vmatpush1.msra.mxu0 0.0
      %593 = vmatprep.subr.mxu0 0.0
      %594 = vmatpush1.msra.mxu0 0.0
      %595 = vmatprep.subr.mxu0 0.0
      %596 = vmatpush1.msra.mxu0 0.0
      %597 = vmatprep.subr.mxu0 0.0
      %598 = vmatpush1.msra.mxu0 0.0
      %599 = vmatprep.subr.mxu0 0.0
      %600 = vmatpush1.msra.mxu0 0.0
      %601 = vmatprep.subr.mxu0 0.0
      %602 = vmatpush1.msra.mxu0 0.0
      %603 = vmatprep.subr.mxu0 0.0
      %604 = vmatpush1.msra.mxu0 0.0
      %605 = vmatprep.subr.mxu0 0.0
      %606 = vmatpush1.msra.mxu0 0.0
      %607 = vmatprep.subr.mxu0 0.0
      %608 = vmatpush1.msra.mxu0 0.0
      %609 = vmatprep.subr.mxu0 0.0
      %610 = vmatpush1.msra.mxu0 0.0
      %611 = vmatprep.subr.mxu0 0.0
      %612 = vmatpush1.msra.mxu0 0.0
      %613 = vmatprep.subr.mxu0 0.0
      %614 = vmatpush1.msra.mxu0 0.0
      %615 = vmatprep.subr.mxu0 0.0
      %616 = vmatpush1.msra.mxu0 0.0
      %617 = vmatprep.subr.mxu0 0.0
      %618 = vmatpush1.msra.mxu0 0.0
      %619 = vmatprep.subr.mxu0 0.0
      %620 = vmatpush1.msra.mxu0 0.0
      %621 = vmatprep.subr.mxu0 0.0
      %622 = vmatpush1.msra.mxu0 0.0
      %623 = vmatprep.subr.mxu0 0.0
      %624 = vmatpush1.msra.mxu0 0.0
      %625 = vmatprep.subr.mxu0 0.0
      %626 = vmatpush1.msra.mxu0 0.0
      %627 = vmatprep.subr.mxu0 0.0
      %628 = vmatpush1.msra.mxu0 0.0
      %629 = vmatprep.subr.mxu0 0.0
      %630 = vmatpush1.msra.mxu0 0.0
      %631 = vmatprep.subr.mxu0 0.0
      %632 = vmatpush1.msra.mxu0 0.0
      %633 = vmatprep.subr.mxu0 0.0
      %634 = vmatpush1.msra.mxu0 0.0
      %635 = vmatprep.subr.mxu0 0.0
      %636 = vmatpush1.msra.mxu0 0.0
      %637 = vmatprep.subr.mxu0 0.0
      %638 = vmatpush1.msra.mxu0 0.0
      %639 = vmatprep.mubr.f32.mxu0 0.0
      %640 = vmatmul.mubr.f32.gmra.mrb[0].mxu0 %v573
      %v641 = vpop.f32.mrb[0].mxu0
      %v642 = vadd.f32 %v569, %v641
      %v643 = vpop.f32.mrb[0].mxu0
      %644 = vdwg.mxu0
      %v645 = vld [vmem:[%s7] sm:$0xff]
      %v646 = vld [vmem:[%s7 + $0x8] sm:$0xff]
      %v647 = vld [vmem:[%s7 + $0x10] sm:$0xff]
      %v648 = vld [vmem:[%s7 + $0x18] sm:$0xff]
      %v649 = vld [vmem:[%s8] sm:$0x1]
      %v651 = vlaneseq
      %v652 = vshrl.u32 %v651, 7
      %v653 = vsub.s32 0, %v652
      %v654 = vrot.slane %v649, %v653
      %v657 = vsel %vm571, %v556, 0
      %659 = vmatprep.subr.mxu0 0.0
      %660 = vmatpush1.msra.mxu0 %v645
      %661 = vmatprep.subr.mxu0 0.0
      %662 = vmatpush1.msra.mxu0 %v646
      %663 = vmatprep.subr.mxu0 0.0
      %664 = vmatpush1.msra.mxu0 %v647
      %665 = vmatprep.subr.mxu0 0.0
      %666 = vmatpush1.msra.mxu0 %v648
      %667 = vmatprep.subr.mxu0 0.0
      %668 = vmatpush1.msra.mxu0 0.0
      %669 = vmatprep.subr.mxu0 0.0
      %670 = vmatpush1.msra.mxu0 0.0
      %671 = vmatprep.subr.mxu0 0.0
      %672 = vmatpush1.msra.mxu0 0.0
      %673 = vmatprep.subr.mxu0 0.0
      %674 = vmatpush1.msra.mxu0 0.0
      %675 = vmatprep.subr.mxu0 0.0
      %676 = vmatpush1.msra.mxu0 0.0
      %677 = vmatprep.subr.mxu0 0.0
      %678 = vmatpush1.msra.mxu0 0.0
      %679 = vmatprep.subr.mxu0 0.0
      %680 = vmatpush1.msra.mxu0 0.0
      %681 = vmatprep.subr.mxu0 0.0
      %682 = vmatpush1.msra.mxu0 0.0
      %683 = vmatprep.subr.mxu0 0.0
      %684 = vmatpush1.msra.mxu0 0.0
      %685 = vmatprep.subr.mxu0 0.0
      %686 = vmatpush1.msra.mxu0 0.0
      %687 = vmatprep.subr.mxu0 0.0
      %688 = vmatpush1.msra.mxu0 0.0
      %689 = vmatprep.subr.mxu0 0.0
      %690 = vmatpush1.msra.mxu0 0.0
      %691 = vmatprep.subr.mxu0 0.0
      %692 = vmatpush1.msra.mxu0 0.0
      %693 = vmatprep.subr.mxu0 0.0
      %694 = vmatpush1.msra.mxu0 0.0
      %695 = vmatprep.subr.mxu0 0.0
      %696 = vmatpush1.msra.mxu0 0.0
      %697 = vmatprep.subr.mxu0 0.0
      %698 = vmatpush1.msra.mxu0 0.0
      %699 = vmatprep.subr.mxu0 0.0
      %700 = vmatpush1.msra.mxu0 0.0
      %701 = vmatprep.subr.mxu0 0.0
      %702 = vmatpush1.msra.mxu0 0.0
      %703 = vmatprep.subr.mxu0 0.0
      %704 = vmatpush1.msra.mxu0 0.0
      %705 = vmatprep.subr.mxu0 0.0
      %706 = vmatpush1.msra.mxu0 0.0
      %707 = vmatprep.subr.mxu0 0.0
      %708 = vmatpush1.msra.mxu0 0.0
      %709 = vmatprep.subr.mxu0 0.0
      %710 = vmatpush1.msra.mxu0 0.0
      %711 = vmatprep.subr.mxu0 0.0
      %712 = vmatpush1.msra.mxu0 0.0
      %713 = vmatprep.subr.mxu0 0.0
      %714 = vmatpush1.msra.mxu0 0.0
      %715 = vmatprep.subr.mxu0 0.0
      %716 = vmatpush1.msra.mxu0 0.0
      %717 = vmatprep.subr.mxu0 0.0
      %718 = vmatpush1.msra.mxu0 0.0
      %719 = vmatprep.subr.mxu0 0.0
      %720 = vmatpush1.msra.mxu0 0.0
      %721 = vmatprep.subr.mxu0 0.0
      %722 = vmatpush1.msra.mxu0 0.0
      %723 = vmatprep.mubr.f32.mxu0 0.0
      %724 = vmatmul.mubr.f32.gmra.mrb[0].mxu0 %v657
      %v725 = vpop.f32.mrb[0].mxu0
      %v726 = vadd.f32 %v654, %v725
      %v727 = vpop.f32.mrb[0].mxu0
      %728 = vdwg.mxu0
      %v729 = vld [vmem:[%s9] sm:$0xff]
      %v730 = vld [vmem:[%s9 + $0x8] sm:$0xff]
      %v731 = vld [vmem:[%s9 + $0x10] sm:$0xff]
      %v732 = vld [vmem:[%s9 + $0x18] sm:$0xff]
      %v733 = vld [vmem:[%s10] sm:$0x1]
      %v735 = vlaneseq
      %v736 = vshrl.u32 %v735, 7
      %v737 = vsub.s32 0, %v736
      %v738 = vrot.slane %v733, %v737
      %v741 = vsel %vm571, %v557, 0
      %743 = vmatprep.subr.mxu0 0.0
      %744 = vmatpush1.msra.mxu0 %v729
      %745 = vmatprep.subr.mxu0 0.0
      %746 = vmatpush1.msra.mxu0 %v730
      %747 = vmatprep.subr.mxu0 0.0
      %748 = vmatpush1.msra.mxu0 %v731
      %749 = vmatprep.subr.mxu0 0.0
      %750 = vmatpush1.msra.mxu0 %v732
      %751 = vmatprep.subr.mxu0 0.0
      %752 = vmatpush1.msra.mxu0 0.0
      %753 = vmatprep.subr.mxu0 0.0
      %754 = vmatpush1.msra.mxu0 0.0
      %755 = vmatprep.subr.mxu0 0.0
      %756 = vmatpush1.msra.mxu0 0.0
      %757 = vmatprep.subr.mxu0 0.0
      %758 = vmatpush1.msra.mxu0 0.0
      %759 = vmatprep.subr.mxu0 0.0
      %760 = vmatpush1.msra.mxu0 0.0
      %761 = vmatprep.subr.mxu0 0.0
      %762 = vmatpush1.msra.mxu0 0.0
      %763 = vmatprep.subr.mxu0 0.0
      %764 = vmatpush1.msra.mxu0 0.0
      %765 = vmatprep.subr.mxu0 0.0
      %766 = vmatpush1.msra.mxu0 0.0
      %767 = vmatprep.subr.mxu0 0.0
      %768 = vmatpush1.msra.mxu0 0.0
      %769 = vmatprep.subr.mxu0 0.0
      %770 = vmatpush1.msra.mxu0 0.0
      %771 = vmatprep.subr.mxu0 0.0
      %772 = vmatpush1.msra.mxu0 0.0
      %773 = vmatprep.subr.mxu0 0.0
      %774 = vmatpush1.msra.mxu0 0.0
      %775 = vmatprep.subr.mxu0 0.0
      %776 = vmatpush1.msra.mxu0 0.0
      %777 = vmatprep.subr.mxu0 0.0
      %778 = vmatpush1.msra.mxu0 0.0
      %779 = vmatprep.subr.mxu0 0.0
      %780 = vmatpush1.msra.mxu0 0.0
      %781 = vmatprep.subr.mxu0 0.0
      %782 = vmatpush1.msra.mxu0 0.0
      %783 = vmatprep.subr.mxu0 0.0
      %784 = vmatpush1.msra.mxu0 0.0
      %785 = vmatprep.subr.mxu0 0.0
      %786 = vmatpush1.msra.mxu0 0.0
      %787 = vmatprep.subr.mxu0 0.0
      %788 = vmatpush1.msra.mxu0 0.0
      %789 = vmatprep.subr.mxu0 0.0
      %790 = vmatpush1.msra.mxu0 0.0
      %791 = vmatprep.subr.mxu0 0.0
      %792 = vmatpush1.msra.mxu0 0.0
      %793 = vmatprep.subr.mxu0 0.0
      %794 = vmatpush1.msra.mxu0 0.0
      %795 = vmatprep.subr.mxu0 0.0
      %796 = vmatpush1.msra.mxu0 0.0
      %797 = vmatprep.subr.mxu0 0.0
      %798 = vmatpush1.msra.mxu0 0.0
      %799 = vmatprep.subr.mxu0 0.0
      %800 = vmatpush1.msra.mxu0 0.0
      %801 = vmatprep.subr.mxu0 0.0
      %802 = vmatpush1.msra.mxu0 0.0
      %803 = vmatprep.subr.mxu0 0.0
      %804 = vmatpush1.msra.mxu0 0.0
      %805 = vmatprep.subr.mxu0 0.0
      %806 = vmatpush1.msra.mxu0 0.0
      %807 = vmatprep.mubr.f32.mxu0 0.0
      %808 = vmatmul.mubr.f32.gmra.mrb[0].mxu0 %v741
      %v809 = vpop.f32.mrb[0].mxu0
      %v810 = vadd.f32 %v738, %v809
      %v811 = vpop.f32.mrb[0].mxu0
      %812 = vdwg.mxu0
      %v813 = vmul.f32 %v642, 0.35355338
      %vm814 = vcmp.gt.f32.partialorder %v558, 0.5
      %vm815 = vcmp.gt.f32.partialorder %v559, 0.5
      %v816 = vsel %vm814, 1, 0
      %817 = vset.pattern.permute.xlu0 0
      %818 = vperm.xlu0 %817, %v816
      %v819 = vpop.permute.xlu0 %818
      %vm820 = vcmp.eq.s32.totalorder %v819, 1
      %v821 = vsel %vm815, 1, 0
      %v822 = vlaneseq
      %v823 = vshrl.u32 %v822, 7
      %v824 = vsub.s32 0, %v823
      %v825 = vrot.slane %v821, %v824
      %vm826 = vcmp.eq.s32.totalorder %v825, 1
      %vm827 = vmand %vm820, %vm826
      %v828 = vlaneseq
      %v829 = vshrl.u32 %v828, 7
      %v830 = vlaneseq
      %v831 = vand.u32 %v830, 127
      %vm832 = vcmp.le.s32.totalorder %v831, %v829
      %vm833 = vmand %vm827, %vm832
      %vm834 = vcmask 64512
      %v836 = vsel %vm834, %v813, 0
      %v839 = vsel %vm834, %v726, 0
      %841 = vmatprep.subr.mxu0 0.0
      %842 = vmatpush1.xpose.msra.mxu0 %v839
      %843 = vmatprep.subr.mxu0 0.0
      %844 = vmatpush1.xpose.msra.mxu0 0.0
      %845 = vmatprep.subr.mxu0 0.0
      %846 = vmatpush1.xpose.msra.mxu0 0.0
      %847 = vmatprep.subr.mxu0 0.0
      %848 = vmatpush1.xpose.msra.mxu0 0.0
      %849 = vmatprep.subr.mxu0 0.0
      %850 = vmatpush1.xpose.msra.mxu0 0.0
      %851 = vmatprep.subr.mxu0 0.0
      %852 = vmatpush1.xpose.msra.mxu0 0.0
      %853 = vmatprep.subr.mxu0 0.0
      %854 = vmatpush1.xpose.msra.mxu0 0.0
      %855 = vmatprep.subr.mxu0 0.0
      %856 = vmatpush1.xpose.msra.mxu0 0.0
      %857 = vmatprep.subr.mxu0 0.0
      %858 = vmatpush1.xpose.msra.mxu0 0.0
      %859 = vmatprep.subr.mxu0 0.0
      %860 = vmatpush1.xpose.msra.mxu0 0.0
      %861 = vmatprep.subr.mxu0 0.0
      %862 = vmatpush1.xpose.msra.mxu0 0.0
      %863 = vmatprep.subr.mxu0 0.0
      %864 = vmatpush1.xpose.msra.mxu0 0.0
      %865 = vmatprep.subr.mxu0 0.0
      %866 = vmatpush1.xpose.msra.mxu0 0.0
      %867 = vmatprep.subr.mxu0 0.0
      %868 = vmatpush1.xpose.msra.mxu0 0.0
      %869 = vmatprep.subr.mxu0 0.0
      %870 = vmatpush1.xpose.msra.mxu0 0.0
      %871 = vmatprep.subr.mxu0 0.0
      %872 = vmatpush1.xpose.msra.mxu0 0.0
      %873 = vmatprep.subr.mxu0 0.0
      %874 = vmatpush1.xpose.msra.mxu0 0.0
      %875 = vmatprep.subr.mxu0 0.0
      %876 = vmatpush1.xpose.msra.mxu0 0.0
      %877 = vmatprep.subr.mxu0 0.0
      %878 = vmatpush1.xpose.msra.mxu0 0.0
      %879 = vmatprep.subr.mxu0 0.0
      %880 = vmatpush1.xpose.msra.mxu0 0.0
      %881 = vmatprep.subr.mxu0 0.0
      %882 = vmatpush1.xpose.msra.mxu0 0.0
      %883 = vmatprep.subr.mxu0 0.0
      %884 = vmatpush1.xpose.msra.mxu0 0.0
      %885 = vmatprep.subr.mxu0 0.0
      %886 = vmatpush1.xpose.msra.mxu0 0.0
      %887 = vmatprep.subr.mxu0 0.0
      %888 = vmatpush1.xpose.msra.mxu0 0.0
      %889 = vmatprep.subr.mxu0 0.0
      %890 = vmatpush1.xpose.msra.mxu0 0.0
      %891 = vmatprep.subr.mxu0 0.0
      %892 = vmatpush1.xpose.msra.mxu0 0.0
      %893 = vmatprep.subr.mxu0 0.0
      %894 = vmatpush1.xpose.msra.mxu0 0.0
      %895 = vmatprep.subr.mxu0 0.0
      %896 = vmatpush1.xpose.msra.mxu0 0.0
      %897 = vmatprep.subr.mxu0 0.0
      %898 = vmatpush1.xpose.msra.mxu0 0.0
      %899 = vmatprep.subr.mxu0 0.0
      %900 = vmatpush1.xpose.msra.mxu0 0.0
      %901 = vmatprep.subr.mxu0 0.0
      %902 = vmatpush1.xpose.msra.mxu0 0.0
      %903 = vmatprep.subr.mxu0 0.0
      %904 = vmatpush1.xpose.msra.mxu0 0.0
      %905 = vmatprep.mubr.f32.mxu0 0.0
      %906 = vmatmul.mubr.f32.gmra.mrb[0].mxu0 %v836
      %v907 = vpop.f32.mrb[0].mxu0
      %v908 = vadd.f32 0.0, %v907
      %v909 = vpop.f32.mrb[0].mxu0
      %910 = vdwg.mxu0
      %v911 = vsel %vm833, %v908, -10000.0
      %v912 = vsel %vm834, %v911, -inf
      %913 = vmax.xlane.f32.xlu0 %v912
      %v914 = vpop.xlane.xlu0 %913
      %v915 = vsub.f32 %v911, %v914
      %v916 = vmul.f32 %v915, 1.442695
      %v917 = vpow.pop %v916
      %v918 = vsel %vm834, %v917, 0.0
      %919 = vadd.xlane.f32.xlu0 %v918
      %v920 = vpop.xlane.xlu0 %919
      %v921 = vrcp.pop %v920
      %v922 = vmul.f32 %v917, %v921
      %v924 = vsel %vm834, %v922, 0
      %926 = vmatprep.subr.mxu0 0.0
      %927 = vmatpush1.msra.mxu0 %v810
      %928 = vmatprep.subr.mxu0 0.0
      %929 = vmatpush1.msra.mxu0 0.0
      %930 = vmatprep.subr.mxu0 0.0
      %931 = vmatpush1.msra.mxu0 0.0
      %932 = vmatprep.subr.mxu0 0.0
      %933 = vmatpush1.msra.mxu0 0.0
      %934 = vmatprep.subr.mxu0 0.0
      %935 = vmatpush1.msra.mxu0 0.0
      %936 = vmatprep.subr.mxu0 0.0
      %937 = vmatpush1.msra.mxu0 0.0
      %938 = vmatprep.subr.mxu0 0.0
      %939 = vmatpush1.msra.mxu0 0.0
      %940 = vmatprep.subr.mxu0 0.0
      %941 = vmatpush1.msra.mxu0 0.0
      %942 = vmatprep.subr.mxu0 0.0
      %943 = vmatpush1.msra.mxu0 0.0
      %944 = vmatprep.subr.mxu0 0.0
      %945 = vmatpush1.msra.mxu0 0.0
      %946 = vmatprep.subr.mxu0 0.0
      %947 = vmatpush1.msra.mxu0 0.0
      %948 = vmatprep.subr.mxu0 0.0
      %949 = vmatpush1.msra.mxu0 0.0
      %950 = vmatprep.subr.mxu0 0.0
      %951 = vmatpush1.msra.mxu0 0.0
      %952 = vmatprep.subr.mxu0 0.0
      %953 = vmatpush1.msra.mxu0 0.0
      %954 = vmatprep.subr.mxu0 0.0
      %955 = vmatpush1.msra.mxu0 0.0
      %956 = vmatprep.subr.mxu0 0.0
      %957 = vmatpush1.msra.mxu0 0.0
      %958 = vmatprep.subr.mxu0 0.0
      %959 = vmatpush1.msra.mxu0 0.0
      %960 = vmatprep.subr.mxu0 0.0
      %961 = vmatpush1.msra.mxu0 0.0
      %962 = vmatprep.subr.mxu0 0.0
      %963 = vmatpush1.msra.mxu0 0.0
      %964 = vmatprep.subr.mxu0 0.0
      %965 = vmatpush1.msra.mxu0 0.0
      %966 = vmatprep.subr.mxu0 0.0
      %967 = vmatpush1.msra.mxu0 0.0
      %968 = vmatprep.subr.mxu0 0.0
      %969 = vmatpush1.msra.mxu0 0.0
      %970 = vmatprep.subr.mxu0 0.0
      %971 = vmatpush1.msra.mxu0 0.0
      %972 = vmatprep.subr.mxu0 0.0
      %973 = vmatpush1.msra.mxu0 0.0
      %974 = vmatprep.subr.mxu0 0.0
      %975 = vmatpush1.msra.mxu0 0.0
      %976 = vmatprep.subr.mxu0 0.0
      %977 = vmatpush1.msra.mxu0 0.0
      %978 = vmatprep.subr.mxu0 0.0
      %979 = vmatpush1.msra.mxu0 0.0
      %980 = vmatprep.subr.mxu0 0.0
      %981 = vmatpush1.msra.mxu0 0.0
      %982 = vmatprep.subr.mxu0 0.0
      %983 = vmatpush1.msra.mxu0 0.0
      %984 = vmatprep.subr.mxu0 0.0
      %985 = vmatpush1.msra.mxu0 0.0
      %986 = vmatprep.subr.mxu0 0.0
      %987 = vmatpush1.msra.mxu0 0.0
      %988 = vmatprep.subr.mxu0 0.0
      %989 = vmatpush1.msra.mxu0 0.0
      %990 = vmatprep.mubr.f32.mxu0 0.0
      %991 = vmatmul.mubr.f32.gmra.mrb[0].mxu0 %v924
      %v992 = vpop.f32.mrb[0].mxu0
      %v993 = vadd.f32 0.0, %v992
      %v994 = vpop.f32.mrb[0].mxu0
      %995 = vdwg.mxu0
      %996 = vrot.lane.b32.xlu0 %v813, 120
      %v997 = vpop.permute.xlu0 %996
      %998 = vrot.lane.b32.xlu0 %v726, 120
      %v999 = vpop.permute.xlu0 %998
      %v1000 = vsel %vm834, %v997, 0
      %v1002 = vsel %vm834, %v999, 0
      %1004 = vmatprep.subr.mxu0 0.0
      %1005 = vmatpush1.xpose.msra.mxu0 %v1002
      %1006 = vmatprep.subr.mxu0 0.0
      %1007 = vmatpush1.xpose.msra.mxu0 0.0
      %1008 = vmatprep.subr.mxu0 0.0
      %1009 = vmatpush1.xpose.msra.mxu0 0.0
      %1010 = vmatprep.subr.mxu0 0.0
      %1011 = vmatpush1.xpose.msra.mxu0 0.0
      %1012 = vmatprep.subr.mxu0 0.0
      %1013 = vmatpush1.xpose.msra.mxu0 0.0
      %1014 = vmatprep.subr.mxu0 0.0
      %1015 = vmatpush1.xpose.msra.mxu0 0.0
      %1016 = vmatprep.subr.mxu0 0.0
      %1017 = vmatpush1.xpose.msra.mxu0 0.0
      %1018 = vmatprep.subr.mxu0 0.0
      %1019 = vmatpush1.xpose.msra.mxu0 0.0
      %1020 = vmatprep.subr.mxu0 0.0
      %1021 = vmatpush1.xpose.msra.mxu0 0.0
      %1022 = vmatprep.subr.mxu0 0.0
      %1023 = vmatpush1.xpose.msra.mxu0 0.0
      %1024 = vmatprep.subr.mxu0 0.0
      %1025 = vmatpush1.xpose.msra.mxu0 0.0
      %1026 = vmatprep.subr.mxu0 0.0
      %1027 = vmatpush1.xpose.msra.mxu0 0.0
      %1028 = vmatprep.subr.mxu0 0.0
      %1029 = vmatpush1.xpose.msra.mxu0 0.0
      %1030 = vmatprep.subr.mxu0 0.0
      %1031 = vmatpush1.xpose.msra.mxu0 0.0
      %1032 = vmatprep.subr.mxu0 0.0
      %1033 = vmatpush1.xpose.msra.mxu0 0.0
      %1034 = vmatprep.subr.mxu0 0.0
      %1035 = vmatpush1.xpose.msra.mxu0 0.0
      %1036 = vmatprep.subr.mxu0 0.0
      %1037 = vmatpush1.xpose.msra.mxu0 0.0
      %1038 = vmatprep.subr.mxu0 0.0
      %1039 = vmatpush1.xpose.msra.mxu0 0.0
      %1040 = vmatprep.subr.mxu0 0.0
      %1041 = vmatpush1.xpose.msra.mxu0 0.0
      %1042 = vmatprep.subr.mxu0 0.0
      %1043 = vmatpush1.xpose.msra.mxu0 0.0
      %1044 = vmatprep.subr.mxu0 0.0
      %1045 = vmatpush1.xpose.msra.mxu0 0.0
      %1046 = vmatprep.subr.mxu0 0.0
      %1047 = vmatpush1.xpose.msra.mxu0 0.0
      %1048 = vmatprep.subr.mxu0 0.0
      %1049 = vmatpush1.xpose.msra.mxu0 0.0
      %1050 = vmatprep.subr.mxu0 0.0
      %1051 = vmatpush1.xpose.msra.mxu0 0.0
      %1052 = vmatprep.subr.mxu0 0.0
      %1053 = vmatpush1.xpose.msra.mxu0 0.0
      %1054 = vmatprep.subr.mxu0 0.0
      %1055 = vmatpush1.xpose.msra.mxu0 0.0
      %1056 = vmatprep.subr.mxu0 0.0
      %1057 = vmatpush1.xpose.msra.mxu0 0.0
      %1058 = vmatprep.subr.mxu0 0.0
      %1059 = vmatpush1.xpose.msra.mxu0 0.0
      %1060 = vmatprep.subr.mxu0 0.0
      %1061 = vmatpush1.xpose.msra.mxu0 0.0
      %1062 = vmatprep.subr.mxu0 0.0
      %1063 = vmatpush1.xpose.msra.mxu0 0.0
      %1064 = vmatprep.subr.mxu0 0.0
      %1065 = vmatpush1.xpose.msra.mxu0 0.0
      %1066 = vmatprep.subr.mxu0 0.0
      %1067 = vmatpush1.xpose.msra.mxu0 0.0
      %1068 = vmatprep.mubr.f32.mxu0 0.0
      %1069 = vmatmul.mubr.f32.gmra.mrb[0].mxu0 %v1000
      %v1070 = vpop.f32.mrb[0].mxu0
      %v1071 = vadd.f32 0.0, %v1070
      %v1072 = vpop.f32.mrb[0].mxu0
      %1073 = vdwg.mxu0
      %v1074 = vsel %vm833, %v1071, -10000.0
      %v1075 = vsel %vm834, %v1074, -inf
      %1076 = vmax.xlane.f32.xlu0 %v1075
      %v1077 = vpop.xlane.xlu0 %1076
      %v1078 = vsub.f32 %v1074, %v1077
      %v1079 = vmul.f32 %v1078, 1.442695
      %v1080 = vpow.pop %v1079
      %v1081 = vsel %vm834, %v1080, 0.0
      %1082 = vadd.xlane.f32.xlu0 %v1081
      %v1083 = vpop.xlane.xlu0 %1082
      %v1084 = vrcp.pop %v1083
      %v1085 = vmul.f32 %v1080, %v1084
      %1087 = vrot.lane.b32.xlu0 %v810, 120
      %v1088 = vpop.permute.xlu0 %1087
      %v1091 = vsel %vm834, %v1085, 0
      %1093 = vmatprep.subr.mxu0 0.0
      %1094 = vmatpush1.msra.mxu0 %v1088
      %1095 = vmatprep.subr.mxu0 0.0
      %1096 = vmatpush1.msra.mxu0 0.0
      %1097 = vmatprep.subr.mxu0 0.0
      %1098 = vmatpush1.msra.mxu0 0.0
      %1099 = vmatprep.subr.mxu0 0.0
      %1100 = vmatpush1.msra.mxu0 0.0
      %1101 = vmatprep.subr.mxu0 0.0
      %1102 = vmatpush1.msra.mxu0 0.0
      %1103 = vmatprep.subr.mxu0 0.0
      %1104 = vmatpush1.msra.mxu0 0.0
      %1105 = vmatprep.subr.mxu0 0.0
      %1106 = vmatpush1.msra.mxu0 0.0
      %1107 = vmatprep.subr.mxu0 0.0
      %1108 = vmatpush1.msra.mxu0 0.0
      %1109 = vmatprep.subr.mxu0 0.0
      %1110 = vmatpush1.msra.mxu0 0.0
      %1111 = vmatprep.subr.mxu0 0.0
      %1112 = vmatpush1.msra.mxu0 0.0
      %1113 = vmatprep.subr.mxu0 0.0
      %1114 = vmatpush1.msra.mxu0 0.0
      %1115 = vmatprep.subr.mxu0 0.0
      %1116 = vmatpush1.msra.mxu0 0.0
      %1117 = vmatprep.subr.mxu0 0.0
      %1118 = vmatpush1.msra.mxu0 0.0
      %1119 = vmatprep.subr.mxu0 0.0
      %1120 = vmatpush1.msra.mxu0 0.0
      %1121 = vmatprep.subr.mxu0 0.0
      %1122 = vmatpush1.msra.mxu0 0.0
      %1123 = vmatprep.subr.mxu0 0.0
      %1124 = vmatpush1.msra.mxu0 0.0
      %1125 = vmatprep.subr.mxu0 0.0
      %1126 = vmatpush1.msra.mxu0 0.0
      %1127 = vmatprep.subr.mxu0 0.0
      %1128 = vmatpush1.msra.mxu0 0.0
      %1129 = vmatprep.subr.mxu0 0.0
      %1130 = vmatpush1.msra.mxu0 0.0
      %1131 = vmatprep.subr.mxu0 0.0
      %1132 = vmatpush1.msra.mxu0 0.0
      %1133 = vmatprep.subr.mxu0 0.0
      %1134 = vmatpush1.msra.mxu0 0.0
      %1135 = vmatprep.subr.mxu0 0.0
      %1136 = vmatpush1.msra.mxu0 0.0
      %1137 = vmatprep.subr.mxu0 0.0
      %1138 = vmatpush1.msra.mxu0 0.0
      %1139 = vmatprep.subr.mxu0 0.0
      %1140 = vmatpush1.msra.mxu0 0.0
      %1141 = vmatprep.subr.mxu0 0.0
      %1142 = vmatpush1.msra.mxu0 0.0
      %1143 = vmatprep.subr.mxu0 0.0
      %1144 = vmatpush1.msra.mxu0 0.0
      %1145 = vmatprep.subr.mxu0 0.0
      %1146 = vmatpush1.msra.mxu0 0.0
      %1147 = vmatprep.subr.mxu0 0.0
      %1148 = vmatpush1.msra.mxu0 0.0
      %1149 = vmatprep.subr.mxu0 0.0
      %1150 = vmatpush1.msra.mxu0 0.0
      %1151 = vmatprep.subr.mxu0 0.0
      %1152 = vmatpush1.msra.mxu0 0.0
      %1153 = vmatprep.subr.mxu0 0.0
      %1154 = vmatpush1.msra.mxu0 0.0
      %1155 = vmatprep.subr.mxu0 0.0
      %1156 = vmatpush1.msra.mxu0 0.0
      %1157 = vmatprep.mubr.f32.mxu0 0.0
      %1158 = vmatmul.mubr.f32.gmra.mrb[0].mxu0 %v1091
      %v1159 = vpop.f32.mrb[0].mxu0
      %v1160 = vadd.f32 0.0, %v1159
      %v1161 = vpop.f32.mrb[0].mxu0
      %1162 = vdwg.mxu0
      %1163 = vrot.lane.b32.xlu0 %v813, 112
      %v1164 = vpop.permute.xlu0 %1163
      %1165 = vrot.lane.b32.xlu0 %v726, 112
      %v1166 = vpop.permute.xlu0 %1165
      %v1167 = vsel %vm834, %v1164, 0
      %v1169 = vsel %vm834, %v1166, 0
      %1171 = vmatprep.subr.mxu0 0.0
      %1172 = vmatpush1.xpose.msra.mxu0 %v1169
      %1173 = vmatprep.subr.mxu0 0.0
      %1174 = vmatpush1.xpose.msra.mxu0 0.0
      %1175 = vmatprep.subr.mxu0 0.0
      %1176 = vmatpush1.xpose.msra.mxu0 0.0
      %1177 = vmatprep.subr.mxu0 0.0
      %1178 = vmatpush1.xpose.msra.mxu0 0.0
      %1179 = vmatprep.subr.mxu0 0.0
      %1180 = vmatpush1.xpose.msra.mxu0 0.0
      %1181 = vmatprep.subr.mxu0 0.0
      %1182 = vmatpush1.xpose.msra.mxu0 0.0
      %1183 = vmatprep.subr.mxu0 0.0
      %1184 = vmatpush1.xpose.msra.mxu0 0.0
      %1185 = vmatprep.subr.mxu0 0.0
      %1186 = vmatpush1.xpose.msra.mxu0 0.0
      %1187 = vmatprep.subr.mxu0 0.0
      %1188 = vmatpush1.xpose.msra.mxu0 0.0
      %1189 = vmatprep.subr.mxu0 0.0
      %1190 = vmatpush1.xpose.msra.mxu0 0.0
      %1191 = vmatprep.subr.mxu0 0.0
      %1192 = vmatpush1.xpose.msra.mxu0 0.0
      %1193 = vmatprep.subr.mxu0 0.0
      %1194 = vmatpush1.xpose.msra.mxu0 0.0
      %1195 = vmatprep.subr.mxu0 0.0
      %1196 = vmatpush1.xpose.msra.mxu0 0.0
      %1197 = vmatprep.subr.mxu0 0.0
      %1198 = vmatpush1.xpose.msra.mxu0 0.0
      %1199 = vmatprep.subr.mxu0 0.0
      %1200 = vmatpush1.xpose.msra.mxu0 0.0
      %1201 = vmatprep.subr.mxu0 0.0
      %1202 = vmatpush1.xpose.msra.mxu0 0.0
      %1203 = vmatprep.subr.mxu0 0.0
      %1204 = vmatpush1.xpose.msra.mxu0 0.0
      %1205 = vmatprep.subr.mxu0 0.0
      %1206 = vmatpush1.xpose.msra.mxu0 0.0
      %1207 = vmatprep.subr.mxu0 0.0
      %1208 = vmatpush1.xpose.msra.mxu0 0.0
      %1209 = vmatprep.subr.mxu0 0.0
      %1210 = vmatpush1.xpose.msra.mxu0 0.0
      %1211 = vmatprep.subr.mxu0 0.0
      %1212 = vmatpush1.xpose.msra.mxu0 0.0
      %1213 = vmatprep.subr.mxu0 0.0
      %1214 = vmatpush1.xpose.msra.mxu0 0.0
      %1215 = vmatprep.subr.mxu0 0.0
      %1216 = vmatpush1.xpose.msra.mxu0 0.0
      %1217 = vmatprep.subr.mxu0 0.0
      %1218 = vmatpush1.xpose.msra.mxu0 0.0
      %1219 = vmatprep.subr.mxu0 0.0
      %1220 = vmatpush1.xpose.msra.mxu0 0.0
      %1221 = vmatprep.subr.mxu0 0.0
      %1222 = vmatpush1.xpose.msra.mxu0 0.0
      %1223 = vmatprep.subr.mxu0 0.0
      %1224 = vmatpush1.xpose.msra.mxu0 0.0
      %1225 = vmatprep.subr.mxu0 0.0
      %1226 = vmatpush1.xpose.msra.mxu0 0.0
      %1227 = vmatprep.subr.mxu0 0.0
      %1228 = vmatpush1.xpose.msra.mxu0 0.0
      %1229 = vmatprep.subr.mxu0 0.0
      %1230 = vmatpush1.xpose.msra.mxu0 0.0
      %1231 = vmatprep.subr.mxu0 0.0
      %1232 = vmatpush1.xpose.msra.mxu0 0.0
      %1233 = vmatprep.subr.mxu0 0.0
      %1234 = vmatpush1.xpose.msra.mxu0 0.0
      %1235 = vmatprep.mubr.f32.mxu0 0.0
      %1236 = vmatmul.mubr.f32.gmra.mrb[0].mxu0 %v1167
      %v1237 = vpop.f32.mrb[0].mxu0
      %v1238 = vadd.f32 0.0, %v1237
      %v1239 = vpop.f32.mrb[0].mxu0
      %1240 = vdwg.mxu0
      %v1241 = vsel %vm833, %v1238, -10000.0
      %v1242 = vsel %vm834, %v1241, -inf
      %1243 = vmax.xlane.f32.xlu0 %v1242
      %v1244 = vpop.xlane.xlu0 %1243
      %v1245 = vsub.f32 %v1241, %v1244
      %v1246 = vmul.f32 %v1245, 1.442695
      %v1247 = vpow.pop %v1246
      %v1248 = vsel %vm834, %v1247, 0.0
      %1249 = vadd.xlane.f32.xlu0 %v1248
      %v1250 = vpop.xlane.xlu0 %1249
      %v1251 = vrcp.pop %v1250
      %v1252 = vmul.f32 %v1247, %v1251
      %1253 = vrot.lane.b32.xlu0 %v810, 112
      %v1254 = vpop.permute.xlu0 %1253
      %v1257 = vsel %vm834, %v1252, 0
      %1259 = vmatprep.subr.mxu0 0.0
      %1260 = vmatpush1.msra.mxu0 %v1254
      %1261 = vmatprep.subr.mxu0 0.0
      %1262 = vmatpush1.msra.mxu0 0.0
      %1263 = vmatprep.subr.mxu0 0.0
      %1264 = vmatpush1.msra.mxu0 0.0
      %1265 = vmatprep.subr.mxu0 0.0
      %1266 = vmatpush1.msra.mxu0 0.0
      %1267 = vmatprep.subr.mxu0 0.0
      %1268 = vmatpush1.msra.mxu0 0.0
      %1269 = vmatprep.subr.mxu0 0.0
      %1270 = vmatpush1.msra.mxu0 0.0
      %1271 = vmatprep.subr.mxu0 0.0
      %1272 = vmatpush1.msra.mxu0 0.0
      %1273 = vmatprep.subr.mxu0 0.0
      %1274 = vmatpush1.msra.mxu0 0.0
      %1275 = vmatprep.subr.mxu0 0.0
      %1276 = vmatpush1.msra.mxu0 0.0
      %1277 = vmatprep.subr.mxu0 0.0
      %1278 = vmatpush1.msra.mxu0 0.0
      %1279 = vmatprep.subr.mxu0 0.0
      %1280 = vmatpush1.msra.mxu0 0.0
      %1281 = vmatprep.subr.mxu0 0.0
      %1282 = vmatpush1.msra.mxu0 0.0
      %1283 = vmatprep.subr.mxu0 0.0
      %1284 = vmatpush1.msra.mxu0 0.0
      %1285 = vmatprep.subr.mxu0 0.0
      %1286 = vmatpush1.msra.mxu0 0.0
      %1287 = vmatprep.subr.mxu0 0.0
      %1288 = vmatpush1.msra.mxu0 0.0
      %1289 = vmatprep.subr.mxu0 0.0
      %1290 = vmatpush1.msra.mxu0 0.0
      %1291 = vmatprep.subr.mxu0 0.0
      %1292 = vmatpush1.msra.mxu0 0.0
      %1293 = vmatprep.subr.mxu0 0.0
      %1294 = vmatpush1.msra.mxu0 0.0
      %1295 = vmatprep.subr.mxu0 0.0
      %1296 = vmatpush1.msra.mxu0 0.0
      %1297 = vmatprep.subr.mxu0 0.0
      %1298 = vmatpush1.msra.mxu0 0.0
      %1299 = vmatprep.subr.mxu0 0.0
      %1300 = vmatpush1.msra.mxu0 0.0
      %1301 = vmatprep.subr.mxu0 0.0
      %1302 = vmatpush1.msra.mxu0 0.0
      %1303 = vmatprep.subr.mxu0 0.0
      %1304 = vmatpush1.msra.mxu0 0.0
      %1305 = vmatprep.subr.mxu0 0.0
      %1306 = vmatpush1.msra.mxu0 0.0
      %1307 = vmatprep.subr.mxu0 0.0
      %1308 = vmatpush1.msra.mxu0 0.0
      %1309 = vmatprep.subr.mxu0 0.0
      %1310 = vmatpush1.msra.mxu0 0.0
      %1311 = vmatprep.subr.mxu0 0.0
      %1312 = vmatpush1.msra.mxu0 0.0
      %1313 = vmatprep.subr.mxu0 0.0
      %1314 = vmatpush1.msra.mxu0 0.0
      %1315 = vmatprep.subr.mxu0 0.0
      %1316 = vmatpush1.msra.mxu0 0.0
      %1317 = vmatprep.subr.mxu0 0.0
      %1318 = vmatpush1.msra.mxu0 0.0
      %1319 = vmatprep.subr.mxu0 0.0
      %1320 = vmatpush1.msra.mxu0 0.0
      %1321 = vmatprep.subr.mxu0 0.0
      %1322 = vmatpush1.msra.mxu0 0.0
      %1323 = vmatprep.mubr.f32.mxu0 0.0
      %1324 = vmatmul.mubr.f32.gmra.mrb[0].mxu0 %v1257
      %v1325 = vpop.f32.mrb[0].mxu0
      %v1326 = vadd.f32 0.0, %v1325
      %v1327 = vpop.f32.mrb[0].mxu0
      %1328 = vdwg.mxu0
      %1329 = vrot.lane.b32.xlu0 %v813, 104
      %v1330 = vpop.permute.xlu0 %1329
      %1331 = vrot.lane.b32.xlu0 %v726, 104
      %v1332 = vpop.permute.xlu0 %1331
      %v1333 = vsel %vm834, %v1330, 0
      %v1335 = vsel %vm834, %v1332, 0
      %1337 = vmatprep.subr.mxu0 0.0
      %1338 = vmatpush1.xpose.msra.mxu0 %v1335
      %1339 = vmatprep.subr.mxu0 0.0
      %1340 = vmatpush1.xpose.msra.mxu0 0.0
      %1341 = vmatprep.subr.mxu0 0.0
      %1342 = vmatpush1.xpose.msra.mxu0 0.0
      %1343 = vmatprep.subr.mxu0 0.0
      %1344 = vmatpush1.xpose.msra.mxu0 0.0
      %1345 = vmatprep.subr.mxu0 0.0
      %1346 = vmatpush1.xpose.msra.mxu0 0.0
      %1347 = vmatprep.subr.mxu0 0.0
      %1348 = vmatpush1.xpose.msra.mxu0 0.0
      %1349 = vmatprep.subr.mxu0 0.0
      %1350 = vmatpush1.xpose.msra.mxu0 0.0
      %1351 = vmatprep.subr.mxu0 0.0
      %1352 = vmatpush1.xpose.msra.mxu0 0.0
      %1353 = vmatprep.subr.mxu0 0.0
      %1354 = vmatpush1.xpose.msra.mxu0 0.0
      %1355 = vmatprep.subr.mxu0 0.0
      %1356 = vmatpush1.xpose.msra.mxu0 0.0
      %1357 = vmatprep.subr.mxu0 0.0
      %1358 = vmatpush1.xpose.msra.mxu0 0.0
      %1359 = vmatprep.subr.mxu0 0.0
      %1360 = vmatpush1.xpose.msra.mxu0 0.0
      %1361 = vmatprep.subr.mxu0 0.0
      %1362 = vmatpush1.xpose.msra.mxu0 0.0
      %1363 = vmatprep.subr.mxu0 0.0
      %1364 = vmatpush1.xpose.msra.mxu0 0.0
      %1365 = vmatprep.subr.mxu0 0.0
      %1366 = vmatpush1.xpose.msra.mxu0 0.0
      %1367 = vmatprep.subr.mxu0 0.0
      %1368 = vmatpush1.xpose.msra.mxu0 0.0
      %1369 = vmatprep.subr.mxu0 0.0
      %1370 = vmatpush1.xpose.msra.mxu0 0.0
      %1371 = vmatprep.subr.mxu0 0.0
      %1372 = vmatpush1.xpose.msra.mxu0 0.0
      %1373 = vmatprep.subr.mxu0 0.0
      %1374 = vmatpush1.xpose.msra.mxu0 0.0
      %1375 = vmatprep.subr.mxu0 0.0
      %1376 = vmatpush1.xpose.msra.mxu0 0.0
      %1377 = vmatprep.subr.mxu0 0.0
      %1378 = vmatpush1.xpose.msra.mxu0 0.0
      %1379 = vmatprep.subr.mxu0 0.0
      %1380 = vmatpush1.xpose.msra.mxu0 0.0
      %1381 = vmatprep.subr.mxu0 0.0
      %1382 = vmatpush1.xpose.msra.mxu0 0.0
      %1383 = vmatprep.subr.mxu0 0.0
      %1384 = vmatpush1.xpose.msra.mxu0 0.0
      %1385 = vmatprep.subr.mxu0 0.0
      %1386 = vmatpush1.xpose.msra.mxu0 0.0
      %1387 = vmatprep.subr.mxu0 0.0
      %1388 = vmatpush1.xpose.msra.mxu0 0.0
      %1389 = vmatprep.subr.mxu0 0.0
      %1390 = vmatpush1.xpose.msra.mxu0 0.0
      %1391 = vmatprep.subr.mxu0 0.0
      %1392 = vmatpush1.xpose.msra.mxu0 0.0
      %1393 = vmatprep.subr.mxu0 0.0
      %1394 = vmatpush1.xpose.msra.mxu0 0.0
      %1395 = vmatprep.subr.mxu0 0.0
      %1396 = vmatpush1.xpose.msra.mxu0 0.0
      %1397 = vmatprep.subr.mxu0 0.0
      %1398 = vmatpush1.xpose.msra.mxu0 0.0
      %1399 = vmatprep.subr.mxu0 0.0
      %1400 = vmatpush1.xpose.msra.mxu0 0.0
      %1401 = vmatprep.mubr.f32.mxu0 0.0
      %1402 = vmatmul.mubr.f32.gmra.mrb[0].mxu0 %v1333
      %v1403 = vpop.f32.mrb[0].mxu0
      %v1404 = vadd.f32 0.0, %v1403
      %v1405 = vpop.f32.mrb[0].mxu0
      %1406 = vdwg.mxu0
      %v1407 = vsel %vm833, %v1404, -10000.0
      %v1408 = vsel %vm834, %v1407, -inf
      %1409 = vmax.xlane.f32.xlu0 %v1408
      %v1410 = vpop.xlane.xlu0 %1409
      %v1411 = vsub.f32 %v1407, %v1410
      %v1412 = vmul.f32 %v1411, 1.442695
      %v1413 = vpow.pop %v1412
      %v1414 = vsel %vm834, %v1413, 0.0
      %1415 = vadd.xlane.f32.xlu0 %v1414
      %v1416 = vpop.xlane.xlu0 %1415
      %v1417 = vrcp.pop %v1416
      %v1418 = vmul.f32 %v1413, %v1417
      %1419 = vrot.lane.b32.xlu0 %v810, 104
      %v1420 = vpop.permute.xlu0 %1419
      %v1423 = vsel %vm834, %v1418, 0
      %1425 = vmatprep.subr.mxu0 0.0
      %1426 = vmatpush1.msra.mxu0 %v1420
      %1427 = vmatprep.subr.mxu0 0.0
      %1428 = vmatpush1.msra.mxu0 0.0
      %1429 = vmatprep.subr.mxu0 0.0
      %1430 = vmatpush1.msra.mxu0 0.0
      %1431 = vmatprep.subr.mxu0 0.0
      %1432 = vmatpush1.msra.mxu0 0.0
      %1433 = vmatprep.subr.mxu0 0.0
      %1434 = vmatpush1.msra.mxu0 0.0
      %1435 = vmatprep.subr.mxu0 0.0
      %1436 = vmatpush1.msra.mxu0 0.0
      %1437 = vmatprep.subr.mxu0 0.0
      %1438 = vmatpush1.msra.mxu0 0.0
      %1439 = vmatprep.subr.mxu0 0.0
      %1440 = vmatpush1.msra.mxu0 0.0
      %1441 = vmatprep.subr.mxu0 0.0
      %1442 = vmatpush1.msra.mxu0 0.0
      %1443 = vmatprep.subr.mxu0 0.0
      %1444 = vmatpush1.msra.mxu0 0.0
      %1445 = vmatprep.subr.mxu0 0.0
      %1446 = vmatpush1.msra.mxu0 0.0
      %1447 = vmatprep.subr.mxu0 0.0
      %1448 = vmatpush1.msra.mxu0 0.0
      %1449 = vmatprep.subr.mxu0 0.0
      %1450 = vmatpush1.msra.mxu0 0.0
      %1451 = vmatprep.subr.mxu0 0.0
      %1452 = vmatpush1.msra.mxu0 0.0
      %1453 = vmatprep.subr.mxu0 0.0
      %1454 = vmatpush1.msra.mxu0 0.0
      %1455 = vmatprep.subr.mxu0 0.0
      %1456 = vmatpush1.msra.mxu0 0.0
      %1457 = vmatprep.subr.mxu0 0.0
      %1458 = vmatpush1.msra.mxu0 0.0
      %1459 = vmatprep.subr.mxu0 0.0
      %1460 = vmatpush1.msra.mxu0 0.0
      %1461 = vmatprep.subr.mxu0 0.0
      %1462 = vmatpush1.msra.mxu0 0.0
      %1463 = vmatprep.subr.mxu0 0.0
      %1464 = vmatpush1.msra.mxu0 0.0
      %1465 = vmatprep.subr.mxu0 0.0
      %1466 = vmatpush1.msra.mxu0 0.0
      %1467 = vmatprep.subr.mxu0 0.0
      %1468 = vmatpush1.msra.mxu0 0.0
      %1469 = vmatprep.subr.mxu0 0.0
      %1470 = vmatpush1.msra.mxu0 0.0
      %1471 = vmatprep.subr.mxu0 0.0
      %1472 = vmatpush1.msra.mxu0 0.0
      %1473 = vmatprep.subr.mxu0 0.0
      %1474 = vmatpush1.msra.mxu0 0.0
      %1475 = vmatprep.subr.mxu0 0.0
      %1476 = vmatpush1.msra.mxu0 0.0
      %1477 = vmatprep.subr.mxu0 0.0
      %1478 = vmatpush1.msra.mxu0 0.0
      %1479 = vmatprep.subr.mxu0 0.0
      %1480 = vmatpush1.msra.mxu0 0.0
      %1481 = vmatprep.subr.mxu0 0.0
      %1482 = vmatpush1.msra.mxu0 0.0
      %1483 = vmatprep.subr.mxu0 0.0
      %1484 = vmatpush1.msra.mxu0 0.0
      %1485 = vmatprep.subr.mxu0 0.0
      %1486 = vmatpush1.msra.mxu0 0.0
      %1487 = vmatprep.subr.mxu0 0.0
      %1488 = vmatpush1.msra.mxu0 0.0
      %1489 = vmatprep.mubr.f32.mxu0 0.0
      %1490 = vmatmul.mubr.f32.gmra.mrb[0].mxu0 %v1423
      %v1491 = vpop.f32.mrb[0].mxu0
      %v1492 = vadd.f32 0.0, %v1491
      %v1493 = vpop.f32.mrb[0].mxu0
      %1494 = vdwg.mxu0
      %1496 = vrot.lane.b32.xlu0 %v1160, 8
      %v1497 = vpop.permute.xlu0 %1496
      %1500 = vrot.lane.b32.xlu0 %v1326, 16
      %v1501 = vpop.permute.xlu0 %1500
      %1504 = vrot.lane.b32.xlu0 %v1492, 24
      %v1505 = vpop.permute.xlu0 %1504
      %v1507 = vsel %vm834, %v993, %v1497
      %vm1508 = vcmask 130048
      %v1509 = vsel %vm1508, %v1507, %v1501
      %vm1510 = vcmask 195584
      %v1511 = vsel %vm1510, %v1509, %v1505
      %v1512 = vld [vmem:[%s11] sm:$0xff]
      %v1513 = vld [vmem:[%s11 + $0x8] sm:$0xff]
      %v1514 = vld [vmem:[%s11 + $0x10] sm:$0xff]
      %v1515 = vld [vmem:[%s11 + $0x18] sm:$0xff]
      %v1516 = vld [vmem:[%s12] sm:$0x1]
      %v1518 = vlaneseq
      %v1519 = vshrl.u32 %v1518, 7
      %v1520 = vsub.s32 0, %v1519
      %v1521 = vrot.slane %v1516, %v1520
      %v1524 = vsel %vm571, %v1511, 0
      %1526 = vmatprep.subr.mxu0 0.0
      %1527 = vmatpush1.msra.mxu0 %v1512
      %1528 = vmatprep.subr.mxu0 0.0
      %1529 = vmatpush1.msra.mxu0 %v1513
      %1530 = vmatprep.subr.mxu0 0.0
      %1531 = vmatpush1.msra.mxu0 %v1514
      %1532 = vmatprep.subr.mxu0 0.0
      %1533 = vmatpush1.msra.mxu0 %v1515
      %1534 = vmatprep.subr.mxu0 0.0
      %1535 = vmatpush1.msra.mxu0 0.0
      %1536 = vmatprep.subr.mxu0 0.0
      %1537 = vmatpush1.msra.mxu0 0.0
      %1538 = vmatprep.subr.mxu0 0.0
      %1539 = vmatpush1.msra.mxu0 0.0
      %1540 = vmatprep.subr.mxu0 0.0
      %1541 = vmatpush1.msra.mxu0 0.0
      %1542 = vmatprep.subr.mxu0 0.0
      %1543 = vmatpush1.msra.mxu0 0.0
      %1544 = vmatprep.subr.mxu0 0.0
      %1545 = vmatpush1.msra.mxu0 0.0
      %1546 = vmatprep.subr.mxu0 0.0
      %1547 = vmatpush1.msra.mxu0 0.0
      %1548 = vmatprep.subr.mxu0 0.0
      %1549 = vmatpush1.msra.mxu0 0.0
      %1550 = vmatprep.subr.mxu0 0.0
      %1551 = vmatpush1.msra.mxu0 0.0
      %1552 = vmatprep.subr.mxu0 0.0
      %1553 = vmatpush1.msra.mxu0 0.0
      %1554 = vmatprep.subr.mxu0 0.0
      %1555 = vmatpush1.msra.mxu0 0.0
      %1556 = vmatprep.subr.mxu0 0.0
      %1557 = vmatpush1.msra.mxu0 0.0
      %1558 = vmatprep.subr.mxu0 0.0
      %1559 = vmatpush1.msra.mxu0 0.0
      %1560 = vmatprep.subr.mxu0 0.0
      %1561 = vmatpush1.msra.mxu0 0.0
      %1562 = vmatprep.subr.mxu0 0.0
      %1563 = vmatpush1.msra.mxu0 0.0
      %1564 = vmatprep.subr.mxu0 0.0
      %1565 = vmatpush1.msra.mxu0 0.0
      %1566 = vmatprep.subr.mxu0 0.0
      %1567 = vmatpush1.msra.mxu0 0.0
      %1568 = vmatprep.subr.mxu0 0.0
      %1569 = vmatpush1.msra.mxu0 0.0
      %1570 = vmatprep.subr.mxu0 0.0
      %1571 = vmatpush1.msra.mxu0 0.0
      %1572 = vmatprep.subr.mxu0 0.0
      %1573 = vmatpush1.msra.mxu0 0.0
      %1574 = vmatprep.subr.mxu0 0.0
      %1575 = vmatpush1.msra.mxu0 0.0
      %1576 = vmatprep.subr.mxu0 0.0
      %1577 = vmatpush1.msra.mxu0 0.0
      %1578 = vmatprep.subr.mxu0 0.0
      %1579 = vmatpush1.msra.mxu0 0.0
      %1580 = vmatprep.subr.mxu0 0.0
      %1581 = vmatpush1.msra.mxu0 0.0
      %1582 = vmatprep.subr.mxu0 0.0
      %1583 = vmatpush1.msra.mxu0 0.0
      %1584 = vmatprep.subr.mxu0 0.0
      %1585 = vmatpush1.msra.mxu0 0.0
      %1586 = vmatprep.subr.mxu0 0.0
      %1587 = vmatpush1.msra.mxu0 0.0
      %1588 = vmatprep.subr.mxu0 0.0
      %1589 = vmatpush1.msra.mxu0 0.0
      %1590 = vmatprep.mubr.f32.mxu0 0.0
      %1591 = vmatmul.mubr.f32.gmra.mrb[0].mxu0 %v1524
      %v1592 = vpop.f32.mrb[0].mxu0
      %v1593 = vadd.f32 %v1521, %v1592
      %v1594 = vpop.f32.mrb[0].mxu0
      %1595 = vdwg.mxu0
      %v1596 = vadd.f32 %v1593, %v555
      %v1597 = vld [vmem:[%s13] sm:$0x1]
      %v1598 = vld [vmem:[%s14] sm:$0x1]
      %v1599 = vsel %vm571, %v1596, 0.0
      %1600 = vadd.xlane.f32.xlu0 %v1599
      %v1601 = vpop.xlane.xlu0 %1600
      %v1602 = vrcp.pop 32.0
      %v1603 = vmul.f32 %v1601, %v1602
      %v1604 = vsub.f32 %v1596, %v1603
      %v1605 = vmul.f32 %v1604, %v1604
      %v1606 = vsel %vm571, %v1605, 0.0
      %1607 = vadd.xlane.f32.xlu0 %v1606
      %v1608 = vpop.xlane.xlu0 %1607
      %v1609 = vmul.f32 %v1608, %v1602
      %v1610 = vadd.f32 %v1609, 1e-12
      %v1611 = vrsqrt.pop %v1610
      %v1612 = vmul.f32 %v1604, %v1611
      %v1614 = vlaneseq
      %v1615 = vshrl.u32 %v1614, 7
      %v1616 = vsub.s32 0, %v1615
      %v1617 = vrot.slane %v1597, %v1616
      %v1619 = vmul.f32 %v1612, %v1617
      %v1621 = vlaneseq
      %v1622 = vshrl.u32 %v1621, 7
      %v1623 = vsub.s32 0, %v1622
      %v1624 = vrot.slane %v1598, %v1623
      %v1626 = vadd.f32 %v1619, %v1624
      %1627 = vst.msk [vmem:[%s554] sm:$0xff] %vm571, %v1626
      %p1628 = scmp.lt.s32.totalorder %s26, 1
      %s1629 = scalar_select %p1628, %s26, 1
      %s1630 = smul.addr %s1629, 8
      %s1631 = scalar_lea.vmem %s15, %s1630
      // Predicated region
      $region81: #{transformer_forward.15} parent=79 // pred_check
        %p1632 = pneg %p384
      $region82: #{transformer_forward.15} parent=79 // pred_check_branch
        %1634 = sbr.rel (%p1632) target = $region84
      $region83: #{transformer_forward.15} parent=79 // pred_region
        _
      $region84: #{transformer_forward.15} parent=79 // pred_fallthru
        _
    $region80: #{transformer_forward.15} parent=5 // pred_fallthru
      _
    %p1635 = scmp.le.s32.totalorder 2, %s21
    // Predicated region
    $region85: #{transformer_forward.15} parent=5 // pred_check
      %p1636 = pneg %p1635
    $region86: #{transformer_forward.15} parent=5 // pred_check_branch
      %1638 = sbr.rel (%p1636) target = $region88
    $region87: #{transformer_forward.15} parent=5 // pred_region
      %s1639 = ssub.s32 %s21, 2
      // Predicated region
      $region89: #{transformer_forward.15} parent=87 // pred_check
        %p1640 = pneg %p390
      $region90: #{transformer_forward.15} parent=87 // pred_check_branch
        %1642 = sbr.rel (%p1640) target = $region92
      $region91: #{transformer_forward.15} parent=87 // pred_region
        %p1643 = scmp.lt.s32.totalorder %s27, 1
        %s1644 = scalar_select %p1643, %s27, 1
        %s1645 = smul.addr %s1644, 8
        %s1646 = scalar_lea.vmem %s15, %s1645
      $region92: #{transformer_forward.15} parent=87 // pred_fallthru
        _
    $region88: #{transformer_forward.15} parent=5 // pred_fallthru
      _
  $region6: #{transformer_forward.15} parent=0 // loop_footer
    %s25 = sadd.s32 1, %s21
  $region7: #{transformer_forward.15} parent=0 // loop_footer_branch
    %20 = sbr.rel target = $region3
  $region8: #{transformer_forward.15} parent=0 // loop_exit
    _

</llo_original>
